<compile_context>
chip_gen: v6e
topology: v6e:2x2x1
jax: 0.10.0
libtpu: 0.0.40
codegen_flags: <defaults>
</compile_context>

<pallas_src>
import jax
import jax.numpy as jnp
from jax.experimental import pallas as pl
from jax.experimental.pallas import tpu as pltpu


_D_IN = 6            # input features
_LAT = 4             # latent dim
_XIN_W = 16          # packed input lanes: [x(6) | eps(4) | pad(6)]
_OUT_W = 18          # packed output lanes: [enc(4) | z_mean(4) | z_log_var(4) | dec(6)]
_W = 128             # lane width of activations / weight tiles
_NUM_LAYERS = 6      # fused layer count (heads fused into one Linear(5, 8))


def _leaky_relu(x, negative_slope=0.01):
    # matches torch.nn.LeakyReLU() default
    return jnp.where(x >= 0, x, negative_slope * x)


def _dense(h, w_ref, b_ref, layer):
    """(tb, 128) @ (128, 128) MXU matmul + broadcast bias row for `layer`."""
    y = jnp.dot(
        h,
        w_ref[layer],
        preferred_element_type=jnp.float32,
        precision=jax.lax.Precision.HIGHEST,
    )
    return y + b_ref[layer:layer + 1, :]


def vae_kernel(xin_ref, w_ref, b_ref, out_ref):
    tb = xin_ref.shape[0]
    xin = xin_ref[...]                                              # (tb, 16)
    # widen to the 128-lane activation space (lanes 16:128 are zero; the
    # corresponding weight rows are zero too, so this is exact)
    a = jnp.concatenate(
        [xin, jnp.zeros((tb, _W - _XIN_W), jnp.float32)], axis=1)   # (tb, 128)

    # encoder: Linear(6,5) -> LeakyReLU -> Linear(5,5) -> LeakyReLU
    h = _leaky_relu(_dense(a, w_ref, b_ref, 0))
    h = _leaky_relu(_dense(h, w_ref, b_ref, 1))

    # fused latent heads: z_mean -> lanes 4:8, z_log_var -> lanes 8:12
    zz = _dense(h, w_ref, b_ref, 2)                                 # (tb, 128)
    z_mean = zz[:, 4:8]
    z_log_var = zz[:, 8:12]
    eps = xin[:, _D_IN:_D_IN + _LAT]
    enc = z_mean + eps * jnp.exp(0.5 * z_log_var)                   # (tb, 4)
    enc_p = jnp.concatenate(
        [enc, jnp.zeros((tb, _W - _LAT), jnp.float32)], axis=1)     # enc at lanes 0:4

    # decoder: Linear(4,5) -> ReLU -> Linear(5,5) -> ReLU -> Linear(5,6)
    d = jnp.maximum(_dense(enc_p, w_ref, b_ref, 3), 0.0)
    d = jnp.maximum(_dense(d, w_ref, b_ref, 4), 0.0)
    d = _dense(d, w_ref, b_ref, 5)                                  # decoded at lanes 12:18

    # lane-packed output: enc 0:4 | z_mean 4:8 | z_log_var 8:12 | dec 12:18
    out128 = enc_p + zz + d
    out_ref[...] = out128[:, 0:_OUT_W]


def _round_up(n, m):
    return ((n + m - 1) // m) * m


def init_params(key):
    """Deterministic nn.Linear-style init: U(-1/sqrt(fan_in), 1/sqrt(fan_in)).

    Weights stored as (in_features, out_features); biases as (1, out)."""
    dims = [
        (6, 5), (5, 5),          # encoder
        (5, 4), (5, 4),          # z_mean, z_log_var
        (4, 5), (5, 5), (5, 6),  # decoder
    ]
    params = []
    for fan_in, fan_out in dims:
        key, kw, kb = jax.random.split(key, 3)
        bound = 1.0 / jnp.sqrt(float(fan_in))
        w = jax.random.uniform(kw, (fan_in, fan_out), jnp.float32, -bound, bound)
        b = jax.random.uniform(kb, (1, fan_out), jnp.float32, -bound, bound)
        params.append((w, b))
    return params


def pack_params(params):
    """Pack the 7 (W, b) pairs into a (6, 128, 128) weight slab + (8, 128) bias slab.

    Output lane offsets are baked in: heads -> lanes 4:12, decoder out -> 12:18."""
    (w1, b1), (w2, b2), (wm, bm), (wv, bv), (wd1, bd1), (wd2, bd2), (wd3, bd3) = params
    w = jnp.zeros((_NUM_LAYERS, _W, _W), jnp.float32)
    b = jnp.zeros((8, _W), jnp.float32)

    def put(w, b, layer, wt, bt, row, col):
        fin, fout = wt.shape
        w = w.at[layer, row:row + fin, col:col + fout].set(wt.astype(jnp.float32))
        b = b.at[layer, col:col + fout].set(bt.reshape(-1).astype(jnp.float32))
        return w, b

    w, b = put(w, b, 0, w1, b1, 0, 0)      # x lives at input lanes 0:6
    w, b = put(w, b, 1, w2, b2, 0, 0)
    w, b = put(w, b, 2, wm, bm, 0, 4)      # z_mean -> lanes 4:8
    w, b = put(w, b, 2, wv, bv, 0, 8)      # z_log_var -> lanes 8:12
    w, b = put(w, b, 3, wd1, bd1, 0, 0)    # encoded sits at lanes 0:4
    w, b = put(w, b, 4, wd2, bd2, 0, 0)
    w, b = put(w, b, 5, wd3, bd3, 0, 12)   # decoded -> lanes 12:18
    return w, b


def vae_forward(x, eps, w_slab, b_slab, *, tb=None):
    """Returns (encoded, z_mean, z_log_var, decoded), matching torch forward."""
    B = x.shape[0]
    xin = jnp.zeros((B, _XIN_W), jnp.float32)
    xin = xin.at[:, 0:_D_IN].set(x.astype(jnp.float32))
    xin = xin.at[:, _D_IN:_D_IN + _LAT].set(eps.astype(jnp.float32))

    B8 = _round_up(max(B, 1), 8)
    if tb is None:
        tb = min(1024, B8)
        if B8 >= 16:                       # >= 2 grid steps: keep both v7x TCs busy
            tb = min(tb, _round_up((B8 + 1) // 2, 8))
    tb = max(8, _round_up(tb, 8))
    bp = _round_up(B, tb)
    if bp != B:
        xin = jnp.pad(xin, ((0, bp - B), (0, 0)))

    flops = 2 * bp * _NUM_LAYERS * _W * _W
    bytes_accessed = (bp * _XIN_W + bp * _OUT_W + _NUM_LAYERS * _W * _W + 8 * _W) * 4

    out = pl.pallas_call(
        vae_kernel,
        out_shape=jax.ShapeDtypeStruct((bp, _OUT_W), jnp.float32),
        grid_spec=pltpu.PrefetchScalarGridSpec(
            num_scalar_prefetch=0,
            grid=(bp // tb,),
            in_specs=[
                pl.BlockSpec((tb, _XIN_W), lambda i: (i, 0)),
                # packed weight + bias slabs, resident across all batch tiles
                pl.BlockSpec((_NUM_LAYERS, _W, _W), lambda i: (0, 0, 0)),
                pl.BlockSpec((8, _W), lambda i: (0, 0)),
            ],
            out_specs=pl.BlockSpec((tb, _OUT_W), lambda i: (i, 0)),
        ),
        compiler_params=pltpu.CompilerParams(
            dimension_semantics=("parallel",),
            vmem_limit_bytes=32 * 1024 * 1024,
        ),
        cost_estimate=pl.CostEstimate(
            flops=flops, transcendentals=bp * _LAT, bytes_accessed=bytes_accessed
        ),
    )(xin, w_slab, b_slab)

    encoded = out[:B, 0:4]
    z_mean = out[:B, 4:8]
    z_log_var = out[:B, 8:12]
    decoded = out[:B, 12:18]
    return encoded, z_mean, z_log_var, decoded


def vae_forward_ref(x, eps, params):
    """Pure-JAX reference (unfused params) for correctness checking."""
    hi = jax.lax.Precision.HIGHEST
    (w1, b1), (w2, b2), (wm, bm), (wv, bv), (wd1, bd1), (wd2, bd2), (wd3, bd3) = params

    def lin(h, w, b):
        return jnp.dot(h, w, precision=hi) + b

    h = _leaky_relu(lin(x, w1, b1))
    h = _leaky_relu(lin(h, w2, b2))
    z_mean = lin(h, wm, bm)
    z_log_var = lin(h, wv, bv)
    encoded = z_mean + eps * jnp.exp(z_log_var * 0.5)
    d = jnp.maximum(lin(encoded, wd1, bd1), 0.0)
    d = jnp.maximum(lin(d, wd2, bd2), 0.0)
    decoded = lin(d, wd3, bd3)
    return encoded, z_mean, z_log_var, decoded


if __name__ == "__main__":
    key = jax.random.PRNGKey(0)
    k_x, k_eps, k_p = jax.random.split(key, 3)

    B = 32
    x = jax.random.normal(k_x, (B, _D_IN), jnp.float32)
    # eps of the reparameterization trick, sampled outside the kernel for
    # determinism (torch samples it inside forward()).
    eps = jax.random.normal(k_eps, (B, _LAT), jnp.float32)
    params = init_params(k_p)
    w_slab, b_slab = pack_params(params)

    out = vae_forward(x, eps, w_slab, b_slab)
    out = jax.block_until_ready(out)

    ref = vae_forward_ref(x, eps, params)
    for o, r in zip(out, ref):
        assert o.shape == r.shape
        assert jnp.allclose(o, r, atol=1e-4, rtol=1e-4)

    print("KERNEL_OK")
</pallas_src>

<mosaic_0001>
module attributes {stable_mosaic.version = 11 : i64} {
  func.func @vae_kernel(%arg0: i32, %arg1: memref<16x16xf32, #tpu.memory_space<vmem>>, %arg2: memref<6x128x128xf32, #tpu.memory_space<vmem>>, %arg3: memref<8x128xf32, #tpu.memory_space<vmem>>, %arg4: memref<16x18xf32, #tpu.memory_space<vmem>>) attributes {dimension_semantics = [#tpu.dimension_semantics<parallel>], iteration_bounds = array<i64: 2>, scalar_prefetch = 0 : i64, scratch_operands = 0 : i64, tpu.core_type = #tpu.core_type<tc>, window_params = [{transform_indices = @transform_0, window_bounds = array<i64: 16, 16>}, {pipeline_mode = #tpu.pipeline_mode<synchronous>, transform_indices = @transform_1, window_bounds = array<i64: 6, 128, 128>}, {pipeline_mode = #tpu.pipeline_mode<synchronous>, transform_indices = @transform_2, window_bounds = array<i64: 8, 128>}, {transform_indices = @transform_3, window_bounds = array<i64: 16, 18>}]} {
    %c0 = arith.constant 0 : index
    %c0_0 = arith.constant 0 : index
    %0 = vector.load %arg1[%c0, %c0_0] : memref<16x16xf32, #tpu.memory_space<vmem>>, vector<16x16xf32>
    %cst = arith.constant 0.000000e+00 : f32
    %1 = vector.broadcast %cst : f32 to vector<16x112xf32>
    %2 = tpu.concatenate %0, %1 in 1 : vector<16x16xf32>, vector<16x112xf32> -> vector<16x128xf32>
    %c0_1 = arith.constant 0 : index
    %c0_2 = arith.constant 0 : index
    %c0_3 = arith.constant 0 : index
    %3 = vector.load %arg2[%c0_1, %c0_2, %c0_3] : memref<6x128x128xf32, #tpu.memory_space<vmem>>, vector<1x128x128xf32>
    %4 = vector.shape_cast %3 : vector<1x128x128xf32> to vector<128x128xf32>
    %cst_4 = arith.constant dense<0.000000e+00> : vector<16x128xf32>
    %5 = tpu.matmul %2, %4, %cst_4 {dimension_numbers = #tpu.dot_dimension_numbers<[1], [0], [0], [1], [0, 0, 1, 1], [], []>, precision = #tpu.contract_precision<fp32>} : vector<16x128xf32>, vector<128x128xf32>, vector<16x128xf32> -> vector<16x128xf32>
    %c0_5 = arith.constant 0 : index
    %c0_6 = arith.constant 0 : index
    %6 = vector.load %arg3[%c0_5, %c0_6] : memref<8x128xf32, #tpu.memory_space<vmem>>, vector<1x128xf32>
    %7 = vector.broadcast %6 : vector<1x128xf32> to vector<16x128xf32>
    %8 = arith.addf %5, %7 : vector<16x128xf32>
    %cst_7 = arith.constant 0.000000e+00 : f32
    %9 = vector.broadcast %cst_7 : f32 to vector<16x128xf32>
    %10 = arith.cmpf oge, %8, %9 : vector<16x128xf32>
    %cst_8 = arith.constant 0.00999999977 : f32
    %11 = vector.broadcast %cst_8 : f32 to vector<16x128xf32>
    %12 = arith.mulf %11, %8 : vector<16x128xf32>
    %13 = arith.select %10, %8, %12 : vector<16x128xi1>, vector<16x128xf32>
    %c1 = arith.constant 1 : index
    %c0_9 = arith.constant 0 : index
    %c0_10 = arith.constant 0 : index
    %14 = vector.load %arg2[%c1, %c0_9, %c0_10] : memref<6x128x128xf32, #tpu.memory_space<vmem>>, vector<1x128x128xf32>
    %15 = vector.shape_cast %14 : vector<1x128x128xf32> to vector<128x128xf32>
    %cst_11 = arith.constant dense<0.000000e+00> : vector<16x128xf32>
    %16 = tpu.matmul %13, %15, %cst_11 {dimension_numbers = #tpu.dot_dimension_numbers<[1], [0], [0], [1], [0, 0, 1, 1], [], []>, precision = #tpu.contract_precision<fp32>} : vector<16x128xf32>, vector<128x128xf32>, vector<16x128xf32> -> vector<16x128xf32>
    %c1_12 = arith.constant 1 : index
    %c0_13 = arith.constant 0 : index
    %17 = vector.load %arg3[%c1_12, %c0_13] : memref<8x128xf32, #tpu.memory_space<vmem>>, vector<1x128xf32>
    %18 = vector.broadcast %17 : vector<1x128xf32> to vector<16x128xf32>
    %19 = arith.addf %16, %18 : vector<16x128xf32>
    %cst_14 = arith.constant 0.000000e+00 : f32
    %20 = vector.broadcast %cst_14 : f32 to vector<16x128xf32>
    %21 = arith.cmpf oge, %19, %20 : vector<16x128xf32>
    %cst_15 = arith.constant 0.00999999977 : f32
    %22 = vector.broadcast %cst_15 : f32 to vector<16x128xf32>
    %23 = arith.mulf %22, %19 : vector<16x128xf32>
    %24 = arith.select %21, %19, %23 : vector<16x128xi1>, vector<16x128xf32>
    %c2 = arith.constant 2 : index
    %c0_16 = arith.constant 0 : index
    %c0_17 = arith.constant 0 : index
    %25 = vector.load %arg2[%c2, %c0_16, %c0_17] : memref<6x128x128xf32, #tpu.memory_space<vmem>>, vector<1x128x128xf32>
    %26 = vector.shape_cast %25 : vector<1x128x128xf32> to vector<128x128xf32>
    %cst_18 = arith.constant dense<0.000000e+00> : vector<16x128xf32>
    %27 = tpu.matmul %24, %26, %cst_18 {dimension_numbers = #tpu.dot_dimension_numbers<[1], [0], [0], [1], [0, 0, 1, 1], [], []>, precision = #tpu.contract_precision<fp32>} : vector<16x128xf32>, vector<128x128xf32>, vector<16x128xf32> -> vector<16x128xf32>
    %c2_19 = arith.constant 2 : index
    %c0_20 = arith.constant 0 : index
    %28 = vector.load %arg3[%c2_19, %c0_20] : memref<8x128xf32, #tpu.memory_space<vmem>>, vector<1x128xf32>
    %29 = vector.broadcast %28 : vector<1x128xf32> to vector<16x128xf32>
    %30 = arith.addf %27, %29 : vector<16x128xf32>
    %31 = vector.extract_strided_slice %30 {offsets = [0, 4], sizes = [16, 4], strides = [1, 1]} : vector<16x128xf32> to vector<16x4xf32>
    %32 = vector.extract_strided_slice %30 {offsets = [0, 8], sizes = [16, 4], strides = [1, 1]} : vector<16x128xf32> to vector<16x4xf32>
    %33 = vector.extract_strided_slice %0 {offsets = [0, 6], sizes = [16, 4], strides = [1, 1]} : vector<16x16xf32> to vector<16x4xf32>
    %cst_21 = arith.constant 5.000000e-01 : f32
    %34 = vector.broadcast %cst_21 : f32 to vector<16x4xf32>
    %35 = arith.mulf %34, %32 : vector<16x4xf32>
    %36 = math.exp %35 : vector<16x4xf32>
    %37 = arith.mulf %33, %36 : vector<16x4xf32>
    %38 = arith.addf %31, %37 : vector<16x4xf32>
    %cst_22 = arith.constant 0.000000e+00 : f32
    %39 = vector.broadcast %cst_22 : f32 to vector<16x124xf32>
    %40 = tpu.concatenate %38, %39 in 1 : vector<16x4xf32>, vector<16x124xf32> -> vector<16x128xf32>
    %c3 = arith.constant 3 : index
    %c0_23 = arith.constant 0 : index
    %c0_24 = arith.constant 0 : index
    %41 = vector.load %arg2[%c3, %c0_23, %c0_24] : memref<6x128x128xf32, #tpu.memory_space<vmem>>, vector<1x128x128xf32>
    %42 = vector.shape_cast %41 : vector<1x128x128xf32> to vector<128x128xf32>
    %cst_25 = arith.constant dense<0.000000e+00> : vector<16x128xf32>
    %43 = tpu.matmul %40, %42, %cst_25 {dimension_numbers = #tpu.dot_dimension_numbers<[1], [0], [0], [1], [0, 0, 1, 1], [], []>, precision = #tpu.contract_precision<fp32>} : vector<16x128xf32>, vector<128x128xf32>, vector<16x128xf32> -> vector<16x128xf32>
    %c3_26 = arith.constant 3 : index
    %c0_27 = arith.constant 0 : index
    %44 = vector.load %arg3[%c3_26, %c0_27] : memref<8x128xf32, #tpu.memory_space<vmem>>, vector<1x128xf32>
    %45 = vector.broadcast %44 : vector<1x128xf32> to vector<16x128xf32>
    %46 = arith.addf %43, %45 : vector<16x128xf32>
    %cst_28 = arith.constant 0.000000e+00 : f32
    %47 = vector.broadcast %cst_28 : f32 to vector<16x128xf32>
    %48 = arith.maximumf %46, %47 : vector<16x128xf32>
    %c4 = arith.constant 4 : index
    %c0_29 = arith.constant 0 : index
    %c0_30 = arith.constant 0 : index
    %49 = vector.load %arg2[%c4, %c0_29, %c0_30] : memref<6x128x128xf32, #tpu.memory_space<vmem>>, vector<1x128x128xf32>
    %50 = vector.shape_cast %49 : vector<1x128x128xf32> to vector<128x128xf32>
    %cst_31 = arith.constant dense<0.000000e+00> : vector<16x128xf32>
    %51 = tpu.matmul %48, %50, %cst_31 {dimension_numbers = #tpu.dot_dimension_numbers<[1], [0], [0], [1], [0, 0, 1, 1], [], []>, precision = #tpu.contract_precision<fp32>} : vector<16x128xf32>, vector<128x128xf32>, vector<16x128xf32> -> vector<16x128xf32>
    %c4_32 = arith.constant 4 : index
    %c0_33 = arith.constant 0 : index
    %52 = vector.load %arg3[%c4_32, %c0_33] : memref<8x128xf32, #tpu.memory_space<vmem>>, vector<1x128xf32>
    %53 = vector.broadcast %52 : vector<1x128xf32> to vector<16x128xf32>
    %54 = arith.addf %51, %53 : vector<16x128xf32>
    %cst_34 = arith.constant 0.000000e+00 : f32
    %55 = vector.broadcast %cst_34 : f32 to vector<16x128xf32>
    %56 = arith.maximumf %54, %55 : vector<16x128xf32>
    %c5 = arith.constant 5 : index
    %c0_35 = arith.constant 0 : index
    %c0_36 = arith.constant 0 : index
    %57 = vector.load %arg2[%c5, %c0_35, %c0_36] : memref<6x128x128xf32, #tpu.memory_space<vmem>>, vector<1x128x128xf32>
    %58 = vector.shape_cast %57 : vector<1x128x128xf32> to vector<128x128xf32>
    %cst_37 = arith.constant dense<0.000000e+00> : vector<16x128xf32>
    %59 = tpu.matmul %56, %58, %cst_37 {dimension_numbers = #tpu.dot_dimension_numbers<[1], [0], [0], [1], [0, 0, 1, 1], [], []>, precision = #tpu.contract_precision<fp32>} : vector<16x128xf32>, vector<128x128xf32>, vector<16x128xf32> -> vector<16x128xf32>
    %c5_38 = arith.constant 5 : index
    %c0_39 = arith.constant 0 : index
    %60 = vector.load %arg3[%c5_38, %c0_39] : memref<8x128xf32, #tpu.memory_space<vmem>>, vector<1x128xf32>
    %61 = vector.broadcast %60 : vector<1x128xf32> to vector<16x128xf32>
    %62 = arith.addf %59, %61 : vector<16x128xf32>
    %63 = arith.addf %40, %30 : vector<16x128xf32>
    %64 = arith.addf %63, %62 : vector<16x128xf32>
    %65 = vector.extract_strided_slice %64 {offsets = [0, 0], sizes = [16, 18], strides = [1, 1]} : vector<16x128xf32> to vector<16x18xf32>
    %c0_40 = arith.constant 0 : index
    %c0_41 = arith.constant 0 : index
    %66 = vector.load %arg4[%c0_40, %c0_41] : memref<16x18xf32, #tpu.memory_space<vmem>>, vector<16x18xf32>
    tpu.vector_store %arg4[%c0_40, %c0_41], %65 {strides = array<i32>} : memref<16x18xf32, #tpu.memory_space<vmem>>, vector<16x18xf32>,
    return
  }
  func.func @transform_0(%arg0: i32) -> (i32, i32) {
    %c0_i32 = arith.constant 0 : i32
    %c0_i32_0 = arith.constant 0 : i32
    return %arg0, %c0_i32 : i32, i32
  }
  func.func @transform_1(%arg0: i32) -> (i32, i32, i32) {
    %c0_i32 = arith.constant 0 : i32
    %c0_i32_0 = arith.constant 0 : i32
    %c0_i32_1 = arith.constant 0 : i32
    %c0_i32_2 = arith.constant 0 : i32
    return %c0_i32, %c0_i32_0, %c0_i32_1 : i32, i32, i32
  }
  func.func @transform_2(%arg0: i32) -> (i32, i32) {
    %c0_i32 = arith.constant 0 : i32
    %c0_i32_0 = arith.constant 0 : i32
    %c0_i32_1 = arith.constant 0 : i32
    return %c0_i32, %c0_i32_0 : i32, i32
  }
  func.func @transform_3(%arg0: i32) -> (i32, i32) {
    %c0_i32 = arith.constant 0 : i32
    %c0_i32_0 = arith.constant 0 : i32
    return %arg0, %c0_i32 : i32, i32
  }
}

</mosaic_0001>

<llo_original>
// kernel: tpu_custom_call.1
$region0: #{tpu_custom_call.1}
  #allocation0 [shape = 'u32[]', space=smem, size = 0x4, offset = 0x4, fixed_abs, tag = 'smem constant byte address 0x4 - core index']
  #allocation1 [shape = 'u32[144,128]{1,0:T(1,128)}', space=vmem, size = 0x12000, scoped, tag = 'internal scratch']
  %s0 = inlined_call_operand.vmem [shape: f32[32,16], index: 0, kind: input, shape index: {}]
  %s1 = inlined_call_operand.hbm [shape: f32[6,128,128], index: 1, kind: input, shape index: {}]
  %s2 = inlined_call_operand.vmem [shape: f32[8,128], index: 2, kind: input, shape index: {}]
  %s3 = inlined_call_operand.vmem [shape: f32[32,18], index: 3, kind: output, shape index: {}]
  %s4 = sld [smem:[#allocation0]]
  $region49: #{tpu_custom_call.1} parent=0
    _
  %s6 = ssub.s32 1, %s4
  %s7 = scalar_select 0, %s6, %s4
  $region1: #{tpu_custom_call.1} parent=0
    #allocation2 [shape = 'u8[393216]{0}', space=vmem, size = 0x60000, scoped, tag = 'input window, operand 1, single buffered']
    #allocation3 [shape = 's32[2]{0}', space=sflag, size = 0x8, scoped, tag = 'scoped memory for tpu_custom_call.1']
    %8 = vsyncpa [#allocation3], 0
    loop: start=0, step=1, limit=4
    $region2: #{tpu_custom_call.1} parent=1 // loop_pre_header
      _
    $region3: #{tpu_custom_call.1} parent=1 // loop_header
      %s10 = sphi 0, %s14
      %p11 = scmp.ge.s32.totalorder %s10, 4
      %s20 = sphi 0, %s22
      %s23 = sphi 0, %s20
      %s24 = sphi 0, %s23
      %s40 = sphi 0, %s24
      %s44 = sphi 0, %s44
      %s46 = sphi 0, %s44
      %s47 = sphi 0, %s46
      %s61 = sphi 0, %s47
      %s65 = sphi 0, %s65
      %s67 = sphi 0, %s65
      %s68 = sphi 0, %s67
      %s82 = sphi 0, %s68
      %s88 = sphi 0, %s90
      %s91 = sphi 0, %s88
      %s92 = sphi 0, %s91
      %s108 = sphi 0, %s92
    $region4: #{tpu_custom_call.1} parent=1 // loop_header_branch
      %13 = sbr.rel (%p11) target = $region8
    $region5: #{tpu_custom_call.1} parent=1 // loop_body
      %s15 = ssub.s32 %s10, 1
      %s16 = ssub.s32 %s10, 2
      %s17 = sadd.s32 %s10, 1
      %s18 = ssub.s32 %s10, %s17
      %p19 = scmp.eq.s32.totalorder %s18, 0
      %s21 = sadd.s32 %s20, 1
      %s22 = scalar_select %p19, %s20, %s21
      %p25 = pneg %p19
      %p26 = scmp.eq.s32.totalorder %s10, 1
      %p27 = por %p25, %p26
      %p28 = scmp.ne.s32.totalorder %s20, %s23
      %p29 = scmp.eq.s32.totalorder %s10, 0
      %p30 = por %p28, %p29
      %p31 = scmp.ne.s32.totalorder %s20, %s23
      %p32 = scmp.eq.s32.totalorder %s15, 1
      %p33 = por %p31, %p32
      %p34 = scmp.ne.s32.totalorder %s23, %s24
      %p35 = scmp.eq.s32.totalorder %s15, 0
      %p36 = por %p34, %p35
      %p37 = scmp.ne.s32.totalorder %s23, %s24
      %p38 = scmp.eq.s32.totalorder %s16, 1
      %p39 = por %p37, %p38
      %p41 = scmp.ne.s32.totalorder %s24, %s40
      %p42 = scmp.eq.s32.totalorder %s16, 0
      %p43 = por %p41, %p42
      %s45 = sadd.s32 %s44, 1
      %p48 = scmp.eq.s32.totalorder %s10, 1
      %p49 = scmp.ne.s32.totalorder %s44, %s46
      %p50 = scmp.eq.s32.totalorder %s10, 0
      %p51 = por %p49, %p50
      %p52 = scmp.ne.s32.totalorder %s44, %s46
      %p53 = scmp.eq.s32.totalorder %s15, 1
      %p54 = por %p52, %p53
      %p55 = scmp.ne.s32.totalorder %s46, %s47
      %p56 = scmp.eq.s32.totalorder %s15, 0
      %p57 = por %p55, %p56
      %p58 = scmp.ne.s32.totalorder %s46, %s47
      %p59 = scmp.eq.s32.totalorder %s16, 1
      %p60 = por %p58, %p59
      %p62 = scmp.ne.s32.totalorder %s47, %s61
      %p63 = scmp.eq.s32.totalorder %s16, 0
      %p64 = por %p62, %p63
      %s66 = sadd.s32 %s65, 1
      %p69 = scmp.eq.s32.totalorder %s10, 1
      %p70 = scmp.ne.s32.totalorder %s65, %s67
      %p71 = scmp.eq.s32.totalorder %s10, 0
      %p72 = por %p70, %p71
      %p73 = scmp.ne.s32.totalorder %s65, %s67
      %p74 = scmp.eq.s32.totalorder %s15, 1
      %p75 = por %p73, %p74
      %p76 = scmp.ne.s32.totalorder %s67, %s68
      %p77 = scmp.eq.s32.totalorder %s15, 0
      %p78 = por %p76, %p77
      %p79 = scmp.ne.s32.totalorder %s67, %s68
      %p80 = scmp.eq.s32.totalorder %s16, 1
      %p81 = por %p79, %p80
      %p83 = scmp.ne.s32.totalorder %s68, %s82
      %p84 = scmp.eq.s32.totalorder %s16, 0
      %p85 = por %p83, %p84
      %s86 = ssub.s32 %s10, %s17
      %p87 = scmp.eq.s32.totalorder %s86, 0
      %s89 = sadd.s32 %s88, 1
      %s90 = scalar_select %p87, %s88, %s89
      %p93 = pneg %p87
      %p94 = scmp.eq.s32.totalorder %s10, 1
      %p95 = por %p93, %p94
      %p96 = scmp.ne.s32.totalorder %s88, %s91
      %p97 = scmp.eq.s32.totalorder %s10, 0
      %p98 = por %p96, %p97
      %p99 = scmp.ne.s32.totalorder %s88, %s91
      %p100 = scmp.eq.s32.totalorder %s15, 1
      %p101 = por %p99, %p100
      %p102 = scmp.ne.s32.totalorder %s91, %s92
      %p103 = scmp.eq.s32.totalorder %s15, 0
      %p104 = por %p102, %p103
      %p105 = scmp.ne.s32.totalorder %s91, %s92
      %p106 = scmp.eq.s32.totalorder %s16, 1
      %p107 = por %p105, %p106
      %p109 = scmp.ne.s32.totalorder %s92, %s108
      %p110 = scmp.eq.s32.totalorder %s16, 0
      %p111 = por %p109, %p110
      %p112 = scmp.le.s32.totalorder 1, %s10
      %p113 = scmp.lt.s32.totalorder %s10, 3
      %p114 = pnand %p112, %p113
      %p115 = pneg %p114
      // Predicated region
      $region9: #{tpu_custom_call.1} parent=5 // pred_check
        _
      $region10: #{tpu_custom_call.1} parent=5 // pred_check_branch
        %117 = sbr.rel (%p114) target = $region12
      $region11: #{tpu_custom_call.1} parent=5 // pred_region
        %s118 = ssub.s32 %s10, 1
        // Predicated region
        $region13: #{tpu_custom_call.1} parent=11 // pred_check
          %p119 = pneg %p57
        $region14: #{tpu_custom_call.1} parent=11 // pred_check_branch
          %121 = sbr.rel (%p119) target = $region16
        $region15: #{tpu_custom_call.1} parent=11 // pred_region
          %s123 = ssub.s32 12288, 12288
          %124 = vsyncadd [#allocation3], %s123
          %s125 = sshll.u32 [#allocation2], 4
          %s126 = int_to_ptr.vmem [resolvable:$true] %s125
          %131 = dma.hbm_to_vmem [thread:$0]  %s1, 12288, %s126, [#allocation3], 128, 128, 8
        $region16: #{tpu_custom_call.1} parent=11 // pred_fallthru
          _
        // Predicated region
        $region17: #{tpu_custom_call.1} parent=11 // pred_check
          %p132 = pneg %p78
        $region18: #{tpu_custom_call.1} parent=11 // pred_check_branch
          %134 = sbr.rel (%p132) target = $region20
        $region19: #{tpu_custom_call.1} parent=11 // pred_region
          _
        $region20: #{tpu_custom_call.1} parent=11 // pred_fallthru
          _
      $region12: #{tpu_custom_call.1} parent=5 // pred_fallthru
        _
      %p135 = scmp.lt.s32.totalorder %s10, 2
      // Predicated region
      $region21: #{tpu_custom_call.1} parent=5 // pred_check
        %p136 = pneg %p135
      $region22: #{tpu_custom_call.1} parent=5 // pred_check_branch
        %138 = sbr.rel (%p136) target = $region24
      $region23: #{tpu_custom_call.1} parent=5 // pred_region
        // Predicated region
        $region25: #{tpu_custom_call.1} parent=23 // pred_check
          %p139 = pneg %p30
        $region26: #{tpu_custom_call.1} parent=23 // pred_check_branch
          %141 = sbr.rel (%p139) target = $region28
        $region27: #{tpu_custom_call.1} parent=23 // pred_region
          %s142 = smul.u32 2, %s10
          %p143 = scmp.lt.s32.totalorder %s142, 3
          %s144 = scalar_select %p143, %s142, 3
          %s145 = smul.addr %s144, 8
          %s146 = scalar_lea.vmem %s0, %s145
          %s147 = smul.u32 2, %s10
        $region28: #{tpu_custom_call.1} parent=23 // pred_fallthru
          _
      $region24: #{tpu_custom_call.1} parent=5 // pred_fallthru
        _
      %p148 = scmp.le.s32.totalorder 1, %s10
      %p149 = scmp.lt.s32.totalorder %s10, 3
      %p150 = pnand %p148, %p149
      %p151 = pneg %p150
      // Predicated region
      $region29: #{tpu_custom_call.1} parent=5 // pred_check
        _
      $region30: #{tpu_custom_call.1} parent=5 // pred_check_branch
        %153 = sbr.rel (%p150) target = $region32
      $region31: #{tpu_custom_call.1} parent=5 // pred_region
        %s154 = ssub.s32 %s10, 1
        // Predicated region
        $region33: #{tpu_custom_call.1} parent=31 // pred_check
          %p155 = pneg %p57
        $region34: #{tpu_custom_call.1} parent=31 // pred_check_branch
          %157 = sbr.rel (%p155) target = $region36
        $region35: #{tpu_custom_call.1} parent=31 // pred_region
          %158 = dma.done [#allocation3], 12288
        $region36: #{tpu_custom_call.1} parent=31 // pred_fallthru
          _
        %s159 = smul.u32 2, %s15
        %p160 = scmp.lt.s32.totalorder %s159, 3
        %s161 = scalar_select %p160, %s159, 3
        %s162 = smul.addr %s161, 8
        %s163 = scalar_lea.vmem %s0, %s162
        %p164 = pneg %p36
        %p165 = pneg %p33
        %p166 = pneg %p57
        %p167 = pneg %p54
        %p168 = pneg %p78
        %p169 = pneg %p75
        %p170 = pneg %p104
        %p171 = pneg %p101
        %s172 = smul.u32 2, %s15
        %p173 = scmp.lt.s32.totalorder %s172, 3
        %s174 = scalar_select %p173, %s172, 3
        %s175 = smul.addr %s174, 8
        %s176 = scalar_lea.vmem %s3, %s175
        %s177 = smul.u32 2, %s15
        %p178 = scmp.lt.s32.totalorder %s177, 3
        %s179 = scalar_select %p178, %s177, 3
        %s180 = smul.addr %s179, 8
        %s181 = scalar_lea.vmem %s0, %s180
        %s182 = smul.u32 2, %s15
        %s183 = smul.u32 2, %s15
        %p184 = scmp.lt.s32.totalorder %s183, 3
        %s185 = scalar_select %p184, %s183, 3
        %s186 = smul.addr %s185, 8
        %s187 = scalar_lea.vmem %s3, %s186
        %s188 = smul.u32 2, %s15
        %v189 = vld [vmem:[%s181] sm:$0xff]
        %v190 = vld [vmem:[%s181 + $0x8] sm:$0xff]
        %vm191 = vcmask 130048
        %v192 = vsel %vm191, %v189, 0.0
        %v193 = vsel %vm191, %v190, 0.0
        %v194 = vld [vmem:[#allocation2] sm:$0xff]
        %v195 = vld [vmem:[#allocation2 + $0x8] sm:$0xff]
        %v196 = vld [vmem:[#allocation2 + $0x10] sm:$0xff]
        %v197 = vld [vmem:[#allocation2 + $0x18] sm:$0xff]
        %v198 = vld [vmem:[#allocation2 + $0x20] sm:$0xff]
        %v199 = vld [vmem:[#allocation2 + $0x28] sm:$0xff]
        %v200 = vld [vmem:[#allocation2 + $0x30] sm:$0xff]
        %v201 = vld [vmem:[#allocation2 + $0x38] sm:$0xff]
        %v202 = vld [vmem:[#allocation2 + $0x40] sm:$0xff]
        %v203 = vld [vmem:[#allocation2 + $0x48] sm:$0xff]
        %v204 = vld [vmem:[#allocation2 + $0x50] sm:$0xff]
        %v205 = vld [vmem:[#allocation2 + $0x58] sm:$0xff]
        %v206 = vld [vmem:[#allocation2 + $0x60] sm:$0xff]
        %v207 = vld [vmem:[#allocation2 + $0x68] sm:$0xff]
        %v208 = vld [vmem:[#allocation2 + $0x70] sm:$0xff]
        %v209 = vld [vmem:[#allocation2 + $0x78] sm:$0xff]
        %v210 = vld [vmem:[%s2] sm:$0x1]
        %v211 = vlaneseq
        %v212 = vshrl.u32 %v211, 7
        %v213 = vsub.s32 0, %v212
        %v214 = vrot.slane %v210, %v213
        %215 = vmatprep.subr.mxu0 0.0
        %v216 = vand.u32 %v209, 4294901760
        %217 = vmatpush1.msra.mxu0 %v216
        %218 = vmatprep.subr.mxu0 0.0
        %v219 = vand.u32 %v208, 4294901760
        %220 = vmatpush1.msra.mxu0 %v219
        %221 = vmatprep.subr.mxu0 0.0
        %v222 = vand.u32 %v207, 4294901760
        %223 = vmatpush1.msra.mxu0 %v222
        %224 = vmatprep.subr.mxu0 0.0
        %v225 = vand.u32 %v206, 4294901760
        %226 = vmatpush1.msra.mxu0 %v225
        %227 = vmatprep.subr.mxu0 0.0
        %v228 = vand.u32 %v205, 4294901760
        %229 = vmatpush1.msra.mxu0 %v228
        %230 = vmatprep.subr.mxu0 0.0
        %v231 = vand.u32 %v204, 4294901760
        %232 = vmatpush1.msra.mxu0 %v231
        %233 = vmatprep.subr.mxu0 0.0
        %v234 = vand.u32 %v203, 4294901760
        %235 = vmatpush1.msra.mxu0 %v234
        %236 = vmatprep.subr.mxu0 0.0
        %v237 = vand.u32 %v202, 4294901760
        %238 = vmatpush1.msra.mxu0 %v237
        %239 = vmatprep.subr.mxu0 0.0
        %v240 = vand.u32 %v201, 4294901760
        %241 = vmatpush1.msra.mxu0 %v240
        %242 = vmatprep.subr.mxu0 0.0
        %v243 = vand.u32 %v200, 4294901760
        %244 = vmatpush1.msra.mxu0 %v243
        %245 = vmatprep.subr.mxu0 0.0
        %v246 = vand.u32 %v199, 4294901760
        %247 = vmatpush1.msra.mxu0 %v246
        %248 = vmatprep.subr.mxu0 0.0
        %v249 = vand.u32 %v198, 4294901760
        %250 = vmatpush1.msra.mxu0 %v249
        %251 = vmatprep.subr.mxu0 0.0
        %v252 = vand.u32 %v197, 4294901760
        %253 = vmatpush1.msra.mxu0 %v252
        %254 = vmatprep.subr.mxu0 0.0
        %v255 = vand.u32 %v196, 4294901760
        %256 = vmatpush1.msra.mxu0 %v255
        %257 = vmatprep.subr.mxu0 0.0
        %v258 = vand.u32 %v195, 4294901760
        %259 = vmatpush1.msra.mxu0 %v258
        %260 = vmatprep.subr.mxu0 0.0
        %v261 = vand.u32 %v194, 4294901760
        %262 = vmatpush1.msra.mxu0 %v261
        %263 = vmatprep.subr.mxu0 0.0
        %264 = vmatpush2.msra.mxu0 0.0
        %265 = vmatprep.subr.mxu0 0.0
        %266 = vmatpush2.msra.mxu0 0.0
        %267 = vmatprep.subr.mxu0 0.0
        %268 = vmatpush2.msra.mxu0 0.0
        %269 = vmatprep.subr.mxu0 0.0
        %270 = vmatpush2.msra.mxu0 0.0
        %271 = vmatprep.subr.mxu0 0.0
        %272 = vmatpush2.msra.mxu0 0.0
        %273 = vmatprep.subr.mxu0 0.0
        %274 = vmatpush2.msra.mxu0 0.0
        %275 = vmatprep.subr.mxu0 0.0
        %276 = vmatpush2.msra.mxu0 0.0
        %277 = vmatprep.subr.mxu0 0.0
        %278 = vmatpush2.msra.mxu0 0.0
        %279 = vmatprep.subr.mxu0 0.0
        %280 = vmatpush2.msra.mxu0 0.0
        %281 = vmatprep.subr.mxu0 0.0
        %282 = vmatpush2.msra.mxu0 0.0
        %283 = vmatprep.subr.mxu0 0.0
        %284 = vmatpush2.msra.mxu0 0.0
        %285 = vmatprep.subr.mxu0 0.0
        %286 = vmatpush2.msra.mxu0 0.0
        %287 = vmatprep.subr.mxu0 0.0
        %288 = vmatpush2.msra.mxu0 0.0
        %289 = vmatprep.subr.mxu0 0.0
        %290 = vmatpush2.msra.mxu0 0.0
        %291 = vmatprep.subr.mxu0 0.0
        %292 = vmatpush2.msra.mxu0 0.0
        %293 = vmatprep.subr.mxu0 0.0
        %294 = vmatpush2.msra.mxu0 0.0
        %295 = vmatprep.mubr.f32.mxu0 0.0
        %v296 = vand.u32 %v192, 4294901760
        %v297 = vsub.f32 %v192, %v296
        %v298 = vand.u32 %v297, 4294901760
        %v299 = vsub.f32 %v297, %v298
        %v300 = vand.u32 %v299, 4294901760
        %301 = vmatmul.mubr.f32.gmra.mxu0 %v300
        %v302 = vpop.f32.mrf.mxu0
        %v303 = vadd.f32 %v214, %v302
        %v304 = vpop.f32.mrf.mxu0
        %305 = vmatprep.mubr.f32.mxu0 0.0
        %v306 = vand.u32 %v193, 4294901760
        %v307 = vsub.f32 %v193, %v306
        %v308 = vand.u32 %v307, 4294901760
        %v309 = vsub.f32 %v307, %v308
        %v310 = vand.u32 %v309, 4294901760
        %311 = vmatmul.mubr.f32.gmra.mxu0 %v310
        %v312 = vpop.f32.mrf.mxu0
        %v313 = vadd.f32 %v214, %v312
        %v314 = vpop.f32.mrf.mxu0
        %315 = vdwg.mxu0
        %316 = vmatprep.subr.mxu0 0.0
        %v317 = vand.u32 %v209, 4294901760
        %v318 = vsub.f32 %v209, %v317
        %v319 = vand.u32 %v318, 4294901760
        %v320 = vsub.f32 %v318, %v319
        %v321 = vand.u32 %v320, 4294901760
        %322 = vmatpush1.msra.mxu0 %v321
        %323 = vmatprep.subr.mxu0 0.0
        %v324 = vand.u32 %v208, 4294901760
        %v325 = vsub.f32 %v208, %v324
        %v326 = vand.u32 %v325, 4294901760
        %v327 = vsub.f32 %v325, %v326
        %v328 = vand.u32 %v327, 4294901760
        %329 = vmatpush1.msra.mxu0 %v328
        %330 = vmatprep.subr.mxu0 0.0
        %v331 = vand.u32 %v207, 4294901760
        %v332 = vsub.f32 %v207, %v331
        %v333 = vand.u32 %v332, 4294901760
        %v334 = vsub.f32 %v332, %v333
        %v335 = vand.u32 %v334, 4294901760
        %336 = vmatpush1.msra.mxu0 %v335
        %337 = vmatprep.subr.mxu0 0.0
        %v338 = vand.u32 %v206, 4294901760
        %v339 = vsub.f32 %v206, %v338
        %v340 = vand.u32 %v339, 4294901760
        %v341 = vsub.f32 %v339, %v340
        %v342 = vand.u32 %v341, 4294901760
        %343 = vmatpush1.msra.mxu0 %v342
        %344 = vmatprep.subr.mxu0 0.0
        %v345 = vand.u32 %v205, 4294901760
        %v346 = vsub.f32 %v205, %v345
        %v347 = vand.u32 %v346, 4294901760
        %v348 = vsub.f32 %v346, %v347
        %v349 = vand.u32 %v348, 4294901760
        %350 = vmatpush1.msra.mxu0 %v349
        %351 = vmatprep.subr.mxu0 0.0
        %v352 = vand.u32 %v204, 4294901760
        %v353 = vsub.f32 %v204, %v352
        %v354 = vand.u32 %v353, 4294901760
        %v355 = vsub.f32 %v353, %v354
        %v356 = vand.u32 %v355, 4294901760
        %357 = vmatpush1.msra.mxu0 %v356
        %358 = vmatprep.subr.mxu0 0.0
        %v359 = vand.u32 %v203, 4294901760
        %v360 = vsub.f32 %v203, %v359
        %v361 = vand.u32 %v360, 4294901760
        %v362 = vsub.f32 %v360, %v361
        %v363 = vand.u32 %v362, 4294901760
        %364 = vmatpush1.msra.mxu0 %v363
        %365 = vmatprep.subr.mxu0 0.0
        %v366 = vand.u32 %v202, 4294901760
        %v367 = vsub.f32 %v202, %v366
        %v368 = vand.u32 %v367, 4294901760
        %v369 = vsub.f32 %v367, %v368
        %v370 = vand.u32 %v369, 4294901760
        %371 = vmatpush1.msra.mxu0 %v370
        %372 = vmatprep.subr.mxu0 0.0
        %v373 = vand.u32 %v201, 4294901760
        %v374 = vsub.f32 %v201, %v373
        %v375 = vand.u32 %v374, 4294901760
        %v376 = vsub.f32 %v374, %v375
        %v377 = vand.u32 %v376, 4294901760
        %378 = vmatpush1.msra.mxu0 %v377
        %379 = vmatprep.subr.mxu0 0.0
        %v380 = vand.u32 %v200, 4294901760
        %v381 = vsub.f32 %v200, %v380
        %v382 = vand.u32 %v381, 4294901760
        %v383 = vsub.f32 %v381, %v382
        %v384 = vand.u32 %v383, 4294901760
        %385 = vmatpush1.msra.mxu0 %v384
        %386 = vmatprep.subr.mxu0 0.0
        %v387 = vand.u32 %v199, 4294901760
        %v388 = vsub.f32 %v199, %v387
        %v389 = vand.u32 %v388, 4294901760
        %v390 = vsub.f32 %v388, %v389
        %v391 = vand.u32 %v390, 4294901760
        %392 = vmatpush1.msra.mxu0 %v391
        %393 = vmatprep.subr.mxu0 0.0
        %v394 = vand.u32 %v198, 4294901760
        %v395 = vsub.f32 %v198, %v394
        %v396 = vand.u32 %v395, 4294901760
        %v397 = vsub.f32 %v395, %v396
        %v398 = vand.u32 %v397, 4294901760
        %399 = vmatpush1.msra.mxu0 %v398
        %400 = vmatprep.subr.mxu0 0.0
        %v401 = vand.u32 %v197, 4294901760
        %v402 = vsub.f32 %v197, %v401
        %v403 = vand.u32 %v402, 4294901760
        %v404 = vsub.f32 %v402, %v403
        %v405 = vand.u32 %v404, 4294901760
        %406 = vmatpush1.msra.mxu0 %v405
        %407 = vmatprep.subr.mxu0 0.0
        %v408 = vand.u32 %v196, 4294901760
        %v409 = vsub.f32 %v196, %v408
        %v410 = vand.u32 %v409, 4294901760
        %v411 = vsub.f32 %v409, %v410
        %v412 = vand.u32 %v411, 4294901760
        %413 = vmatpush1.msra.mxu0 %v412
        %414 = vmatprep.subr.mxu0 0.0
        %v415 = vand.u32 %v195, 4294901760
        %v416 = vsub.f32 %v195, %v415
        %v417 = vand.u32 %v416, 4294901760
        %v418 = vsub.f32 %v416, %v417
        %v419 = vand.u32 %v418, 4294901760
        %420 = vmatpush1.msra.mxu0 %v419
        %421 = vmatprep.subr.mxu0 0.0
        %v422 = vand.u32 %v194, 4294901760
        %v423 = vsub.f32 %v194, %v422
        %v424 = vand.u32 %v423, 4294901760
        %v425 = vsub.f32 %v423, %v424
        %v426 = vand.u32 %v425, 4294901760
        %427 = vmatpush1.msra.mxu0 %v426
        %428 = vmatprep.subr.mxu0 0.0
        %429 = vmatpush2.msra.mxu0 0.0
        %430 = vmatprep.subr.mxu0 0.0
        %431 = vmatpush2.msra.mxu0 0.0
        %432 = vmatprep.subr.mxu0 0.0
        %433 = vmatpush2.msra.mxu0 0.0
        %434 = vmatprep.subr.mxu0 0.0
        %435 = vmatpush2.msra.mxu0 0.0
        %436 = vmatprep.subr.mxu0 0.0
        %437 = vmatpush2.msra.mxu0 0.0
        %438 = vmatprep.subr.mxu0 0.0
        %439 = vmatpush2.msra.mxu0 0.0
        %440 = vmatprep.subr.mxu0 0.0
        %441 = vmatpush2.msra.mxu0 0.0
        %442 = vmatprep.subr.mxu0 0.0
        %443 = vmatpush2.msra.mxu0 0.0
        %444 = vmatprep.subr.mxu0 0.0
        %445 = vmatpush2.msra.mxu0 0.0
        %446 = vmatprep.subr.mxu0 0.0
        %447 = vmatpush2.msra.mxu0 0.0
        %448 = vmatprep.subr.mxu0 0.0
        %449 = vmatpush2.msra.mxu0 0.0
        %450 = vmatprep.subr.mxu0 0.0
        %451 = vmatpush2.msra.mxu0 0.0
        %452 = vmatprep.subr.mxu0 0.0
        %453 = vmatpush2.msra.mxu0 0.0
        %454 = vmatprep.subr.mxu0 0.0
        %455 = vmatpush2.msra.mxu0 0.0
        %456 = vmatprep.subr.mxu0 0.0
        %457 = vmatpush2.msra.mxu0 0.0
        %458 = vmatprep.subr.mxu0 0.0
        %459 = vmatpush2.msra.mxu0 0.0
        %460 = vmatprep.mubr.f32.mxu0 0.0
        %v461 = vand.u32 %v192, 4294901760
        %462 = vmatmul.mubr.f32.gmra.mxu0 %v461
        %v463 = vpop.f32.mrf.mxu0
        %v464 = vadd.f32 %v303, %v463
        %v465 = vpop.f32.mrf.mxu0
        %466 = vmatprep.mubr.f32.mxu0 0.0
        %v467 = vand.u32 %v193, 4294901760
        %468 = vmatmul.mubr.f32.gmra.mxu0 %v467
        %v469 = vpop.f32.mrf.mxu0
        %v470 = vadd.f32 %v313, %v469
        %v471 = vpop.f32.mrf.mxu0
        %472 = vdwg.mxu0
        %473 = vmatprep.subr.mxu0 0.0
        %v474 = vand.u32 %v209, 4294901760
        %v475 = vsub.f32 %v209, %v474
        %476 = vmatpush1.msra.mxu0 %v475
        %477 = vmatprep.subr.mxu0 0.0
        %v478 = vand.u32 %v208, 4294901760
        %v479 = vsub.f32 %v208, %v478
        %480 = vmatpush1.msra.mxu0 %v479
        %481 = vmatprep.subr.mxu0 0.0
        %v482 = vand.u32 %v207, 4294901760
        %v483 = vsub.f32 %v207, %v482
        %484 = vmatpush1.msra.mxu0 %v483
        %485 = vmatprep.subr.mxu0 0.0
        %v486 = vand.u32 %v206, 4294901760
        %v487 = vsub.f32 %v206, %v486
        %488 = vmatpush1.msra.mxu0 %v487
        %489 = vmatprep.subr.mxu0 0.0
        %v490 = vand.u32 %v205, 4294901760
        %v491 = vsub.f32 %v205, %v490
        %492 = vmatpush1.msra.mxu0 %v491
        %493 = vmatprep.subr.mxu0 0.0
        %v494 = vand.u32 %v204, 4294901760
        %v495 = vsub.f32 %v204, %v494
        %496 = vmatpush1.msra.mxu0 %v495
        %497 = vmatprep.subr.mxu0 0.0
        %v498 = vand.u32 %v203, 4294901760
        %v499 = vsub.f32 %v203, %v498
        %500 = vmatpush1.msra.mxu0 %v499
        %501 = vmatprep.subr.mxu0 0.0
        %v502 = vand.u32 %v202, 4294901760
        %v503 = vsub.f32 %v202, %v502
        %504 = vmatpush1.msra.mxu0 %v503
        %505 = vmatprep.subr.mxu0 0.0
        %v506 = vand.u32 %v201, 4294901760
        %v507 = vsub.f32 %v201, %v506
        %508 = vmatpush1.msra.mxu0 %v507
        %509 = vmatprep.subr.mxu0 0.0
        %v510 = vand.u32 %v200, 4294901760
        %v511 = vsub.f32 %v200, %v510
        %512 = vmatpush1.msra.mxu0 %v511
        %513 = vmatprep.subr.mxu0 0.0
        %v514 = vand.u32 %v199, 4294901760
        %v515 = vsub.f32 %v199, %v514
        %516 = vmatpush1.msra.mxu0 %v515
        %517 = vmatprep.subr.mxu0 0.0
        %v518 = vand.u32 %v198, 4294901760
        %v519 = vsub.f32 %v198, %v518
        %520 = vmatpush1.msra.mxu0 %v519
        %521 = vmatprep.subr.mxu0 0.0
        %v522 = vand.u32 %v197, 4294901760
        %v523 = vsub.f32 %v197, %v522
        %524 = vmatpush1.msra.mxu0 %v523
        %525 = vmatprep.subr.mxu0 0.0
        %v526 = vand.u32 %v196, 4294901760
        %v527 = vsub.f32 %v196, %v526
        %528 = vmatpush1.msra.mxu0 %v527
        %529 = vmatprep.subr.mxu0 0.0
        %v530 = vand.u32 %v195, 4294901760
        %v531 = vsub.f32 %v195, %v530
        %532 = vmatpush1.msra.mxu0 %v531
        %533 = vmatprep.subr.mxu0 0.0
        %v534 = vand.u32 %v194, 4294901760
        %v535 = vsub.f32 %v194, %v534
        %536 = vmatpush1.msra.mxu0 %v535
        %537 = vmatprep.subr.mxu0 0.0
        %538 = vmatpush2.msra.mxu0 0.0
        %539 = vmatprep.subr.mxu0 0.0
        %540 = vmatpush2.msra.mxu0 0.0
        %541 = vmatprep.subr.mxu0 0.0
        %542 = vmatpush2.msra.mxu0 0.0
        %543 = vmatprep.subr.mxu0 0.0
        %544 = vmatpush2.msra.mxu0 0.0
        %545 = vmatprep.subr.mxu0 0.0
        %546 = vmatpush2.msra.mxu0 0.0
        %547 = vmatprep.subr.mxu0 0.0
        %548 = vmatpush2.msra.mxu0 0.0
        %549 = vmatprep.subr.mxu0 0.0
        %550 = vmatpush2.msra.mxu0 0.0
        %551 = vmatprep.subr.mxu0 0.0
        %552 = vmatpush2.msra.mxu0 0.0
        %553 = vmatprep.subr.mxu0 0.0
        %554 = vmatpush2.msra.mxu0 0.0
        %555 = vmatprep.subr.mxu0 0.0
        %556 = vmatpush2.msra.mxu0 0.0
        %557 = vmatprep.subr.mxu0 0.0
        %558 = vmatpush2.msra.mxu0 0.0
        %559 = vmatprep.subr.mxu0 0.0
        %560 = vmatpush2.msra.mxu0 0.0
        %561 = vmatprep.subr.mxu0 0.0
        %562 = vmatpush2.msra.mxu0 0.0
        %563 = vmatprep.subr.mxu0 0.0
        %564 = vmatpush2.msra.mxu0 0.0
        %565 = vmatprep.subr.mxu0 0.0
        %566 = vmatpush2.msra.mxu0 0.0
        %567 = vmatprep.subr.mxu0 0.0
        %568 = vmatpush2.msra.mxu0 0.0
        %569 = vmatprep.mubr.f32.mxu0 0.0
        %v570 = vand.u32 %v192, 4294901760
        %v571 = vsub.f32 %v192, %v570
        %572 = vmatmul.mubr.f32.gmra.mxu0 %v571
        %v573 = vpop.f32.mrf.mxu0
        %v574 = vadd.f32 %v464, %v573
        %v575 = vpop.f32.mrf.mxu0
        %576 = vmatprep.mubr.f32.mxu0 0.0
        %v577 = vand.u32 %v193, 4294901760
        %v578 = vsub.f32 %v193, %v577
        %579 = vmatmul.mubr.f32.gmra.mxu0 %v578
        %v580 = vpop.f32.mrf.mxu0
        %v581 = vadd.f32 %v470, %v580
        %v582 = vpop.f32.mrf.mxu0
        %583 = vdwg.mxu0
        %584 = vmatprep.subr.mxu0 0.0
        %v585 = vand.u32 %v209, 4294901760
        %586 = vmatpush1.msra.mxu0 %v585
        %587 = vmatprep.subr.mxu0 0.0
        %v588 = vand.u32 %v208, 4294901760
        %589 = vmatpush1.msra.mxu0 %v588
        %590 = vmatprep.subr.mxu0 0.0
        %v591 = vand.u32 %v207, 4294901760
        %592 = vmatpush1.msra.mxu0 %v591
        %593 = vmatprep.subr.mxu0 0.0
        %v594 = vand.u32 %v206, 4294901760
        %595 = vmatpush1.msra.mxu0 %v594
        %596 = vmatprep.subr.mxu0 0.0
        %v597 = vand.u32 %v205, 4294901760
        %598 = vmatpush1.msra.mxu0 %v597
        %599 = vmatprep.subr.mxu0 0.0
        %v600 = vand.u32 %v204, 4294901760
        %601 = vmatpush1.msra.mxu0 %v600
        %602 = vmatprep.subr.mxu0 0.0
        %v603 = vand.u32 %v203, 4294901760
        %604 = vmatpush1.msra.mxu0 %v603
        %605 = vmatprep.subr.mxu0 0.0
        %v606 = vand.u32 %v202, 4294901760
        %607 = vmatpush1.msra.mxu0 %v606
        %608 = vmatprep.subr.mxu0 0.0
        %v609 = vand.u32 %v201, 4294901760
        %610 = vmatpush1.msra.mxu0 %v609
        %611 = vmatprep.subr.mxu0 0.0
        %v612 = vand.u32 %v200, 4294901760
        %613 = vmatpush1.msra.mxu0 %v612
        %614 = vmatprep.subr.mxu0 0.0
        %v615 = vand.u32 %v199, 4294901760
        %616 = vmatpush1.msra.mxu0 %v615
        %617 = vmatprep.subr.mxu0 0.0
        %v618 = vand.u32 %v198, 4294901760
        %619 = vmatpush1.msra.mxu0 %v618
        %620 = vmatprep.subr.mxu0 0.0
        %v621 = vand.u32 %v197, 4294901760
        %622 = vmatpush1.msra.mxu0 %v621
        %623 = vmatprep.subr.mxu0 0.0
        %v624 = vand.u32 %v196, 4294901760
        %625 = vmatpush1.msra.mxu0 %v624
        %626 = vmatprep.subr.mxu0 0.0
        %v627 = vand.u32 %v195, 4294901760
        %628 = vmatpush1.msra.mxu0 %v627
        %629 = vmatprep.subr.mxu0 0.0
        %v630 = vand.u32 %v194, 4294901760
        %631 = vmatpush1.msra.mxu0 %v630
        %632 = vmatprep.subr.mxu0 0.0
        %633 = vmatpush2.msra.mxu0 0.0
        %634 = vmatprep.subr.mxu0 0.0
        %635 = vmatpush2.msra.mxu0 0.0
        %636 = vmatprep.subr.mxu0 0.0
        %637 = vmatpush2.msra.mxu0 0.0
        %638 = vmatprep.subr.mxu0 0.0
        %639 = vmatpush2.msra.mxu0 0.0
        %640 = vmatprep.subr.mxu0 0.0
        %641 = vmatpush2.msra.mxu0 0.0
        %642 = vmatprep.subr.mxu0 0.0
        %643 = vmatpush2.msra.mxu0 0.0
        %644 = vmatprep.subr.mxu0 0.0
        %645 = vmatpush2.msra.mxu0 0.0
        %646 = vmatprep.subr.mxu0 0.0
        %647 = vmatpush2.msra.mxu0 0.0
        %648 = vmatprep.subr.mxu0 0.0
        %649 = vmatpush2.msra.mxu0 0.0
        %650 = vmatprep.subr.mxu0 0.0
        %651 = vmatpush2.msra.mxu0 0.0
        %652 = vmatprep.subr.mxu0 0.0
        %653 = vmatpush2.msra.mxu0 0.0
        %654 = vmatprep.subr.mxu0 0.0
        %655 = vmatpush2.msra.mxu0 0.0
        %656 = vmatprep.subr.mxu0 0.0
        %657 = vmatpush2.msra.mxu0 0.0
        %658 = vmatprep.subr.mxu0 0.0
        %659 = vmatpush2.msra.mxu0 0.0
        %660 = vmatprep.subr.mxu0 0.0
        %661 = vmatpush2.msra.mxu0 0.0
        %662 = vmatprep.subr.mxu0 0.0
        %663 = vmatpush2.msra.mxu0 0.0
        %664 = vmatprep.mubr.f32.mxu0 0.0
        %v665 = vand.u32 %v192, 4294901760
        %v666 = vsub.f32 %v192, %v665
        %v667 = vand.u32 %v666, 4294901760
        %668 = vmatmul.mubr.f32.gmra.mxu0 %v667
        %v669 = vpop.f32.mrf.mxu0
        %v670 = vadd.f32 %v574, %v669
        %v671 = vpop.f32.mrf.mxu0
        %672 = vmatprep.mubr.f32.mxu0 0.0
        %v673 = vand.u32 %v193, 4294901760
        %v674 = vsub.f32 %v193, %v673
        %v675 = vand.u32 %v674, 4294901760
        %676 = vmatmul.mubr.f32.gmra.mxu0 %v675
        %v677 = vpop.f32.mrf.mxu0
        %v678 = vadd.f32 %v581, %v677
        %v679 = vpop.f32.mrf.mxu0
        %680 = vdwg.mxu0
        %681 = vmatprep.subr.mxu0 0.0
        %v682 = vand.u32 %v209, 4294901760
        %v683 = vsub.f32 %v209, %v682
        %v684 = vand.u32 %v683, 4294901760
        %685 = vmatpush1.msra.mxu0 %v684
        %686 = vmatprep.subr.mxu0 0.0
        %v687 = vand.u32 %v208, 4294901760
        %v688 = vsub.f32 %v208, %v687
        %v689 = vand.u32 %v688, 4294901760
        %690 = vmatpush1.msra.mxu0 %v689
        %691 = vmatprep.subr.mxu0 0.0
        %v692 = vand.u32 %v207, 4294901760
        %v693 = vsub.f32 %v207, %v692
        %v694 = vand.u32 %v693, 4294901760
        %695 = vmatpush1.msra.mxu0 %v694
        %696 = vmatprep.subr.mxu0 0.0
        %v697 = vand.u32 %v206, 4294901760
        %v698 = vsub.f32 %v206, %v697
        %v699 = vand.u32 %v698, 4294901760
        %700 = vmatpush1.msra.mxu0 %v699
        %701 = vmatprep.subr.mxu0 0.0
        %v702 = vand.u32 %v205, 4294901760
        %v703 = vsub.f32 %v205, %v702
        %v704 = vand.u32 %v703, 4294901760
        %705 = vmatpush1.msra.mxu0 %v704
        %706 = vmatprep.subr.mxu0 0.0
        %v707 = vand.u32 %v204, 4294901760
        %v708 = vsub.f32 %v204, %v707
        %v709 = vand.u32 %v708, 4294901760
        %710 = vmatpush1.msra.mxu0 %v709
        %711 = vmatprep.subr.mxu0 0.0
        %v712 = vand.u32 %v203, 4294901760
        %v713 = vsub.f32 %v203, %v712
        %v714 = vand.u32 %v713, 4294901760
        %715 = vmatpush1.msra.mxu0 %v714
        %716 = vmatprep.subr.mxu0 0.0
        %v717 = vand.u32 %v202, 4294901760
        %v718 = vsub.f32 %v202, %v717
        %v719 = vand.u32 %v718, 4294901760
        %720 = vmatpush1.msra.mxu0 %v719
        %721 = vmatprep.subr.mxu0 0.0
        %v722 = vand.u32 %v201, 4294901760
        %v723 = vsub.f32 %v201, %v722
        %v724 = vand.u32 %v723, 4294901760
        %725 = vmatpush1.msra.mxu0 %v724
        %726 = vmatprep.subr.mxu0 0.0
        %v727 = vand.u32 %v200, 4294901760
        %v728 = vsub.f32 %v200, %v727
        %v729 = vand.u32 %v728, 4294901760
        %730 = vmatpush1.msra.mxu0 %v729
        %731 = vmatprep.subr.mxu0 0.0
        %v732 = vand.u32 %v199, 4294901760
        %v733 = vsub.f32 %v199, %v732
        %v734 = vand.u32 %v733, 4294901760
        %735 = vmatpush1.msra.mxu0 %v734
        %736 = vmatprep.subr.mxu0 0.0
        %v737 = vand.u32 %v198, 4294901760
        %v738 = vsub.f32 %v198, %v737
        %v739 = vand.u32 %v738, 4294901760
        %740 = vmatpush1.msra.mxu0 %v739
        %741 = vmatprep.subr.mxu0 0.0
        %v742 = vand.u32 %v197, 4294901760
        %v743 = vsub.f32 %v197, %v742
        %v744 = vand.u32 %v743, 4294901760
        %745 = vmatpush1.msra.mxu0 %v744
        %746 = vmatprep.subr.mxu0 0.0
        %v747 = vand.u32 %v196, 4294901760
        %v748 = vsub.f32 %v196, %v747
        %v749 = vand.u32 %v748, 4294901760
        %750 = vmatpush1.msra.mxu0 %v749
        %751 = vmatprep.subr.mxu0 0.0
        %v752 = vand.u32 %v195, 4294901760
        %v753 = vsub.f32 %v195, %v752
        %v754 = vand.u32 %v753, 4294901760
        %755 = vmatpush1.msra.mxu0 %v754
        %756 = vmatprep.subr.mxu0 0.0
        %v757 = vand.u32 %v194, 4294901760
        %v758 = vsub.f32 %v194, %v757
        %v759 = vand.u32 %v758, 4294901760
        %760 = vmatpush1.msra.mxu0 %v759
        %761 = vmatprep.subr.mxu0 0.0
        %762 = vmatpush2.msra.mxu0 0.0
        %763 = vmatprep.subr.mxu0 0.0
        %764 = vmatpush2.msra.mxu0 0.0
        %765 = vmatprep.subr.mxu0 0.0
        %766 = vmatpush2.msra.mxu0 0.0
        %767 = vmatprep.subr.mxu0 0.0
        %768 = vmatpush2.msra.mxu0 0.0
        %769 = vmatprep.subr.mxu0 0.0
        %770 = vmatpush2.msra.mxu0 0.0
        %771 = vmatprep.subr.mxu0 0.0
        %772 = vmatpush2.msra.mxu0 0.0
        %773 = vmatprep.subr.mxu0 0.0
        %774 = vmatpush2.msra.mxu0 0.0
        %775 = vmatprep.subr.mxu0 0.0
        %776 = vmatpush2.msra.mxu0 0.0
        %777 = vmatprep.subr.mxu0 0.0
        %778 = vmatpush2.msra.mxu0 0.0
        %779 = vmatprep.subr.mxu0 0.0
        %780 = vmatpush2.msra.mxu0 0.0
        %781 = vmatprep.subr.mxu0 0.0
        %782 = vmatpush2.msra.mxu0 0.0
        %783 = vmatprep.subr.mxu0 0.0
        %784 = vmatpush2.msra.mxu0 0.0
        %785 = vmatprep.subr.mxu0 0.0
        %786 = vmatpush2.msra.mxu0 0.0
        %787 = vmatprep.subr.mxu0 0.0
        %788 = vmatpush2.msra.mxu0 0.0
        %789 = vmatprep.subr.mxu0 0.0
        %790 = vmatpush2.msra.mxu0 0.0
        %791 = vmatprep.subr.mxu0 0.0
        %792 = vmatpush2.msra.mxu0 0.0
        %793 = vmatprep.mubr.f32.mxu0 0.0
        %v794 = vand.u32 %v192, 4294901760
        %795 = vmatmul.mubr.f32.gmra.mxu0 %v794
        %v796 = vpop.f32.mrf.mxu0
        %v797 = vadd.f32 %v670, %v796
        %v798 = vpop.f32.mrf.mxu0
        %799 = vmatprep.mubr.f32.mxu0 0.0
        %v800 = vand.u32 %v193, 4294901760
        %801 = vmatmul.mubr.f32.gmra.mxu0 %v800
        %v802 = vpop.f32.mrf.mxu0
        %v803 = vadd.f32 %v678, %v802
        %v804 = vpop.f32.mrf.mxu0
        %805 = vdwg.mxu0
        %806 = vmatprep.subr.mxu0 0.0
        %v807 = vand.u32 %v209, 4294901760
        %808 = vmatpush1.msra.mxu0 %v807
        %809 = vmatprep.subr.mxu0 0.0
        %v810 = vand.u32 %v208, 4294901760
        %811 = vmatpush1.msra.mxu0 %v810
        %812 = vmatprep.subr.mxu0 0.0
        %v813 = vand.u32 %v207, 4294901760
        %814 = vmatpush1.msra.mxu0 %v813
        %815 = vmatprep.subr.mxu0 0.0
        %v816 = vand.u32 %v206, 4294901760
        %817 = vmatpush1.msra.mxu0 %v816
        %818 = vmatprep.subr.mxu0 0.0
        %v819 = vand.u32 %v205, 4294901760
        %820 = vmatpush1.msra.mxu0 %v819
        %821 = vmatprep.subr.mxu0 0.0
        %v822 = vand.u32 %v204, 4294901760
        %823 = vmatpush1.msra.mxu0 %v822
        %824 = vmatprep.subr.mxu0 0.0
        %v825 = vand.u32 %v203, 4294901760
        %826 = vmatpush1.msra.mxu0 %v825
        %827 = vmatprep.subr.mxu0 0.0
        %v828 = vand.u32 %v202, 4294901760
        %829 = vmatpush1.msra.mxu0 %v828
        %830 = vmatprep.subr.mxu0 0.0
        %v831 = vand.u32 %v201, 4294901760
        %832 = vmatpush1.msra.mxu0 %v831
        %833 = vmatprep.subr.mxu0 0.0
        %v834 = vand.u32 %v200, 4294901760
        %835 = vmatpush1.msra.mxu0 %v834
        %836 = vmatprep.subr.mxu0 0.0
        %v837 = vand.u32 %v199, 4294901760
        %838 = vmatpush1.msra.mxu0 %v837
        %839 = vmatprep.subr.mxu0 0.0
        %v840 = vand.u32 %v198, 4294901760
        %841 = vmatpush1.msra.mxu0 %v840
        %842 = vmatprep.subr.mxu0 0.0
        %v843 = vand.u32 %v197, 4294901760
        %844 = vmatpush1.msra.mxu0 %v843
        %845 = vmatprep.subr.mxu0 0.0
        %v846 = vand.u32 %v196, 4294901760
        %847 = vmatpush1.msra.mxu0 %v846
        %848 = vmatprep.subr.mxu0 0.0
        %v849 = vand.u32 %v195, 4294901760
        %850 = vmatpush1.msra.mxu0 %v849
        %851 = vmatprep.subr.mxu0 0.0
        %v852 = vand.u32 %v194, 4294901760
        %853 = vmatpush1.msra.mxu0 %v852
        %854 = vmatprep.subr.mxu0 0.0
        %855 = vmatpush2.msra.mxu0 0.0
        %856 = vmatprep.subr.mxu0 0.0
        %857 = vmatpush2.msra.mxu0 0.0
        %858 = vmatprep.subr.mxu0 0.0
        %859 = vmatpush2.msra.mxu0 0.0
        %860 = vmatprep.subr.mxu0 0.0
        %861 = vmatpush2.msra.mxu0 0.0
        %862 = vmatprep.subr.mxu0 0.0
        %863 = vmatpush2.msra.mxu0 0.0
        %864 = vmatprep.subr.mxu0 0.0
        %865 = vmatpush2.msra.mxu0 0.0
        %866 = vmatprep.subr.mxu0 0.0
        %867 = vmatpush2.msra.mxu0 0.0
        %868 = vmatprep.subr.mxu0 0.0
        %869 = vmatpush2.msra.mxu0 0.0
        %870 = vmatprep.subr.mxu0 0.0
        %871 = vmatpush2.msra.mxu0 0.0
        %872 = vmatprep.subr.mxu0 0.0
        %873 = vmatpush2.msra.mxu0 0.0
        %874 = vmatprep.subr.mxu0 0.0
        %875 = vmatpush2.msra.mxu0 0.0
        %876 = vmatprep.subr.mxu0 0.0
        %877 = vmatpush2.msra.mxu0 0.0
        %878 = vmatprep.subr.mxu0 0.0
        %879 = vmatpush2.msra.mxu0 0.0
        %880 = vmatprep.subr.mxu0 0.0
        %881 = vmatpush2.msra.mxu0 0.0
        %882 = vmatprep.subr.mxu0 0.0
        %883 = vmatpush2.msra.mxu0 0.0
        %884 = vmatprep.subr.mxu0 0.0
        %885 = vmatpush2.msra.mxu0 0.0
        %886 = vmatprep.mubr.f32.mxu0 0.0
        %v887 = vand.u32 %v192, 4294901760
        %888 = vmatmul.mubr.f32.gmra.mxu0 %v887
        %v889 = vpop.f32.mrf.mxu0
        %v890 = vadd.f32 %v797, %v889
        %v891 = vpop.f32.mrf.mxu0
        %892 = vmatprep.mubr.f32.mxu0 0.0
        %v893 = vand.u32 %v193, 4294901760
        %894 = vmatmul.mubr.f32.gmra.mxu0 %v893
        %v895 = vpop.f32.mrf.mxu0
        %v896 = vadd.f32 %v803, %v895
        %v897 = vpop.f32.mrf.mxu0
        %898 = vdwg.mxu0
        %vm899 = vcmp.ge.f32.partialorder %v890, 0.0
        %vm900 = vcmp.ge.f32.partialorder %v896, 0.0
        %v901 = vmul.f32 %v890, 0.01
        %v902 = vmul.f32 %v896, 0.01
        %v903 = vsel %vm899, %v890, %v901
        %v904 = vsel %vm900, %v896, %v902
        %s905 = scalar_lea.vmem [#allocation2], 128
        %v906 = vld [vmem:[%s905] sm:$0xff]
        %v907 = vld [vmem:[%s905 + $0x8] sm:$0xff]
        %v908 = vld [vmem:[%s905 + $0x10] sm:$0xff]
        %v909 = vld [vmem:[%s905 + $0x18] sm:$0xff]
        %v910 = vld [vmem:[%s905 + $0x20] sm:$0xff]
        %v911 = vld [vmem:[%s905 + $0x28] sm:$0xff]
        %v912 = vld [vmem:[%s905 + $0x30] sm:$0xff]
        %v913 = vld [vmem:[%s905 + $0x38] sm:$0xff]
        %v914 = vld [vmem:[%s905 + $0x40] sm:$0xff]
        %v915 = vld [vmem:[%s905 + $0x48] sm:$0xff]
        %v916 = vld [vmem:[%s905 + $0x50] sm:$0xff]
        %v917 = vld [vmem:[%s905 + $0x58] sm:$0xff]
        %v918 = vld [vmem:[%s905 + $0x60] sm:$0xff]
        %v919 = vld [vmem:[%s905 + $0x68] sm:$0xff]
        %v920 = vld [vmem:[%s905 + $0x70] sm:$0xff]
        %v921 = vld [vmem:[%s905 + $0x78] sm:$0xff]
        %v922 = vld [vmem:[%s2 + $0x1] sm:$0x1]
        %v923 = vlaneseq
        %v924 = vshrl.u32 %v923, 7
        %v925 = vsub.s32 0, %v924
        %v926 = vrot.slane %v922, %v925
        %927 = vmatprep.subr.mxu0 0.0
        %v928 = vand.u32 %v921, 4294901760
        %929 = vmatpush1.msra.mxu0 %v928
        %930 = vmatprep.subr.mxu0 0.0
        %v931 = vand.u32 %v920, 4294901760
        %932 = vmatpush1.msra.mxu0 %v931
        %933 = vmatprep.subr.mxu0 0.0
        %v934 = vand.u32 %v919, 4294901760
        %935 = vmatpush1.msra.mxu0 %v934
        %936 = vmatprep.subr.mxu0 0.0
        %v937 = vand.u32 %v918, 4294901760
        %938 = vmatpush1.msra.mxu0 %v937
        %939 = vmatprep.subr.mxu0 0.0
        %v940 = vand.u32 %v917, 4294901760
        %941 = vmatpush1.msra.mxu0 %v940
        %942 = vmatprep.subr.mxu0 0.0
        %v943 = vand.u32 %v916, 4294901760
        %944 = vmatpush1.msra.mxu0 %v943
        %945 = vmatprep.subr.mxu0 0.0
        %v946 = vand.u32 %v915, 4294901760
        %947 = vmatpush1.msra.mxu0 %v946
        %948 = vmatprep.subr.mxu0 0.0
        %v949 = vand.u32 %v914, 4294901760
        %950 = vmatpush1.msra.mxu0 %v949
        %951 = vmatprep.subr.mxu0 0.0
        %v952 = vand.u32 %v913, 4294901760
        %953 = vmatpush1.msra.mxu0 %v952
        %954 = vmatprep.subr.mxu0 0.0
        %v955 = vand.u32 %v912, 4294901760
        %956 = vmatpush1.msra.mxu0 %v955
        %957 = vmatprep.subr.mxu0 0.0
        %v958 = vand.u32 %v911, 4294901760
        %959 = vmatpush1.msra.mxu0 %v958
        %960 = vmatprep.subr.mxu0 0.0
        %v961 = vand.u32 %v910, 4294901760
        %962 = vmatpush1.msra.mxu0 %v961
        %963 = vmatprep.subr.mxu0 0.0
        %v964 = vand.u32 %v909, 4294901760
        %965 = vmatpush1.msra.mxu0 %v964
        %966 = vmatprep.subr.mxu0 0.0
        %v967 = vand.u32 %v908, 4294901760
        %968 = vmatpush1.msra.mxu0 %v967
        %969 = vmatprep.subr.mxu0 0.0
        %v970 = vand.u32 %v907, 4294901760
        %971 = vmatpush1.msra.mxu0 %v970
        %972 = vmatprep.subr.mxu0 0.0
        %v973 = vand.u32 %v906, 4294901760
        %974 = vmatpush1.msra.mxu0 %v973
        %975 = vmatprep.subr.mxu0 0.0
        %976 = vmatpush2.msra.mxu0 0.0
        %977 = vmatprep.subr.mxu0 0.0
        %978 = vmatpush2.msra.mxu0 0.0
        %979 = vmatprep.subr.mxu0 0.0
        %980 = vmatpush2.msra.mxu0 0.0
        %981 = vmatprep.subr.mxu0 0.0
        %982 = vmatpush2.msra.mxu0 0.0
        %983 = vmatprep.subr.mxu0 0.0
        %984 = vmatpush2.msra.mxu0 0.0
        %985 = vmatprep.subr.mxu0 0.0
        %986 = vmatpush2.msra.mxu0 0.0
        %987 = vmatprep.subr.mxu0 0.0
        %988 = vmatpush2.msra.mxu0 0.0
        %989 = vmatprep.subr.mxu0 0.0
        %990 = vmatpush2.msra.mxu0 0.0
        %991 = vmatprep.subr.mxu0 0.0
        %992 = vmatpush2.msra.mxu0 0.0
        %993 = vmatprep.subr.mxu0 0.0
        %994 = vmatpush2.msra.mxu0 0.0
        %995 = vmatprep.subr.mxu0 0.0
        %996 = vmatpush2.msra.mxu0 0.0
        %997 = vmatprep.subr.mxu0 0.0
        %998 = vmatpush2.msra.mxu0 0.0
        %999 = vmatprep.subr.mxu0 0.0
        %1000 = vmatpush2.msra.mxu0 0.0
        %1001 = vmatprep.subr.mxu0 0.0
        %1002 = vmatpush2.msra.mxu0 0.0
        %1003 = vmatprep.subr.mxu0 0.0
        %1004 = vmatpush2.msra.mxu0 0.0
        %1005 = vmatprep.subr.mxu0 0.0
        %1006 = vmatpush2.msra.mxu0 0.0
        %1007 = vmatprep.mubr.f32.mxu0 0.0
        %v1008 = vand.u32 %v903, 4294901760
        %v1009 = vsub.f32 %v903, %v1008
        %v1010 = vand.u32 %v1009, 4294901760
        %v1011 = vsub.f32 %v1009, %v1010
        %v1012 = vand.u32 %v1011, 4294901760
        %1013 = vmatmul.mubr.f32.gmra.mxu0 %v1012
        %v1014 = vpop.f32.mrf.mxu0
        %v1015 = vadd.f32 %v926, %v1014
        %v1016 = vpop.f32.mrf.mxu0
        %1017 = vmatprep.mubr.f32.mxu0 0.0
        %v1018 = vand.u32 %v904, 4294901760
        %v1019 = vsub.f32 %v904, %v1018
        %v1020 = vand.u32 %v1019, 4294901760
        %v1021 = vsub.f32 %v1019, %v1020
        %v1022 = vand.u32 %v1021, 4294901760
        %1023 = vmatmul.mubr.f32.gmra.mxu0 %v1022
        %v1024 = vpop.f32.mrf.mxu0
        %v1025 = vadd.f32 %v926, %v1024
        %v1026 = vpop.f32.mrf.mxu0
        %1027 = vdwg.mxu0
        %1028 = vmatprep.subr.mxu0 0.0
        %v1029 = vand.u32 %v921, 4294901760
        %v1030 = vsub.f32 %v921, %v1029
        %v1031 = vand.u32 %v1030, 4294901760
        %v1032 = vsub.f32 %v1030, %v1031
        %v1033 = vand.u32 %v1032, 4294901760
        %1034 = vmatpush1.msra.mxu0 %v1033
        %1035 = vmatprep.subr.mxu0 0.0
        %v1036 = vand.u32 %v920, 4294901760
        %v1037 = vsub.f32 %v920, %v1036
        %v1038 = vand.u32 %v1037, 4294901760
        %v1039 = vsub.f32 %v1037, %v1038
        %v1040 = vand.u32 %v1039, 4294901760
        %1041 = vmatpush1.msra.mxu0 %v1040
        %1042 = vmatprep.subr.mxu0 0.0
        %v1043 = vand.u32 %v919, 4294901760
        %v1044 = vsub.f32 %v919, %v1043
        %v1045 = vand.u32 %v1044, 4294901760
        %v1046 = vsub.f32 %v1044, %v1045
        %v1047 = vand.u32 %v1046, 4294901760
        %1048 = vmatpush1.msra.mxu0 %v1047
        %1049 = vmatprep.subr.mxu0 0.0
        %v1050 = vand.u32 %v918, 4294901760
        %v1051 = vsub.f32 %v918, %v1050
        %v1052 = vand.u32 %v1051, 4294901760
        %v1053 = vsub.f32 %v1051, %v1052
        %v1054 = vand.u32 %v1053, 4294901760
        %1055 = vmatpush1.msra.mxu0 %v1054
        %1056 = vmatprep.subr.mxu0 0.0
        %v1057 = vand.u32 %v917, 4294901760
        %v1058 = vsub.f32 %v917, %v1057
        %v1059 = vand.u32 %v1058, 4294901760
        %v1060 = vsub.f32 %v1058, %v1059
        %v1061 = vand.u32 %v1060, 4294901760
        %1062 = vmatpush1.msra.mxu0 %v1061
        %1063 = vmatprep.subr.mxu0 0.0
        %v1064 = vand.u32 %v916, 4294901760
        %v1065 = vsub.f32 %v916, %v1064
        %v1066 = vand.u32 %v1065, 4294901760
        %v1067 = vsub.f32 %v1065, %v1066
        %v1068 = vand.u32 %v1067, 4294901760
        %1069 = vmatpush1.msra.mxu0 %v1068
        %1070 = vmatprep.subr.mxu0 0.0
        %v1071 = vand.u32 %v915, 4294901760
        %v1072 = vsub.f32 %v915, %v1071
        %v1073 = vand.u32 %v1072, 4294901760
        %v1074 = vsub.f32 %v1072, %v1073
        %v1075 = vand.u32 %v1074, 4294901760
        %1076 = vmatpush1.msra.mxu0 %v1075
        %1077 = vmatprep.subr.mxu0 0.0
        %v1078 = vand.u32 %v914, 4294901760
        %v1079 = vsub.f32 %v914, %v1078
        %v1080 = vand.u32 %v1079, 4294901760
        %v1081 = vsub.f32 %v1079, %v1080
        %v1082 = vand.u32 %v1081, 4294901760
        %1083 = vmatpush1.msra.mxu0 %v1082
        %1084 = vmatprep.subr.mxu0 0.0
        %v1085 = vand.u32 %v913, 4294901760
        %v1086 = vsub.f32 %v913, %v1085
        %v1087 = vand.u32 %v1086, 4294901760
        %v1088 = vsub.f32 %v1086, %v1087
        %v1089 = vand.u32 %v1088, 4294901760
        %1090 = vmatpush1.msra.mxu0 %v1089
        %1091 = vmatprep.subr.mxu0 0.0
        %v1092 = vand.u32 %v912, 4294901760
        %v1093 = vsub.f32 %v912, %v1092
        %v1094 = vand.u32 %v1093, 4294901760
        %v1095 = vsub.f32 %v1093, %v1094
        %v1096 = vand.u32 %v1095, 4294901760
        %1097 = vmatpush1.msra.mxu0 %v1096
        %1098 = vmatprep.subr.mxu0 0.0
        %v1099 = vand.u32 %v911, 4294901760
        %v1100 = vsub.f32 %v911, %v1099
        %v1101 = vand.u32 %v1100, 4294901760
        %v1102 = vsub.f32 %v1100, %v1101
        %v1103 = vand.u32 %v1102, 4294901760
        %1104 = vmatpush1.msra.mxu0 %v1103
        %1105 = vmatprep.subr.mxu0 0.0
        %v1106 = vand.u32 %v910, 4294901760
        %v1107 = vsub.f32 %v910, %v1106
        %v1108 = vand.u32 %v1107, 4294901760
        %v1109 = vsub.f32 %v1107, %v1108
        %v1110 = vand.u32 %v1109, 4294901760
        %1111 = vmatpush1.msra.mxu0 %v1110
        %1112 = vmatprep.subr.mxu0 0.0
        %v1113 = vand.u32 %v909, 4294901760
        %v1114 = vsub.f32 %v909, %v1113
        %v1115 = vand.u32 %v1114, 4294901760
        %v1116 = vsub.f32 %v1114, %v1115
        %v1117 = vand.u32 %v1116, 4294901760
        %1118 = vmatpush1.msra.mxu0 %v1117
        %1119 = vmatprep.subr.mxu0 0.0
        %v1120 = vand.u32 %v908, 4294901760
        %v1121 = vsub.f32 %v908, %v1120
        %v1122 = vand.u32 %v1121, 4294901760
        %v1123 = vsub.f32 %v1121, %v1122
        %v1124 = vand.u32 %v1123, 4294901760
        %1125 = vmatpush1.msra.mxu0 %v1124
        %1126 = vmatprep.subr.mxu0 0.0
        %v1127 = vand.u32 %v907, 4294901760
        %v1128 = vsub.f32 %v907, %v1127
        %v1129 = vand.u32 %v1128, 4294901760
        %v1130 = vsub.f32 %v1128, %v1129
        %v1131 = vand.u32 %v1130, 4294901760
        %1132 = vmatpush1.msra.mxu0 %v1131
        %1133 = vmatprep.subr.mxu0 0.0
        %v1134 = vand.u32 %v906, 4294901760
        %v1135 = vsub.f32 %v906, %v1134
        %v1136 = vand.u32 %v1135, 4294901760
        %v1137 = vsub.f32 %v1135, %v1136
        %v1138 = vand.u32 %v1137, 4294901760
        %1139 = vmatpush1.msra.mxu0 %v1138
        %1140 = vmatprep.subr.mxu0 0.0
        %1141 = vmatpush2.msra.mxu0 0.0
        %1142 = vmatprep.subr.mxu0 0.0
        %1143 = vmatpush2.msra.mxu0 0.0
        %1144 = vmatprep.subr.mxu0 0.0
        %1145 = vmatpush2.msra.mxu0 0.0
        %1146 = vmatprep.subr.mxu0 0.0
        %1147 = vmatpush2.msra.mxu0 0.0
        %1148 = vmatprep.subr.mxu0 0.0
        %1149 = vmatpush2.msra.mxu0 0.0
        %1150 = vmatprep.subr.mxu0 0.0
        %1151 = vmatpush2.msra.mxu0 0.0
        %1152 = vmatprep.subr.mxu0 0.0
        %1153 = vmatpush2.msra.mxu0 0.0
        %1154 = vmatprep.subr.mxu0 0.0
        %1155 = vmatpush2.msra.mxu0 0.0
        %1156 = vmatprep.subr.mxu0 0.0
        %1157 = vmatpush2.msra.mxu0 0.0
        %1158 = vmatprep.subr.mxu0 0.0
        %1159 = vmatpush2.msra.mxu0 0.0
        %1160 = vmatprep.subr.mxu0 0.0
        %1161 = vmatpush2.msra.mxu0 0.0
        %1162 = vmatprep.subr.mxu0 0.0
        %1163 = vmatpush2.msra.mxu0 0.0
        %1164 = vmatprep.subr.mxu0 0.0
        %1165 = vmatpush2.msra.mxu0 0.0
        %1166 = vmatprep.subr.mxu0 0.0
        %1167 = vmatpush2.msra.mxu0 0.0
        %1168 = vmatprep.subr.mxu0 0.0
        %1169 = vmatpush2.msra.mxu0 0.0
        %1170 = vmatprep.subr.mxu0 0.0
        %1171 = vmatpush2.msra.mxu0 0.0
        %1172 = vmatprep.mubr.f32.mxu0 0.0
        %v1173 = vand.u32 %v903, 4294901760
        %1174 = vmatmul.mubr.f32.gmra.mxu0 %v1173
        %v1175 = vpop.f32.mrf.mxu0
        %v1176 = vadd.f32 %v1015, %v1175
        %v1177 = vpop.f32.mrf.mxu0
        %1178 = vmatprep.mubr.f32.mxu0 0.0
        %v1179 = vand.u32 %v904, 4294901760
        %1180 = vmatmul.mubr.f32.gmra.mxu0 %v1179
        %v1181 = vpop.f32.mrf.mxu0
        %v1182 = vadd.f32 %v1025, %v1181
        %v1183 = vpop.f32.mrf.mxu0
        %1184 = vdwg.mxu0
        %1185 = vmatprep.subr.mxu0 0.0
        %v1186 = vand.u32 %v921, 4294901760
        %v1187 = vsub.f32 %v921, %v1186
        %1188 = vmatpush1.msra.mxu0 %v1187
        %1189 = vmatprep.subr.mxu0 0.0
        %v1190 = vand.u32 %v920, 4294901760
        %v1191 = vsub.f32 %v920, %v1190
        %1192 = vmatpush1.msra.mxu0 %v1191
        %1193 = vmatprep.subr.mxu0 0.0
        %v1194 = vand.u32 %v919, 4294901760
        %v1195 = vsub.f32 %v919, %v1194
        %1196 = vmatpush1.msra.mxu0 %v1195
        %1197 = vmatprep.subr.mxu0 0.0
        %v1198 = vand.u32 %v918, 4294901760
        %v1199 = vsub.f32 %v918, %v1198
        %1200 = vmatpush1.msra.mxu0 %v1199
        %1201 = vmatprep.subr.mxu0 0.0
        %v1202 = vand.u32 %v917, 4294901760
        %v1203 = vsub.f32 %v917, %v1202
        %1204 = vmatpush1.msra.mxu0 %v1203
        %1205 = vmatprep.subr.mxu0 0.0
        %v1206 = vand.u32 %v916, 4294901760
        %v1207 = vsub.f32 %v916, %v1206
        %1208 = vmatpush1.msra.mxu0 %v1207
        %1209 = vmatprep.subr.mxu0 0.0
        %v1210 = vand.u32 %v915, 4294901760
        %v1211 = vsub.f32 %v915, %v1210
        %1212 = vmatpush1.msra.mxu0 %v1211
        %1213 = vmatprep.subr.mxu0 0.0
        %v1214 = vand.u32 %v914, 4294901760
        %v1215 = vsub.f32 %v914, %v1214
        %1216 = vmatpush1.msra.mxu0 %v1215
        %1217 = vmatprep.subr.mxu0 0.0
        %v1218 = vand.u32 %v913, 4294901760
        %v1219 = vsub.f32 %v913, %v1218
        %1220 = vmatpush1.msra.mxu0 %v1219
        %1221 = vmatprep.subr.mxu0 0.0
        %v1222 = vand.u32 %v912, 4294901760
        %v1223 = vsub.f32 %v912, %v1222
        %1224 = vmatpush1.msra.mxu0 %v1223
        %1225 = vmatprep.subr.mxu0 0.0
        %v1226 = vand.u32 %v911, 4294901760
        %v1227 = vsub.f32 %v911, %v1226
        %1228 = vmatpush1.msra.mxu0 %v1227
        %1229 = vmatprep.subr.mxu0 0.0
        %v1230 = vand.u32 %v910, 4294901760
        %v1231 = vsub.f32 %v910, %v1230
        %1232 = vmatpush1.msra.mxu0 %v1231
        %1233 = vmatprep.subr.mxu0 0.0
        %v1234 = vand.u32 %v909, 4294901760
        %v1235 = vsub.f32 %v909, %v1234
        %1236 = vmatpush1.msra.mxu0 %v1235
        %1237 = vmatprep.subr.mxu0 0.0
        %v1238 = vand.u32 %v908, 4294901760
        %v1239 = vsub.f32 %v908, %v1238
        %1240 = vmatpush1.msra.mxu0 %v1239
        %1241 = vmatprep.subr.mxu0 0.0
        %v1242 = vand.u32 %v907, 4294901760
        %v1243 = vsub.f32 %v907, %v1242
        %1244 = vmatpush1.msra.mxu0 %v1243
        %1245 = vmatprep.subr.mxu0 0.0
        %v1246 = vand.u32 %v906, 4294901760
        %v1247 = vsub.f32 %v906, %v1246
        %1248 = vmatpush1.msra.mxu0 %v1247
        %1249 = vmatprep.subr.mxu0 0.0
        %1250 = vmatpush2.msra.mxu0 0.0
        %1251 = vmatprep.subr.mxu0 0.0
        %1252 = vmatpush2.msra.mxu0 0.0
        %1253 = vmatprep.subr.mxu0 0.0
        %1254 = vmatpush2.msra.mxu0 0.0
        %1255 = vmatprep.subr.mxu0 0.0
        %1256 = vmatpush2.msra.mxu0 0.0
        %1257 = vmatprep.subr.mxu0 0.0
        %1258 = vmatpush2.msra.mxu0 0.0
        %1259 = vmatprep.subr.mxu0 0.0
        %1260 = vmatpush2.msra.mxu0 0.0
        %1261 = vmatprep.subr.mxu0 0.0
        %1262 = vmatpush2.msra.mxu0 0.0
        %1263 = vmatprep.subr.mxu0 0.0
        %1264 = vmatpush2.msra.mxu0 0.0
        %1265 = vmatprep.subr.mxu0 0.0
        %1266 = vmatpush2.msra.mxu0 0.0
        %1267 = vmatprep.subr.mxu0 0.0
        %1268 = vmatpush2.msra.mxu0 0.0
        %1269 = vmatprep.subr.mxu0 0.0
        %1270 = vmatpush2.msra.mxu0 0.0
        %1271 = vmatprep.subr.mxu0 0.0
        %1272 = vmatpush2.msra.mxu0 0.0
        %1273 = vmatprep.subr.mxu0 0.0
        %1274 = vmatpush2.msra.mxu0 0.0
        %1275 = vmatprep.subr.mxu0 0.0
        %1276 = vmatpush2.msra.mxu0 0.0
        %1277 = vmatprep.subr.mxu0 0.0
        %1278 = vmatpush2.msra.mxu0 0.0
        %1279 = vmatprep.subr.mxu0 0.0
        %1280 = vmatpush2.msra.mxu0 0.0
        %1281 = vmatprep.mubr.f32.mxu0 0.0
        %v1282 = vand.u32 %v903, 4294901760
        %v1283 = vsub.f32 %v903, %v1282
        %1284 = vmatmul.mubr.f32.gmra.mxu0 %v1283
        %v1285 = vpop.f32.mrf.mxu0
        %v1286 = vadd.f32 %v1176, %v1285
        %v1287 = vpop.f32.mrf.mxu0
        %1288 = vmatprep.mubr.f32.mxu0 0.0
        %v1289 = vand.u32 %v904, 4294901760
        %v1290 = vsub.f32 %v904, %v1289
        %1291 = vmatmul.mubr.f32.gmra.mxu0 %v1290
        %v1292 = vpop.f32.mrf.mxu0
        %v1293 = vadd.f32 %v1182, %v1292
        %v1294 = vpop.f32.mrf.mxu0
        %1295 = vdwg.mxu0
        %1296 = vmatprep.subr.mxu0 0.0
        %v1297 = vand.u32 %v921, 4294901760
        %1298 = vmatpush1.msra.mxu0 %v1297
        %1299 = vmatprep.subr.mxu0 0.0
        %v1300 = vand.u32 %v920, 4294901760
        %1301 = vmatpush1.msra.mxu0 %v1300
        %1302 = vmatprep.subr.mxu0 0.0
        %v1303 = vand.u32 %v919, 4294901760
        %1304 = vmatpush1.msra.mxu0 %v1303
        %1305 = vmatprep.subr.mxu0 0.0
        %v1306 = vand.u32 %v918, 4294901760
        %1307 = vmatpush1.msra.mxu0 %v1306
        %1308 = vmatprep.subr.mxu0 0.0
        %v1309 = vand.u32 %v917, 4294901760
        %1310 = vmatpush1.msra.mxu0 %v1309
        %1311 = vmatprep.subr.mxu0 0.0
        %v1312 = vand.u32 %v916, 4294901760
        %1313 = vmatpush1.msra.mxu0 %v1312
        %1314 = vmatprep.subr.mxu0 0.0
        %v1315 = vand.u32 %v915, 4294901760
        %1316 = vmatpush1.msra.mxu0 %v1315
        %1317 = vmatprep.subr.mxu0 0.0
        %v1318 = vand.u32 %v914, 4294901760
        %1319 = vmatpush1.msra.mxu0 %v1318
        %1320 = vmatprep.subr.mxu0 0.0
        %v1321 = vand.u32 %v913, 4294901760
        %1322 = vmatpush1.msra.mxu0 %v1321
        %1323 = vmatprep.subr.mxu0 0.0
        %v1324 = vand.u32 %v912, 4294901760
        %1325 = vmatpush1.msra.mxu0 %v1324
        %1326 = vmatprep.subr.mxu0 0.0
        %v1327 = vand.u32 %v911, 4294901760
        %1328 = vmatpush1.msra.mxu0 %v1327
        %1329 = vmatprep.subr.mxu0 0.0
        %v1330 = vand.u32 %v910, 4294901760
        %1331 = vmatpush1.msra.mxu0 %v1330
        %1332 = vmatprep.subr.mxu0 0.0
        %v1333 = vand.u32 %v909, 4294901760
        %1334 = vmatpush1.msra.mxu0 %v1333
        %1335 = vmatprep.subr.mxu0 0.0
        %v1336 = vand.u32 %v908, 4294901760
        %1337 = vmatpush1.msra.mxu0 %v1336
        %1338 = vmatprep.subr.mxu0 0.0
        %v1339 = vand.u32 %v907, 4294901760
        %1340 = vmatpush1.msra.mxu0 %v1339
        %1341 = vmatprep.subr.mxu0 0.0
        %v1342 = vand.u32 %v906, 4294901760
        %1343 = vmatpush1.msra.mxu0 %v1342
        %1344 = vmatprep.subr.mxu0 0.0
        %1345 = vmatpush2.msra.mxu0 0.0
        %1346 = vmatprep.subr.mxu0 0.0
        %1347 = vmatpush2.msra.mxu0 0.0
        %1348 = vmatprep.subr.mxu0 0.0
        %1349 = vmatpush2.msra.mxu0 0.0
        %1350 = vmatprep.subr.mxu0 0.0
        %1351 = vmatpush2.msra.mxu0 0.0
        %1352 = vmatprep.subr.mxu0 0.0
        %1353 = vmatpush2.msra.mxu0 0.0
        %1354 = vmatprep.subr.mxu0 0.0
        %1355 = vmatpush2.msra.mxu0 0.0
        %1356 = vmatprep.subr.mxu0 0.0
        %1357 = vmatpush2.msra.mxu0 0.0
        %1358 = vmatprep.subr.mxu0 0.0
        %1359 = vmatpush2.msra.mxu0 0.0
        %1360 = vmatprep.subr.mxu0 0.0
        %1361 = vmatpush2.msra.mxu0 0.0
        %1362 = vmatprep.subr.mxu0 0.0
        %1363 = vmatpush2.msra.mxu0 0.0
        %1364 = vmatprep.subr.mxu0 0.0
        %1365 = vmatpush2.msra.mxu0 0.0
        %1366 = vmatprep.subr.mxu0 0.0
        %1367 = vmatpush2.msra.mxu0 0.0
        %1368 = vmatprep.subr.mxu0 0.0
        %1369 = vmatpush2.msra.mxu0 0.0
        %1370 = vmatprep.subr.mxu0 0.0
        %1371 = vmatpush2.msra.mxu0 0.0
        %1372 = vmatprep.subr.mxu0 0.0
        %1373 = vmatpush2.msra.mxu0 0.0
        %1374 = vmatprep.subr.mxu0 0.0
        %1375 = vmatpush2.msra.mxu0 0.0
        %1376 = vmatprep.mubr.f32.mxu0 0.0
        %v1377 = vand.u32 %v903, 4294901760
        %v1378 = vsub.f32 %v903, %v1377
        %v1379 = vand.u32 %v1378, 4294901760
        %1380 = vmatmul.mubr.f32.gmra.mxu0 %v1379
        %v1381 = vpop.f32.mrf.mxu0
        %v1382 = vadd.f32 %v1286, %v1381
        %v1383 = vpop.f32.mrf.mxu0
        %1384 = vmatprep.mubr.f32.mxu0 0.0
        %v1385 = vand.u32 %v904, 4294901760
        %v1386 = vsub.f32 %v904, %v1385
        %v1387 = vand.u32 %v1386, 4294901760
        %1388 = vmatmul.mubr.f32.gmra.mxu0 %v1387
        %v1389 = vpop.f32.mrf.mxu0
        %v1390 = vadd.f32 %v1293, %v1389
        %v1391 = vpop.f32.mrf.mxu0
        %1392 = vdwg.mxu0
        %1393 = vmatprep.subr.mxu0 0.0
        %v1394 = vand.u32 %v921, 4294901760
        %v1395 = vsub.f32 %v921, %v1394
        %v1396 = vand.u32 %v1395, 4294901760
        %1397 = vmatpush1.msra.mxu0 %v1396
        %1398 = vmatprep.subr.mxu0 0.0
        %v1399 = vand.u32 %v920, 4294901760
        %v1400 = vsub.f32 %v920, %v1399
        %v1401 = vand.u32 %v1400, 4294901760
        %1402 = vmatpush1.msra.mxu0 %v1401
        %1403 = vmatprep.subr.mxu0 0.0
        %v1404 = vand.u32 %v919, 4294901760
        %v1405 = vsub.f32 %v919, %v1404
        %v1406 = vand.u32 %v1405, 4294901760
        %1407 = vmatpush1.msra.mxu0 %v1406
        %1408 = vmatprep.subr.mxu0 0.0
        %v1409 = vand.u32 %v918, 4294901760
        %v1410 = vsub.f32 %v918, %v1409
        %v1411 = vand.u32 %v1410, 4294901760
        %1412 = vmatpush1.msra.mxu0 %v1411
        %1413 = vmatprep.subr.mxu0 0.0
        %v1414 = vand.u32 %v917, 4294901760
        %v1415 = vsub.f32 %v917, %v1414
        %v1416 = vand.u32 %v1415, 4294901760
        %1417 = vmatpush1.msra.mxu0 %v1416
        %1418 = vmatprep.subr.mxu0 0.0
        %v1419 = vand.u32 %v916, 4294901760
        %v1420 = vsub.f32 %v916, %v1419
        %v1421 = vand.u32 %v1420, 4294901760
        %1422 = vmatpush1.msra.mxu0 %v1421
        %1423 = vmatprep.subr.mxu0 0.0
        %v1424 = vand.u32 %v915, 4294901760
        %v1425 = vsub.f32 %v915, %v1424
        %v1426 = vand.u32 %v1425, 4294901760
        %1427 = vmatpush1.msra.mxu0 %v1426
        %1428 = vmatprep.subr.mxu0 0.0
        %v1429 = vand.u32 %v914, 4294901760
        %v1430 = vsub.f32 %v914, %v1429
        %v1431 = vand.u32 %v1430, 4294901760
        %1432 = vmatpush1.msra.mxu0 %v1431
        %1433 = vmatprep.subr.mxu0 0.0
        %v1434 = vand.u32 %v913, 4294901760
        %v1435 = vsub.f32 %v913, %v1434
        %v1436 = vand.u32 %v1435, 4294901760
        %1437 = vmatpush1.msra.mxu0 %v1436
        %1438 = vmatprep.subr.mxu0 0.0
        %v1439 = vand.u32 %v912, 4294901760
        %v1440 = vsub.f32 %v912, %v1439
        %v1441 = vand.u32 %v1440, 4294901760
        %1442 = vmatpush1.msra.mxu0 %v1441
        %1443 = vmatprep.subr.mxu0 0.0
        %v1444 = vand.u32 %v911, 4294901760
        %v1445 = vsub.f32 %v911, %v1444
        %v1446 = vand.u32 %v1445, 4294901760
        %1447 = vmatpush1.msra.mxu0 %v1446
        %1448 = vmatprep.subr.mxu0 0.0
        %v1449 = vand.u32 %v910, 4294901760
        %v1450 = vsub.f32 %v910, %v1449
        %v1451 = vand.u32 %v1450, 4294901760
        %1452 = vmatpush1.msra.mxu0 %v1451
        %1453 = vmatprep.subr.mxu0 0.0
        %v1454 = vand.u32 %v909, 4294901760
        %v1455 = vsub.f32 %v909, %v1454
        %v1456 = vand.u32 %v1455, 4294901760
        %1457 = vmatpush1.msra.mxu0 %v1456
        %1458 = vmatprep.subr.mxu0 0.0
        %v1459 = vand.u32 %v908, 4294901760
        %v1460 = vsub.f32 %v908, %v1459
        %v1461 = vand.u32 %v1460, 4294901760
        %1462 = vmatpush1.msra.mxu0 %v1461
        %1463 = vmatprep.subr.mxu0 0.0
        %v1464 = vand.u32 %v907, 4294901760
        %v1465 = vsub.f32 %v907, %v1464
        %v1466 = vand.u32 %v1465, 4294901760
        %1467 = vmatpush1.msra.mxu0 %v1466
        %1468 = vmatprep.subr.mxu0 0.0
        %v1469 = vand.u32 %v906, 4294901760
        %v1470 = vsub.f32 %v906, %v1469
        %v1471 = vand.u32 %v1470, 4294901760
        %1472 = vmatpush1.msra.mxu0 %v1471
        %1473 = vmatprep.subr.mxu0 0.0
        %1474 = vmatpush2.msra.mxu0 0.0
        %1475 = vmatprep.subr.mxu0 0.0
        %1476 = vmatpush2.msra.mxu0 0.0
        %1477 = vmatprep.subr.mxu0 0.0
        %1478 = vmatpush2.msra.mxu0 0.0
        %1479 = vmatprep.subr.mxu0 0.0
        %1480 = vmatpush2.msra.mxu0 0.0
        %1481 = vmatprep.subr.mxu0 0.0
        %1482 = vmatpush2.msra.mxu0 0.0
        %1483 = vmatprep.subr.mxu0 0.0
        %1484 = vmatpush2.msra.mxu0 0.0
        %1485 = vmatprep.subr.mxu0 0.0
        %1486 = vmatpush2.msra.mxu0 0.0
        %1487 = vmatprep.subr.mxu0 0.0
        %1488 = vmatpush2.msra.mxu0 0.0
        %1489 = vmatprep.subr.mxu0 0.0
        %1490 = vmatpush2.msra.mxu0 0.0
        %1491 = vmatprep.subr.mxu0 0.0
        %1492 = vmatpush2.msra.mxu0 0.0
        %1493 = vmatprep.subr.mxu0 0.0
        %1494 = vmatpush2.msra.mxu0 0.0
        %1495 = vmatprep.subr.mxu0 0.0
        %1496 = vmatpush2.msra.mxu0 0.0
        %1497 = vmatprep.subr.mxu0 0.0
        %1498 = vmatpush2.msra.mxu0 0.0
        %1499 = vmatprep.subr.mxu0 0.0
        %1500 = vmatpush2.msra.mxu0 0.0
        %1501 = vmatprep.subr.mxu0 0.0
        %1502 = vmatpush2.msra.mxu0 0.0
        %1503 = vmatprep.subr.mxu0 0.0
        %1504 = vmatpush2.msra.mxu0 0.0
        %1505 = vmatprep.mubr.f32.mxu0 0.0
        %v1506 = vand.u32 %v903, 4294901760
        %1507 = vmatmul.mubr.f32.gmra.mxu0 %v1506
        %v1508 = vpop.f32.mrf.mxu0
        %v1509 = vadd.f32 %v1382, %v1508
        %v1510 = vpop.f32.mrf.mxu0
        %1511 = vmatprep.mubr.f32.mxu0 0.0
        %v1512 = vand.u32 %v904, 4294901760
        %1513 = vmatmul.mubr.f32.gmra.mxu0 %v1512
        %v1514 = vpop.f32.mrf.mxu0
        %v1515 = vadd.f32 %v1390, %v1514
        %v1516 = vpop.f32.mrf.mxu0
        %1517 = vdwg.mxu0
        %1518 = vmatprep.subr.mxu0 0.0
        %v1519 = vand.u32 %v921, 4294901760
        %1520 = vmatpush1.msra.mxu0 %v1519
        %1521 = vmatprep.subr.mxu0 0.0
        %v1522 = vand.u32 %v920, 4294901760
        %1523 = vmatpush1.msra.mxu0 %v1522
        %1524 = vmatprep.subr.mxu0 0.0
        %v1525 = vand.u32 %v919, 4294901760
        %1526 = vmatpush1.msra.mxu0 %v1525
        %1527 = vmatprep.subr.mxu0 0.0
        %v1528 = vand.u32 %v918, 4294901760
        %1529 = vmatpush1.msra.mxu0 %v1528
        %1530 = vmatprep.subr.mxu0 0.0
        %v1531 = vand.u32 %v917, 4294901760
        %1532 = vmatpush1.msra.mxu0 %v1531
        %1533 = vmatprep.subr.mxu0 0.0
        %v1534 = vand.u32 %v916, 4294901760
        %1535 = vmatpush1.msra.mxu0 %v1534
        %1536 = vmatprep.subr.mxu0 0.0
        %v1537 = vand.u32 %v915, 4294901760
        %1538 = vmatpush1.msra.mxu0 %v1537
        %1539 = vmatprep.subr.mxu0 0.0
        %v1540 = vand.u32 %v914, 4294901760
        %1541 = vmatpush1.msra.mxu0 %v1540
        %1542 = vmatprep.subr.mxu0 0.0
        %v1543 = vand.u32 %v913, 4294901760
        %1544 = vmatpush1.msra.mxu0 %v1543
        %1545 = vmatprep.subr.mxu0 0.0
        %v1546 = vand.u32 %v912, 4294901760
        %1547 = vmatpush1.msra.mxu0 %v1546
        %1548 = vmatprep.subr.mxu0 0.0
        %v1549 = vand.u32 %v911, 4294901760
        %1550 = vmatpush1.msra.mxu0 %v1549
        %1551 = vmatprep.subr.mxu0 0.0
        %v1552 = vand.u32 %v910, 4294901760
        %1553 = vmatpush1.msra.mxu0 %v1552
        %1554 = vmatprep.subr.mxu0 0.0
        %v1555 = vand.u32 %v909, 4294901760
        %1556 = vmatpush1.msra.mxu0 %v1555
        %1557 = vmatprep.subr.mxu0 0.0
        %v1558 = vand.u32 %v908, 4294901760
        %1559 = vmatpush1.msra.mxu0 %v1558
        %1560 = vmatprep.subr.mxu0 0.0
        %v1561 = vand.u32 %v907, 4294901760
        %1562 = vmatpush1.msra.mxu0 %v1561
        %1563 = vmatprep.subr.mxu0 0.0
        %v1564 = vand.u32 %v906, 4294901760
        %1565 = vmatpush1.msra.mxu0 %v1564
        %1566 = vmatprep.subr.mxu0 0.0
        %1567 = vmatpush2.msra.mxu0 0.0
        %1568 = vmatprep.subr.mxu0 0.0
        %1569 = vmatpush2.msra.mxu0 0.0
        %1570 = vmatprep.subr.mxu0 0.0
        %1571 = vmatpush2.msra.mxu0 0.0
        %1572 = vmatprep.subr.mxu0 0.0
        %1573 = vmatpush2.msra.mxu0 0.0
        %1574 = vmatprep.subr.mxu0 0.0
        %1575 = vmatpush2.msra.mxu0 0.0
        %1576 = vmatprep.subr.mxu0 0.0
        %1577 = vmatpush2.msra.mxu0 0.0
        %1578 = vmatprep.subr.mxu0 0.0
        %1579 = vmatpush2.msra.mxu0 0.0
        %1580 = vmatprep.subr.mxu0 0.0
        %1581 = vmatpush2.msra.mxu0 0.0
        %1582 = vmatprep.subr.mxu0 0.0
        %1583 = vmatpush2.msra.mxu0 0.0
        %1584 = vmatprep.subr.mxu0 0.0
        %1585 = vmatpush2.msra.mxu0 0.0
        %1586 = vmatprep.subr.mxu0 0.0
        %1587 = vmatpush2.msra.mxu0 0.0
        %1588 = vmatprep.subr.mxu0 0.0
        %1589 = vmatpush2.msra.mxu0 0.0
        %1590 = vmatprep.subr.mxu0 0.0
        %1591 = vmatpush2.msra.mxu0 0.0
        %1592 = vmatprep.subr.mxu0 0.0
        %1593 = vmatpush2.msra.mxu0 0.0
        %1594 = vmatprep.subr.mxu0 0.0
        %1595 = vmatpush2.msra.mxu0 0.0
        %1596 = vmatprep.subr.mxu0 0.0
        %1597 = vmatpush2.msra.mxu0 0.0
        %1598 = vmatprep.mubr.f32.mxu0 0.0
        %v1599 = vand.u32 %v903, 4294901760
        %1600 = vmatmul.mubr.f32.gmra.mxu0 %v1599
        %v1601 = vpop.f32.mrf.mxu0
        %v1602 = vadd.f32 %v1509, %v1601
        %v1603 = vpop.f32.mrf.mxu0
        %1604 = vmatprep.mubr.f32.mxu0 0.0
        %v1605 = vand.u32 %v904, 4294901760
        %1606 = vmatmul.mubr.f32.gmra.mxu0 %v1605
        %v1607 = vpop.f32.mrf.mxu0
        %v1608 = vadd.f32 %v1515, %v1607
        %v1609 = vpop.f32.mrf.mxu0
        %1610 = vdwg.mxu0
        %vm1611 = vcmp.ge.f32.partialorder %v1602, 0.0
        %vm1612 = vcmp.ge.f32.partialorder %v1608, 0.0
        %v1613 = vmul.f32 %v1602, 0.01
        %v1614 = vmul.f32 %v1608, 0.01
        %v1615 = vsel %vm1611, %v1602, %v1613
        %v1616 = vsel %vm1612, %v1608, %v1614
        %s1617 = scalar_lea.vmem [#allocation2], 256
        %v1618 = vld [vmem:[%s1617] sm:$0xff]
        %v1619 = vld [vmem:[%s1617 + $0x8] sm:$0xff]
        %v1620 = vld [vmem:[%s1617 + $0x10] sm:$0xff]
        %v1621 = vld [vmem:[%s1617 + $0x18] sm:$0xff]
        %v1622 = vld [vmem:[%s1617 + $0x20] sm:$0xff]
        %v1623 = vld [vmem:[%s1617 + $0x28] sm:$0xff]
        %v1624 = vld [vmem:[%s1617 + $0x30] sm:$0xff]
        %v1625 = vld [vmem:[%s1617 + $0x38] sm:$0xff]
        %v1626 = vld [vmem:[%s1617 + $0x40] sm:$0xff]
        %v1627 = vld [vmem:[%s1617 + $0x48] sm:$0xff]
        %v1628 = vld [vmem:[%s1617 + $0x50] sm:$0xff]
        %v1629 = vld [vmem:[%s1617 + $0x58] sm:$0xff]
        %v1630 = vld [vmem:[%s1617 + $0x60] sm:$0xff]
        %v1631 = vld [vmem:[%s1617 + $0x68] sm:$0xff]
        %v1632 = vld [vmem:[%s1617 + $0x70] sm:$0xff]
        %v1633 = vld [vmem:[%s1617 + $0x78] sm:$0xff]
        %v1634 = vld [vmem:[%s2 + $0x2] sm:$0x1]
        %v1635 = vlaneseq
        %v1636 = vshrl.u32 %v1635, 7
        %v1637 = vsub.s32 0, %v1636
        %v1638 = vrot.slane %v1634, %v1637
        %1639 = vmatprep.subr.mxu0 0.0
        %v1640 = vand.u32 %v1633, 4294901760
        %1641 = vmatpush1.msra.mxu0 %v1640
        %1642 = vmatprep.subr.mxu0 0.0
        %v1643 = vand.u32 %v1632, 4294901760
        %1644 = vmatpush1.msra.mxu0 %v1643
        %1645 = vmatprep.subr.mxu0 0.0
        %v1646 = vand.u32 %v1631, 4294901760
        %1647 = vmatpush1.msra.mxu0 %v1646
        %1648 = vmatprep.subr.mxu0 0.0
        %v1649 = vand.u32 %v1630, 4294901760
        %1650 = vmatpush1.msra.mxu0 %v1649
        %1651 = vmatprep.subr.mxu0 0.0
        %v1652 = vand.u32 %v1629, 4294901760
        %1653 = vmatpush1.msra.mxu0 %v1652
        %1654 = vmatprep.subr.mxu0 0.0
        %v1655 = vand.u32 %v1628, 4294901760
        %1656 = vmatpush1.msra.mxu0 %v1655
        %1657 = vmatprep.subr.mxu0 0.0
        %v1658 = vand.u32 %v1627, 4294901760
        %1659 = vmatpush1.msra.mxu0 %v1658
        %1660 = vmatprep.subr.mxu0 0.0
        %v1661 = vand.u32 %v1626, 4294901760
        %1662 = vmatpush1.msra.mxu0 %v1661
        %1663 = vmatprep.subr.mxu0 0.0
        %v1664 = vand.u32 %v1625, 4294901760
        %1665 = vmatpush1.msra.mxu0 %v1664
        %1666 = vmatprep.subr.mxu0 0.0
        %v1667 = vand.u32 %v1624, 4294901760
        %1668 = vmatpush1.msra.mxu0 %v1667
        %1669 = vmatprep.subr.mxu0 0.0
        %v1670 = vand.u32 %v1623, 4294901760
        %1671 = vmatpush1.msra.mxu0 %v1670
        %1672 = vmatprep.subr.mxu0 0.0
        %v1673 = vand.u32 %v1622, 4294901760
        %1674 = vmatpush1.msra.mxu0 %v1673
        %1675 = vmatprep.subr.mxu0 0.0
        %v1676 = vand.u32 %v1621, 4294901760
        %1677 = vmatpush1.msra.mxu0 %v1676
        %1678 = vmatprep.subr.mxu0 0.0
        %v1679 = vand.u32 %v1620, 4294901760
        %1680 = vmatpush1.msra.mxu0 %v1679
        %1681 = vmatprep.subr.mxu0 0.0
        %v1682 = vand.u32 %v1619, 4294901760
        %1683 = vmatpush1.msra.mxu0 %v1682
        %1684 = vmatprep.subr.mxu0 0.0
        %v1685 = vand.u32 %v1618, 4294901760
        %1686 = vmatpush1.msra.mxu0 %v1685
        %1687 = vmatprep.subr.mxu0 0.0
        %1688 = vmatpush2.msra.mxu0 0.0
        %1689 = vmatprep.subr.mxu0 0.0
        %1690 = vmatpush2.msra.mxu0 0.0
        %1691 = vmatprep.subr.mxu0 0.0
        %1692 = vmatpush2.msra.mxu0 0.0
        %1693 = vmatprep.subr.mxu0 0.0
        %1694 = vmatpush2.msra.mxu0 0.0
        %1695 = vmatprep.subr.mxu0 0.0
        %1696 = vmatpush2.msra.mxu0 0.0
        %1697 = vmatprep.subr.mxu0 0.0
        %1698 = vmatpush2.msra.mxu0 0.0
        %1699 = vmatprep.subr.mxu0 0.0
        %1700 = vmatpush2.msra.mxu0 0.0
        %1701 = vmatprep.subr.mxu0 0.0
        %1702 = vmatpush2.msra.mxu0 0.0
        %1703 = vmatprep.subr.mxu0 0.0
        %1704 = vmatpush2.msra.mxu0 0.0
        %1705 = vmatprep.subr.mxu0 0.0
        %1706 = vmatpush2.msra.mxu0 0.0
        %1707 = vmatprep.subr.mxu0 0.0
        %1708 = vmatpush2.msra.mxu0 0.0
        %1709 = vmatprep.subr.mxu0 0.0
        %1710 = vmatpush2.msra.mxu0 0.0
        %1711 = vmatprep.subr.mxu0 0.0
        %1712 = vmatpush2.msra.mxu0 0.0
        %1713 = vmatprep.subr.mxu0 0.0
        %1714 = vmatpush2.msra.mxu0 0.0
        %1715 = vmatprep.subr.mxu0 0.0
        %1716 = vmatpush2.msra.mxu0 0.0
        %1717 = vmatprep.subr.mxu0 0.0
        %1718 = vmatpush2.msra.mxu0 0.0
        %1719 = vmatprep.mubr.f32.mxu0 0.0
        %v1720 = vand.u32 %v1615, 4294901760
        %v1721 = vsub.f32 %v1615, %v1720
        %v1722 = vand.u32 %v1721, 4294901760
        %v1723 = vsub.f32 %v1721, %v1722
        %v1724 = vand.u32 %v1723, 4294901760
        %1725 = vmatmul.mubr.f32.gmra.mxu0 %v1724
        %v1726 = vpop.f32.mrf.mxu0
        %v1727 = vadd.f32 %v1638, %v1726
        %v1728 = vpop.f32.mrf.mxu0
        %1729 = vmatprep.mubr.f32.mxu0 0.0
        %v1730 = vand.u32 %v1616, 4294901760
        %v1731 = vsub.f32 %v1616, %v1730
        %v1732 = vand.u32 %v1731, 4294901760
        %v1733 = vsub.f32 %v1731, %v1732
        %v1734 = vand.u32 %v1733, 4294901760
        %1735 = vmatmul.mubr.f32.gmra.mxu0 %v1734
        %v1736 = vpop.f32.mrf.mxu0
        %v1737 = vadd.f32 %v1638, %v1736
        %v1738 = vpop.f32.mrf.mxu0
        %1739 = vdwg.mxu0
        %1740 = vmatprep.subr.mxu0 0.0
        %v1741 = vand.u32 %v1633, 4294901760
        %v1742 = vsub.f32 %v1633, %v1741
        %v1743 = vand.u32 %v1742, 4294901760
        %v1744 = vsub.f32 %v1742, %v1743
        %v1745 = vand.u32 %v1744, 4294901760
        %1746 = vmatpush1.msra.mxu0 %v1745
        %1747 = vmatprep.subr.mxu0 0.0
        %v1748 = vand.u32 %v1632, 4294901760
        %v1749 = vsub.f32 %v1632, %v1748
        %v1750 = vand.u32 %v1749, 4294901760
        %v1751 = vsub.f32 %v1749, %v1750
        %v1752 = vand.u32 %v1751, 4294901760
        %1753 = vmatpush1.msra.mxu0 %v1752
        %1754 = vmatprep.subr.mxu0 0.0
        %v1755 = vand.u32 %v1631, 4294901760
        %v1756 = vsub.f32 %v1631, %v1755
        %v1757 = vand.u32 %v1756, 4294901760
        %v1758 = vsub.f32 %v1756, %v1757
        %v1759 = vand.u32 %v1758, 4294901760
        %1760 = vmatpush1.msra.mxu0 %v1759
        %1761 = vmatprep.subr.mxu0 0.0
        %v1762 = vand.u32 %v1630, 4294901760
        %v1763 = vsub.f32 %v1630, %v1762
        %v1764 = vand.u32 %v1763, 4294901760
        %v1765 = vsub.f32 %v1763, %v1764
        %v1766 = vand.u32 %v1765, 4294901760
        %1767 = vmatpush1.msra.mxu0 %v1766
        %1768 = vmatprep.subr.mxu0 0.0
        %v1769 = vand.u32 %v1629, 4294901760
        %v1770 = vsub.f32 %v1629, %v1769
        %v1771 = vand.u32 %v1770, 4294901760
        %v1772 = vsub.f32 %v1770, %v1771
        %v1773 = vand.u32 %v1772, 4294901760
        %1774 = vmatpush1.msra.mxu0 %v1773
        %1775 = vmatprep.subr.mxu0 0.0
        %v1776 = vand.u32 %v1628, 4294901760
        %v1777 = vsub.f32 %v1628, %v1776
        %v1778 = vand.u32 %v1777, 4294901760
        %v1779 = vsub.f32 %v1777, %v1778
        %v1780 = vand.u32 %v1779, 4294901760
        %1781 = vmatpush1.msra.mxu0 %v1780
        %1782 = vmatprep.subr.mxu0 0.0
        %v1783 = vand.u32 %v1627, 4294901760
        %v1784 = vsub.f32 %v1627, %v1783
        %v1785 = vand.u32 %v1784, 4294901760
        %v1786 = vsub.f32 %v1784, %v1785
        %v1787 = vand.u32 %v1786, 4294901760
        %1788 = vmatpush1.msra.mxu0 %v1787
        %1789 = vmatprep.subr.mxu0 0.0
        %v1790 = vand.u32 %v1626, 4294901760
        %v1791 = vsub.f32 %v1626, %v1790
        %v1792 = vand.u32 %v1791, 4294901760
        %v1793 = vsub.f32 %v1791, %v1792
        %v1794 = vand.u32 %v1793, 4294901760
        %1795 = vmatpush1.msra.mxu0 %v1794
        %1796 = vmatprep.subr.mxu0 0.0
        %v1797 = vand.u32 %v1625, 4294901760
        %v1798 = vsub.f32 %v1625, %v1797
        %v1799 = vand.u32 %v1798, 4294901760
        %v1800 = vsub.f32 %v1798, %v1799
        %v1801 = vand.u32 %v1800, 4294901760
        %1802 = vmatpush1.msra.mxu0 %v1801
        %1803 = vmatprep.subr.mxu0 0.0
        %v1804 = vand.u32 %v1624, 4294901760
        %v1805 = vsub.f32 %v1624, %v1804
        %v1806 = vand.u32 %v1805, 4294901760
        %v1807 = vsub.f32 %v1805, %v1806
        %v1808 = vand.u32 %v1807, 4294901760
        %1809 = vmatpush1.msra.mxu0 %v1808
        %1810 = vmatprep.subr.mxu0 0.0
        %v1811 = vand.u32 %v1623, 4294901760
        %v1812 = vsub.f32 %v1623, %v1811
        %v1813 = vand.u32 %v1812, 4294901760
        %v1814 = vsub.f32 %v1812, %v1813
        %v1815 = vand.u32 %v1814, 4294901760
        %1816 = vmatpush1.msra.mxu0 %v1815
        %1817 = vmatprep.subr.mxu0 0.0
        %v1818 = vand.u32 %v1622, 4294901760
        %v1819 = vsub.f32 %v1622, %v1818
        %v1820 = vand.u32 %v1819, 4294901760
        %v1821 = vsub.f32 %v1819, %v1820
        %v1822 = vand.u32 %v1821, 4294901760
        %1823 = vmatpush1.msra.mxu0 %v1822
        %1824 = vmatprep.subr.mxu0 0.0
        %v1825 = vand.u32 %v1621, 4294901760
        %v1826 = vsub.f32 %v1621, %v1825
        %v1827 = vand.u32 %v1826, 4294901760
        %v1828 = vsub.f32 %v1826, %v1827
        %v1829 = vand.u32 %v1828, 4294901760
        %1830 = vmatpush1.msra.mxu0 %v1829
        %1831 = vmatprep.subr.mxu0 0.0
        %v1832 = vand.u32 %v1620, 4294901760
        %v1833 = vsub.f32 %v1620, %v1832
        %v1834 = vand.u32 %v1833, 4294901760
        %v1835 = vsub.f32 %v1833, %v1834
        %v1836 = vand.u32 %v1835, 4294901760
        %1837 = vmatpush1.msra.mxu0 %v1836
        %1838 = vmatprep.subr.mxu0 0.0
        %v1839 = vand.u32 %v1619, 4294901760
        %v1840 = vsub.f32 %v1619, %v1839
        %v1841 = vand.u32 %v1840, 4294901760
        %v1842 = vsub.f32 %v1840, %v1841
        %v1843 = vand.u32 %v1842, 4294901760
        %1844 = vmatpush1.msra.mxu0 %v1843
        %1845 = vmatprep.subr.mxu0 0.0
        %v1846 = vand.u32 %v1618, 4294901760
        %v1847 = vsub.f32 %v1618, %v1846
        %v1848 = vand.u32 %v1847, 4294901760
        %v1849 = vsub.f32 %v1847, %v1848
        %v1850 = vand.u32 %v1849, 4294901760
        %1851 = vmatpush1.msra.mxu0 %v1850
        %1852 = vmatprep.subr.mxu0 0.0
        %1853 = vmatpush2.msra.mxu0 0.0
        %1854 = vmatprep.subr.mxu0 0.0
        %1855 = vmatpush2.msra.mxu0 0.0
        %1856 = vmatprep.subr.mxu0 0.0
        %1857 = vmatpush2.msra.mxu0 0.0
        %1858 = vmatprep.subr.mxu0 0.0
        %1859 = vmatpush2.msra.mxu0 0.0
        %1860 = vmatprep.subr.mxu0 0.0
        %1861 = vmatpush2.msra.mxu0 0.0
        %1862 = vmatprep.subr.mxu0 0.0
        %1863 = vmatpush2.msra.mxu0 0.0
        %1864 = vmatprep.subr.mxu0 0.0
        %1865 = vmatpush2.msra.mxu0 0.0
        %1866 = vmatprep.subr.mxu0 0.0
        %1867 = vmatpush2.msra.mxu0 0.0
        %1868 = vmatprep.subr.mxu0 0.0
        %1869 = vmatpush2.msra.mxu0 0.0
        %1870 = vmatprep.subr.mxu0 0.0
        %1871 = vmatpush2.msra.mxu0 0.0
        %1872 = vmatprep.subr.mxu0 0.0
        %1873 = vmatpush2.msra.mxu0 0.0
        %1874 = vmatprep.subr.mxu0 0.0
        %1875 = vmatpush2.msra.mxu0 0.0
        %1876 = vmatprep.subr.mxu0 0.0
        %1877 = vmatpush2.msra.mxu0 0.0
        %1878 = vmatprep.subr.mxu0 0.0
        %1879 = vmatpush2.msra.mxu0 0.0
        %1880 = vmatprep.subr.mxu0 0.0
        %1881 = vmatpush2.msra.mxu0 0.0
        %1882 = vmatprep.subr.mxu0 0.0
        %1883 = vmatpush2.msra.mxu0 0.0
        %1884 = vmatprep.mubr.f32.mxu0 0.0
        %v1885 = vand.u32 %v1615, 4294901760
        %1886 = vmatmul.mubr.f32.gmra.mxu0 %v1885
        %v1887 = vpop.f32.mrf.mxu0
        %v1888 = vadd.f32 %v1727, %v1887
        %v1889 = vpop.f32.mrf.mxu0
        %1890 = vmatprep.mubr.f32.mxu0 0.0
        %v1891 = vand.u32 %v1616, 4294901760
        %1892 = vmatmul.mubr.f32.gmra.mxu0 %v1891
        %v1893 = vpop.f32.mrf.mxu0
        %v1894 = vadd.f32 %v1737, %v1893
        %v1895 = vpop.f32.mrf.mxu0
        %1896 = vdwg.mxu0
        %1897 = vmatprep.subr.mxu0 0.0
        %v1898 = vand.u32 %v1633, 4294901760
        %v1899 = vsub.f32 %v1633, %v1898
        %1900 = vmatpush1.msra.mxu0 %v1899
        %1901 = vmatprep.subr.mxu0 0.0
        %v1902 = vand.u32 %v1632, 4294901760
        %v1903 = vsub.f32 %v1632, %v1902
        %1904 = vmatpush1.msra.mxu0 %v1903
        %1905 = vmatprep.subr.mxu0 0.0
        %v1906 = vand.u32 %v1631, 4294901760
        %v1907 = vsub.f32 %v1631, %v1906
        %1908 = vmatpush1.msra.mxu0 %v1907
        %1909 = vmatprep.subr.mxu0 0.0
        %v1910 = vand.u32 %v1630, 4294901760
        %v1911 = vsub.f32 %v1630, %v1910
        %1912 = vmatpush1.msra.mxu0 %v1911
        %1913 = vmatprep.subr.mxu0 0.0
        %v1914 = vand.u32 %v1629, 4294901760
        %v1915 = vsub.f32 %v1629, %v1914
        %1916 = vmatpush1.msra.mxu0 %v1915
        %1917 = vmatprep.subr.mxu0 0.0
        %v1918 = vand.u32 %v1628, 4294901760
        %v1919 = vsub.f32 %v1628, %v1918
        %1920 = vmatpush1.msra.mxu0 %v1919
        %1921 = vmatprep.subr.mxu0 0.0
        %v1922 = vand.u32 %v1627, 4294901760
        %v1923 = vsub.f32 %v1627, %v1922
        %1924 = vmatpush1.msra.mxu0 %v1923
        %1925 = vmatprep.subr.mxu0 0.0
        %v1926 = vand.u32 %v1626, 4294901760
        %v1927 = vsub.f32 %v1626, %v1926
        %1928 = vmatpush1.msra.mxu0 %v1927
        %1929 = vmatprep.subr.mxu0 0.0
        %v1930 = vand.u32 %v1625, 4294901760
        %v1931 = vsub.f32 %v1625, %v1930
        %1932 = vmatpush1.msra.mxu0 %v1931
        %1933 = vmatprep.subr.mxu0 0.0
        %v1934 = vand.u32 %v1624, 4294901760
        %v1935 = vsub.f32 %v1624, %v1934
        %1936 = vmatpush1.msra.mxu0 %v1935
        %1937 = vmatprep.subr.mxu0 0.0
        %v1938 = vand.u32 %v1623, 4294901760
        %v1939 = vsub.f32 %v1623, %v1938
        %1940 = vmatpush1.msra.mxu0 %v1939
        %1941 = vmatprep.subr.mxu0 0.0
        %v1942 = vand.u32 %v1622, 4294901760
        %v1943 = vsub.f32 %v1622, %v1942
        %1944 = vmatpush1.msra.mxu0 %v1943
        %1945 = vmatprep.subr.mxu0 0.0
        %v1946 = vand.u32 %v1621, 4294901760
        %v1947 = vsub.f32 %v1621, %v1946
        %1948 = vmatpush1.msra.mxu0 %v1947
        %1949 = vmatprep.subr.mxu0 0.0
        %v1950 = vand.u32 %v1620, 4294901760
        %v1951 = vsub.f32 %v1620, %v1950
        %1952 = vmatpush1.msra.mxu0 %v1951
        %1953 = vmatprep.subr.mxu0 0.0
        %v1954 = vand.u32 %v1619, 4294901760
        %v1955 = vsub.f32 %v1619, %v1954
        %1956 = vmatpush1.msra.mxu0 %v1955
        %1957 = vmatprep.subr.mxu0 0.0
        %v1958 = vand.u32 %v1618, 4294901760
        %v1959 = vsub.f32 %v1618, %v1958
        %1960 = vmatpush1.msra.mxu0 %v1959
        %1961 = vmatprep.subr.mxu0 0.0
        %1962 = vmatpush2.msra.mxu0 0.0
        %1963 = vmatprep.subr.mxu0 0.0
        %1964 = vmatpush2.msra.mxu0 0.0
        %1965 = vmatprep.subr.mxu0 0.0
        %1966 = vmatpush2.msra.mxu0 0.0
        %1967 = vmatprep.subr.mxu0 0.0
        %1968 = vmatpush2.msra.mxu0 0.0
        %1969 = vmatprep.subr.mxu0 0.0
        %1970 = vmatpush2.msra.mxu0 0.0
        %1971 = vmatprep.subr.mxu0 0.0
        %1972 = vmatpush2.msra.mxu0 0.0
        %1973 = vmatprep.subr.mxu0 0.0
        %1974 = vmatpush2.msra.mxu0 0.0
        %1975 = vmatprep.subr.mxu0 0.0
        %1976 = vmatpush2.msra.mxu0 0.0
        %1977 = vmatprep.subr.mxu0 0.0
        %1978 = vmatpush2.msra.mxu0 0.0
        %1979 = vmatprep.subr.mxu0 0.0
        %1980 = vmatpush2.msra.mxu0 0.0
        %1981 = vmatprep.subr.mxu0 0.0
        %1982 = vmatpush2.msra.mxu0 0.0
        %1983 = vmatprep.subr.mxu0 0.0
        %1984 = vmatpush2.msra.mxu0 0.0
        %1985 = vmatprep.subr.mxu0 0.0
        %1986 = vmatpush2.msra.mxu0 0.0
        %1987 = vmatprep.subr.mxu0 0.0
        %1988 = vmatpush2.msra.mxu0 0.0
        %1989 = vmatprep.subr.mxu0 0.0
        %1990 = vmatpush2.msra.mxu0 0.0
        %1991 = vmatprep.subr.mxu0 0.0
        %1992 = vmatpush2.msra.mxu0 0.0
        %1993 = vmatprep.mubr.f32.mxu0 0.0
        %v1994 = vand.u32 %v1615, 4294901760
        %v1995 = vsub.f32 %v1615, %v1994
        %1996 = vmatmul.mubr.f32.gmra.mxu0 %v1995
        %v1997 = vpop.f32.mrf.mxu0
        %v1998 = vadd.f32 %v1888, %v1997
        %v1999 = vpop.f32.mrf.mxu0
        %2000 = vmatprep.mubr.f32.mxu0 0.0
        %v2001 = vand.u32 %v1616, 4294901760
        %v2002 = vsub.f32 %v1616, %v2001
        %2003 = vmatmul.mubr.f32.gmra.mxu0 %v2002
        %v2004 = vpop.f32.mrf.mxu0
        %v2005 = vadd.f32 %v1894, %v2004
        %v2006 = vpop.f32.mrf.mxu0
        %2007 = vdwg.mxu0
        %2008 = vmatprep.subr.mxu0 0.0
        %v2009 = vand.u32 %v1633, 4294901760
        %2010 = vmatpush1.msra.mxu0 %v2009
        %2011 = vmatprep.subr.mxu0 0.0
        %v2012 = vand.u32 %v1632, 4294901760
        %2013 = vmatpush1.msra.mxu0 %v2012
        %2014 = vmatprep.subr.mxu0 0.0
        %v2015 = vand.u32 %v1631, 4294901760
        %2016 = vmatpush1.msra.mxu0 %v2015
        %2017 = vmatprep.subr.mxu0 0.0
        %v2018 = vand.u32 %v1630, 4294901760
        %2019 = vmatpush1.msra.mxu0 %v2018
        %2020 = vmatprep.subr.mxu0 0.0
        %v2021 = vand.u32 %v1629, 4294901760
        %2022 = vmatpush1.msra.mxu0 %v2021
        %2023 = vmatprep.subr.mxu0 0.0
        %v2024 = vand.u32 %v1628, 4294901760
        %2025 = vmatpush1.msra.mxu0 %v2024
        %2026 = vmatprep.subr.mxu0 0.0
        %v2027 = vand.u32 %v1627, 4294901760
        %2028 = vmatpush1.msra.mxu0 %v2027
        %2029 = vmatprep.subr.mxu0 0.0
        %v2030 = vand.u32 %v1626, 4294901760
        %2031 = vmatpush1.msra.mxu0 %v2030
        %2032 = vmatprep.subr.mxu0 0.0
        %v2033 = vand.u32 %v1625, 4294901760
        %2034 = vmatpush1.msra.mxu0 %v2033
        %2035 = vmatprep.subr.mxu0 0.0
        %v2036 = vand.u32 %v1624, 4294901760
        %2037 = vmatpush1.msra.mxu0 %v2036
        %2038 = vmatprep.subr.mxu0 0.0
        %v2039 = vand.u32 %v1623, 4294901760
        %2040 = vmatpush1.msra.mxu0 %v2039
        %2041 = vmatprep.subr.mxu0 0.0
        %v2042 = vand.u32 %v1622, 4294901760
        %2043 = vmatpush1.msra.mxu0 %v2042
        %2044 = vmatprep.subr.mxu0 0.0
        %v2045 = vand.u32 %v1621, 4294901760
        %2046 = vmatpush1.msra.mxu0 %v2045
        %2047 = vmatprep.subr.mxu0 0.0
        %v2048 = vand.u32 %v1620, 4294901760
        %2049 = vmatpush1.msra.mxu0 %v2048
        %2050 = vmatprep.subr.mxu0 0.0
        %v2051 = vand.u32 %v1619, 4294901760
        %2052 = vmatpush1.msra.mxu0 %v2051
        %2053 = vmatprep.subr.mxu0 0.0
        %v2054 = vand.u32 %v1618, 4294901760
        %2055 = vmatpush1.msra.mxu0 %v2054
        %2056 = vmatprep.subr.mxu0 0.0
        %2057 = vmatpush2.msra.mxu0 0.0
        %2058 = vmatprep.subr.mxu0 0.0
        %2059 = vmatpush2.msra.mxu0 0.0
        %2060 = vmatprep.subr.mxu0 0.0
        %2061 = vmatpush2.msra.mxu0 0.0
        %2062 = vmatprep.subr.mxu0 0.0
        %2063 = vmatpush2.msra.mxu0 0.0
        %2064 = vmatprep.subr.mxu0 0.0
        %2065 = vmatpush2.msra.mxu0 0.0
        %2066 = vmatprep.subr.mxu0 0.0
        %2067 = vmatpush2.msra.mxu0 0.0
        %2068 = vmatprep.subr.mxu0 0.0
        %2069 = vmatpush2.msra.mxu0 0.0
        %2070 = vmatprep.subr.mxu0 0.0
        %2071 = vmatpush2.msra.mxu0 0.0
        %2072 = vmatprep.subr.mxu0 0.0
        %2073 = vmatpush2.msra.mxu0 0.0
        %2074 = vmatprep.subr.mxu0 0.0
        %2075 = vmatpush2.msra.mxu0 0.0
        %2076 = vmatprep.subr.mxu0 0.0
        %2077 = vmatpush2.msra.mxu0 0.0
        %2078 = vmatprep.subr.mxu0 0.0
        %2079 = vmatpush2.msra.mxu0 0.0
        %2080 = vmatprep.subr.mxu0 0.0
        %2081 = vmatpush2.msra.mxu0 0.0
        %2082 = vmatprep.subr.mxu0 0.0
        %2083 = vmatpush2.msra.mxu0 0.0
        %2084 = vmatprep.subr.mxu0 0.0
        %2085 = vmatpush2.msra.mxu0 0.0
        %2086 = vmatprep.subr.mxu0 0.0
        %2087 = vmatpush2.msra.mxu0 0.0
        %2088 = vmatprep.mubr.f32.mxu0 0.0
        %v2089 = vand.u32 %v1615, 4294901760
        %v2090 = vsub.f32 %v1615, %v2089
        %v2091 = vand.u32 %v2090, 4294901760
        %2092 = vmatmul.mubr.f32.gmra.mxu0 %v2091
        %v2093 = vpop.f32.mrf.mxu0
        %v2094 = vadd.f32 %v1998, %v2093
        %v2095 = vpop.f32.mrf.mxu0
        %2096 = vmatprep.mubr.f32.mxu0 0.0
        %v2097 = vand.u32 %v1616, 4294901760
        %v2098 = vsub.f32 %v1616, %v2097
        %v2099 = vand.u32 %v2098, 4294901760
        %2100 = vmatmul.mubr.f32.gmra.mxu0 %v2099
        %v2101 = vpop.f32.mrf.mxu0
        %v2102 = vadd.f32 %v2005, %v2101
        %v2103 = vpop.f32.mrf.mxu0
        %2104 = vdwg.mxu0
        %2105 = vmatprep.subr.mxu0 0.0
        %v2106 = vand.u32 %v1633, 4294901760
        %v2107 = vsub.f32 %v1633, %v2106
        %v2108 = vand.u32 %v2107, 4294901760
        %2109 = vmatpush1.msra.mxu0 %v2108
        %2110 = vmatprep.subr.mxu0 0.0
        %v2111 = vand.u32 %v1632, 4294901760
        %v2112 = vsub.f32 %v1632, %v2111
        %v2113 = vand.u32 %v2112, 4294901760
        %2114 = vmatpush1.msra.mxu0 %v2113
        %2115 = vmatprep.subr.mxu0 0.0
        %v2116 = vand.u32 %v1631, 4294901760
        %v2117 = vsub.f32 %v1631, %v2116
        %v2118 = vand.u32 %v2117, 4294901760
        %2119 = vmatpush1.msra.mxu0 %v2118
        %2120 = vmatprep.subr.mxu0 0.0
        %v2121 = vand.u32 %v1630, 4294901760
        %v2122 = vsub.f32 %v1630, %v2121
        %v2123 = vand.u32 %v2122, 4294901760
        %2124 = vmatpush1.msra.mxu0 %v2123
        %2125 = vmatprep.subr.mxu0 0.0
        %v2126 = vand.u32 %v1629, 4294901760
        %v2127 = vsub.f32 %v1629, %v2126
        %v2128 = vand.u32 %v2127, 4294901760
        %2129 = vmatpush1.msra.mxu0 %v2128
        %2130 = vmatprep.subr.mxu0 0.0
        %v2131 = vand.u32 %v1628, 4294901760
        %v2132 = vsub.f32 %v1628, %v2131
        %v2133 = vand.u32 %v2132, 4294901760
        %2134 = vmatpush1.msra.mxu0 %v2133
        %2135 = vmatprep.subr.mxu0 0.0
        %v2136 = vand.u32 %v1627, 4294901760
        %v2137 = vsub.f32 %v1627, %v2136
        %v2138 = vand.u32 %v2137, 4294901760
        %2139 = vmatpush1.msra.mxu0 %v2138
        %2140 = vmatprep.subr.mxu0 0.0
        %v2141 = vand.u32 %v1626, 4294901760
        %v2142 = vsub.f32 %v1626, %v2141
        %v2143 = vand.u32 %v2142, 4294901760
        %2144 = vmatpush1.msra.mxu0 %v2143
        %2145 = vmatprep.subr.mxu0 0.0
        %v2146 = vand.u32 %v1625, 4294901760
        %v2147 = vsub.f32 %v1625, %v2146
        %v2148 = vand.u32 %v2147, 4294901760
        %2149 = vmatpush1.msra.mxu0 %v2148
        %2150 = vmatprep.subr.mxu0 0.0
        %v2151 = vand.u32 %v1624, 4294901760
        %v2152 = vsub.f32 %v1624, %v2151
        %v2153 = vand.u32 %v2152, 4294901760
        %2154 = vmatpush1.msra.mxu0 %v2153
        %2155 = vmatprep.subr.mxu0 0.0
        %v2156 = vand.u32 %v1623, 4294901760
        %v2157 = vsub.f32 %v1623, %v2156
        %v2158 = vand.u32 %v2157, 4294901760
        %2159 = vmatpush1.msra.mxu0 %v2158
        %2160 = vmatprep.subr.mxu0 0.0
        %v2161 = vand.u32 %v1622, 4294901760
        %v2162 = vsub.f32 %v1622, %v2161
        %v2163 = vand.u32 %v2162, 4294901760
        %2164 = vmatpush1.msra.mxu0 %v2163
        %2165 = vmatprep.subr.mxu0 0.0
        %v2166 = vand.u32 %v1621, 4294901760
        %v2167 = vsub.f32 %v1621, %v2166
        %v2168 = vand.u32 %v2167, 4294901760
        %2169 = vmatpush1.msra.mxu0 %v2168
        %2170 = vmatprep.subr.mxu0 0.0
        %v2171 = vand.u32 %v1620, 4294901760
        %v2172 = vsub.f32 %v1620, %v2171
        %v2173 = vand.u32 %v2172, 4294901760
        %2174 = vmatpush1.msra.mxu0 %v2173
        %2175 = vmatprep.subr.mxu0 0.0
        %v2176 = vand.u32 %v1619, 4294901760
        %v2177 = vsub.f32 %v1619, %v2176
        %v2178 = vand.u32 %v2177, 4294901760
        %2179 = vmatpush1.msra.mxu0 %v2178
        %2180 = vmatprep.subr.mxu0 0.0
        %v2181 = vand.u32 %v1618, 4294901760
        %v2182 = vsub.f32 %v1618, %v2181
        %v2183 = vand.u32 %v2182, 4294901760
        %2184 = vmatpush1.msra.mxu0 %v2183
        %2185 = vmatprep.subr.mxu0 0.0
        %2186 = vmatpush2.msra.mxu0 0.0
        %2187 = vmatprep.subr.mxu0 0.0
        %2188 = vmatpush2.msra.mxu0 0.0
        %2189 = vmatprep.subr.mxu0 0.0
        %2190 = vmatpush2.msra.mxu0 0.0
        %2191 = vmatprep.subr.mxu0 0.0
        %2192 = vmatpush2.msra.mxu0 0.0
        %2193 = vmatprep.subr.mxu0 0.0
        %2194 = vmatpush2.msra.mxu0 0.0
        %2195 = vmatprep.subr.mxu0 0.0
        %2196 = vmatpush2.msra.mxu0 0.0
        %2197 = vmatprep.subr.mxu0 0.0
        %2198 = vmatpush2.msra.mxu0 0.0
        %2199 = vmatprep.subr.mxu0 0.0
        %2200 = vmatpush2.msra.mxu0 0.0
        %2201 = vmatprep.subr.mxu0 0.0
        %2202 = vmatpush2.msra.mxu0 0.0
        %2203 = vmatprep.subr.mxu0 0.0
        %2204 = vmatpush2.msra.mxu0 0.0
        %2205 = vmatprep.subr.mxu0 0.0
        %2206 = vmatpush2.msra.mxu0 0.0
        %2207 = vmatprep.subr.mxu0 0.0
        %2208 = vmatpush2.msra.mxu0 0.0
        %2209 = vmatprep.subr.mxu0 0.0
        %2210 = vmatpush2.msra.mxu0 0.0
        %2211 = vmatprep.subr.mxu0 0.0
        %2212 = vmatpush2.msra.mxu0 0.0
        %2213 = vmatprep.subr.mxu0 0.0
        %2214 = vmatpush2.msra.mxu0 0.0
        %2215 = vmatprep.subr.mxu0 0.0
        %2216 = vmatpush2.msra.mxu0 0.0
        %2217 = vmatprep.mubr.f32.mxu0 0.0
        %v2218 = vand.u32 %v1615, 4294901760
        %2219 = vmatmul.mubr.f32.gmra.mxu0 %v2218
        %v2220 = vpop.f32.mrf.mxu0
        %v2221 = vadd.f32 %v2094, %v2220
        %v2222 = vpop.f32.mrf.mxu0
        %2223 = vmatprep.mubr.f32.mxu0 0.0
        %v2224 = vand.u32 %v1616, 4294901760
        %2225 = vmatmul.mubr.f32.gmra.mxu0 %v2224
        %v2226 = vpop.f32.mrf.mxu0
        %v2227 = vadd.f32 %v2102, %v2226
        %v2228 = vpop.f32.mrf.mxu0
        %2229 = vdwg.mxu0
        %2230 = vmatprep.subr.mxu0 0.0
        %v2231 = vand.u32 %v1633, 4294901760
        %2232 = vmatpush1.msra.mxu0 %v2231
        %2233 = vmatprep.subr.mxu0 0.0
        %v2234 = vand.u32 %v1632, 4294901760
        %2235 = vmatpush1.msra.mxu0 %v2234
        %2236 = vmatprep.subr.mxu0 0.0
        %v2237 = vand.u32 %v1631, 4294901760
        %2238 = vmatpush1.msra.mxu0 %v2237
        %2239 = vmatprep.subr.mxu0 0.0
        %v2240 = vand.u32 %v1630, 4294901760
        %2241 = vmatpush1.msra.mxu0 %v2240
        %2242 = vmatprep.subr.mxu0 0.0
        %v2243 = vand.u32 %v1629, 4294901760
        %2244 = vmatpush1.msra.mxu0 %v2243
        %2245 = vmatprep.subr.mxu0 0.0
        %v2246 = vand.u32 %v1628, 4294901760
        %2247 = vmatpush1.msra.mxu0 %v2246
        %2248 = vmatprep.subr.mxu0 0.0
        %v2249 = vand.u32 %v1627, 4294901760
        %2250 = vmatpush1.msra.mxu0 %v2249
        %2251 = vmatprep.subr.mxu0 0.0
        %v2252 = vand.u32 %v1626, 4294901760
        %2253 = vmatpush1.msra.mxu0 %v2252
        %2254 = vmatprep.subr.mxu0 0.0
        %v2255 = vand.u32 %v1625, 4294901760
        %2256 = vmatpush1.msra.mxu0 %v2255
        %2257 = vmatprep.subr.mxu0 0.0
        %v2258 = vand.u32 %v1624, 4294901760
        %2259 = vmatpush1.msra.mxu0 %v2258
        %2260 = vmatprep.subr.mxu0 0.0
        %v2261 = vand.u32 %v1623, 4294901760
        %2262 = vmatpush1.msra.mxu0 %v2261
        %2263 = vmatprep.subr.mxu0 0.0
        %v2264 = vand.u32 %v1622, 4294901760
        %2265 = vmatpush1.msra.mxu0 %v2264
        %2266 = vmatprep.subr.mxu0 0.0
        %v2267 = vand.u32 %v1621, 4294901760
        %2268 = vmatpush1.msra.mxu0 %v2267
        %2269 = vmatprep.subr.mxu0 0.0
        %v2270 = vand.u32 %v1620, 4294901760
        %2271 = vmatpush1.msra.mxu0 %v2270
        %2272 = vmatprep.subr.mxu0 0.0
        %v2273 = vand.u32 %v1619, 4294901760
        %2274 = vmatpush1.msra.mxu0 %v2273
        %2275 = vmatprep.subr.mxu0 0.0
        %v2276 = vand.u32 %v1618, 4294901760
        %2277 = vmatpush1.msra.mxu0 %v2276
        %2278 = vmatprep.subr.mxu0 0.0
        %2279 = vmatpush2.msra.mxu0 0.0
        %2280 = vmatprep.subr.mxu0 0.0
        %2281 = vmatpush2.msra.mxu0 0.0
        %2282 = vmatprep.subr.mxu0 0.0
        %2283 = vmatpush2.msra.mxu0 0.0
        %2284 = vmatprep.subr.mxu0 0.0
        %2285 = vmatpush2.msra.mxu0 0.0
        %2286 = vmatprep.subr.mxu0 0.0
        %2287 = vmatpush2.msra.mxu0 0.0
        %2288 = vmatprep.subr.mxu0 0.0
        %2289 = vmatpush2.msra.mxu0 0.0
        %2290 = vmatprep.subr.mxu0 0.0
        %2291 = vmatpush2.msra.mxu0 0.0
        %2292 = vmatprep.subr.mxu0 0.0
        %2293 = vmatpush2.msra.mxu0 0.0
        %2294 = vmatprep.subr.mxu0 0.0
        %2295 = vmatpush2.msra.mxu0 0.0
        %2296 = vmatprep.subr.mxu0 0.0
        %2297 = vmatpush2.msra.mxu0 0.0
        %2298 = vmatprep.subr.mxu0 0.0
        %2299 = vmatpush2.msra.mxu0 0.0
        %2300 = vmatprep.subr.mxu0 0.0
        %2301 = vmatpush2.msra.mxu0 0.0
        %2302 = vmatprep.subr.mxu0 0.0
        %2303 = vmatpush2.msra.mxu0 0.0
        %2304 = vmatprep.subr.mxu0 0.0
        %2305 = vmatpush2.msra.mxu0 0.0
        %2306 = vmatprep.subr.mxu0 0.0
        %2307 = vmatpush2.msra.mxu0 0.0
        %2308 = vmatprep.subr.mxu0 0.0
        %2309 = vmatpush2.msra.mxu0 0.0
        %2310 = vmatprep.mubr.f32.mxu0 0.0
        %v2311 = vand.u32 %v1615, 4294901760
        %2312 = vmatmul.mubr.f32.gmra.mxu0 %v2311
        %v2313 = vpop.f32.mrf.mxu0
        %v2314 = vadd.f32 %v2221, %v2313
        %v2315 = vpop.f32.mrf.mxu0
        %2316 = vmatprep.mubr.f32.mxu0 0.0
        %v2317 = vand.u32 %v1616, 4294901760
        %2318 = vmatmul.mubr.f32.gmra.mxu0 %v2317
        %v2319 = vpop.f32.mrf.mxu0
        %v2320 = vadd.f32 %v2227, %v2319
        %v2321 = vpop.f32.mrf.mxu0
        %2322 = vdwg.mxu0
        %v2323 = vmul.f32 %v2314, 0.5
        %v2324 = vmul.f32 %v2320, 0.5
        %v2325 = vmul.f32 %v2323, 1.442695
        %v2326 = vpow.pop %v2325
        %v2327 = vmul.f32 %v2324, 1.442695
        %v2328 = vpow.pop %v2327
        %2331 = vrot.lane.b32.xlu0 %v2326, 126
        %v2332 = vpop.permute.xlu0 %2331
        %2333 = vrot.lane.b32.xlu0 %v2328, 126
        %v2334 = vpop.permute.xlu0 %2333
        %v2337 = vmul.f32 %v189, %v2332
        %v2338 = vmul.f32 %v190, %v2334
        %2341 = vrot.lane.b32.xlu0 %v2337, 126
        %v2342 = vpop.permute.xlu0 %2341
        %2343 = vrot.lane.b32.xlu0 %v2338, 126
        %v2344 = vpop.permute.xlu0 %2343
        %v2347 = vadd.f32 %v2314, %v2342
        %v2348 = vadd.f32 %v2320, %v2344
        %2351 = vrot.lane.b32.xlu0 %v2347, 124
        %v2352 = vpop.permute.xlu0 %2351
        %2353 = vrot.lane.b32.xlu0 %v2348, 124
        %v2354 = vpop.permute.xlu0 %2353
        %vm2357 = vcmask 31744
        %v2358 = vsel %vm2357, %v2352, 0.0
        %v2359 = vsel %vm2357, %v2354, 0.0
        %s2360 = scalar_lea.vmem [#allocation2], 384
        %v2361 = vld [vmem:[%s2360] sm:$0xff]
        %v2362 = vld [vmem:[%s2360 + $0x8] sm:$0xff]
        %v2363 = vld [vmem:[%s2360 + $0x10] sm:$0xff]
        %v2364 = vld [vmem:[%s2360 + $0x18] sm:$0xff]
        %v2365 = vld [vmem:[%s2360 + $0x20] sm:$0xff]
        %v2366 = vld [vmem:[%s2360 + $0x28] sm:$0xff]
        %v2367 = vld [vmem:[%s2360 + $0x30] sm:$0xff]
        %v2368 = vld [vmem:[%s2360 + $0x38] sm:$0xff]
        %v2369 = vld [vmem:[%s2360 + $0x40] sm:$0xff]
        %v2370 = vld [vmem:[%s2360 + $0x48] sm:$0xff]
        %v2371 = vld [vmem:[%s2360 + $0x50] sm:$0xff]
        %v2372 = vld [vmem:[%s2360 + $0x58] sm:$0xff]
        %v2373 = vld [vmem:[%s2360 + $0x60] sm:$0xff]
        %v2374 = vld [vmem:[%s2360 + $0x68] sm:$0xff]
        %v2375 = vld [vmem:[%s2360 + $0x70] sm:$0xff]
        %v2376 = vld [vmem:[%s2360 + $0x78] sm:$0xff]
        %v2377 = vld [vmem:[%s2 + $0x3] sm:$0x1]
        %v2378 = vlaneseq
        %v2379 = vshrl.u32 %v2378, 7
        %v2380 = vsub.s32 0, %v2379
        %v2381 = vrot.slane %v2377, %v2380
        %2382 = vmatprep.subr.mxu0 0.0
        %v2383 = vand.u32 %v2376, 4294901760
        %2384 = vmatpush1.msra.mxu0 %v2383
        %2385 = vmatprep.subr.mxu0 0.0
        %v2386 = vand.u32 %v2375, 4294901760
        %2387 = vmatpush1.msra.mxu0 %v2386
        %2388 = vmatprep.subr.mxu0 0.0
        %v2389 = vand.u32 %v2374, 4294901760
        %2390 = vmatpush1.msra.mxu0 %v2389
        %2391 = vmatprep.subr.mxu0 0.0
        %v2392 = vand.u32 %v2373, 4294901760
        %2393 = vmatpush1.msra.mxu0 %v2392
        %2394 = vmatprep.subr.mxu0 0.0
        %v2395 = vand.u32 %v2372, 4294901760
        %2396 = vmatpush1.msra.mxu0 %v2395
        %2397 = vmatprep.subr.mxu0 0.0
        %v2398 = vand.u32 %v2371, 4294901760
        %2399 = vmatpush1.msra.mxu0 %v2398
        %2400 = vmatprep.subr.mxu0 0.0
        %v2401 = vand.u32 %v2370, 4294901760
        %2402 = vmatpush1.msra.mxu0 %v2401
        %2403 = vmatprep.subr.mxu0 0.0
        %v2404 = vand.u32 %v2369, 4294901760
        %2405 = vmatpush1.msra.mxu0 %v2404
        %2406 = vmatprep.subr.mxu0 0.0
        %v2407 = vand.u32 %v2368, 4294901760
        %2408 = vmatpush1.msra.mxu0 %v2407
        %2409 = vmatprep.subr.mxu0 0.0
        %v2410 = vand.u32 %v2367, 4294901760
        %2411 = vmatpush1.msra.mxu0 %v2410
        %2412 = vmatprep.subr.mxu0 0.0
        %v2413 = vand.u32 %v2366, 4294901760
        %2414 = vmatpush1.msra.mxu0 %v2413
        %2415 = vmatprep.subr.mxu0 0.0
        %v2416 = vand.u32 %v2365, 4294901760
        %2417 = vmatpush1.msra.mxu0 %v2416
        %2418 = vmatprep.subr.mxu0 0.0
        %v2419 = vand.u32 %v2364, 4294901760
        %2420 = vmatpush1.msra.mxu0 %v2419
        %2421 = vmatprep.subr.mxu0 0.0
        %v2422 = vand.u32 %v2363, 4294901760
        %2423 = vmatpush1.msra.mxu0 %v2422
        %2424 = vmatprep.subr.mxu0 0.0
        %v2425 = vand.u32 %v2362, 4294901760
        %2426 = vmatpush1.msra.mxu0 %v2425
        %2427 = vmatprep.subr.mxu0 0.0
        %v2428 = vand.u32 %v2361, 4294901760
        %2429 = vmatpush1.msra.mxu0 %v2428
        %2430 = vmatprep.subr.mxu0 0.0
        %2431 = vmatpush2.msra.mxu0 0.0
        %2432 = vmatprep.subr.mxu0 0.0
        %2433 = vmatpush2.msra.mxu0 0.0
        %2434 = vmatprep.subr.mxu0 0.0
        %2435 = vmatpush2.msra.mxu0 0.0
        %2436 = vmatprep.subr.mxu0 0.0
        %2437 = vmatpush2.msra.mxu0 0.0
        %2438 = vmatprep.subr.mxu0 0.0
        %2439 = vmatpush2.msra.mxu0 0.0
        %2440 = vmatprep.subr.mxu0 0.0
        %2441 = vmatpush2.msra.mxu0 0.0
        %2442 = vmatprep.subr.mxu0 0.0
        %2443 = vmatpush2.msra.mxu0 0.0
        %2444 = vmatprep.subr.mxu0 0.0
        %2445 = vmatpush2.msra.mxu0 0.0
        %2446 = vmatprep.subr.mxu0 0.0
        %2447 = vmatpush2.msra.mxu0 0.0
        %2448 = vmatprep.subr.mxu0 0.0
        %2449 = vmatpush2.msra.mxu0 0.0
        %2450 = vmatprep.subr.mxu0 0.0
        %2451 = vmatpush2.msra.mxu0 0.0
        %2452 = vmatprep.subr.mxu0 0.0
        %2453 = vmatpush2.msra.mxu0 0.0
        %2454 = vmatprep.subr.mxu0 0.0
        %2455 = vmatpush2.msra.mxu0 0.0
        %2456 = vmatprep.subr.mxu0 0.0
        %2457 = vmatpush2.msra.mxu0 0.0
        %2458 = vmatprep.subr.mxu0 0.0
        %2459 = vmatpush2.msra.mxu0 0.0
        %2460 = vmatprep.subr.mxu0 0.0
        %2461 = vmatpush2.msra.mxu0 0.0
        %2462 = vmatprep.mubr.f32.mxu0 0.0
        %v2463 = vand.u32 %v2358, 4294901760
        %v2464 = vsub.f32 %v2358, %v2463
        %v2465 = vand.u32 %v2464, 4294901760
        %v2466 = vsub.f32 %v2464, %v2465
        %v2467 = vand.u32 %v2466, 4294901760
        %2468 = vmatmul.mubr.f32.gmra.mxu0 %v2467
        %v2469 = vpop.f32.mrf.mxu0
        %v2470 = vadd.f32 %v2381, %v2469
        %v2471 = vpop.f32.mrf.mxu0
        %2472 = vmatprep.mubr.f32.mxu0 0.0
        %v2473 = vand.u32 %v2359, 4294901760
        %v2474 = vsub.f32 %v2359, %v2473
        %v2475 = vand.u32 %v2474, 4294901760
        %v2476 = vsub.f32 %v2474, %v2475
        %v2477 = vand.u32 %v2476, 4294901760
        %2478 = vmatmul.mubr.f32.gmra.mxu0 %v2477
        %v2479 = vpop.f32.mrf.mxu0
        %v2480 = vadd.f32 %v2381, %v2479
        %v2481 = vpop.f32.mrf.mxu0
        %2482 = vdwg.mxu0
        %2483 = vmatprep.subr.mxu0 0.0
        %v2484 = vand.u32 %v2376, 4294901760
        %v2485 = vsub.f32 %v2376, %v2484
        %v2486 = vand.u32 %v2485, 4294901760
        %v2487 = vsub.f32 %v2485, %v2486
        %v2488 = vand.u32 %v2487, 4294901760
        %2489 = vmatpush1.msra.mxu0 %v2488
        %2490 = vmatprep.subr.mxu0 0.0
        %v2491 = vand.u32 %v2375, 4294901760
        %v2492 = vsub.f32 %v2375, %v2491
        %v2493 = vand.u32 %v2492, 4294901760
        %v2494 = vsub.f32 %v2492, %v2493
        %v2495 = vand.u32 %v2494, 4294901760
        %2496 = vmatpush1.msra.mxu0 %v2495
        %2497 = vmatprep.subr.mxu0 0.0
        %v2498 = vand.u32 %v2374, 4294901760
        %v2499 = vsub.f32 %v2374, %v2498
        %v2500 = vand.u32 %v2499, 4294901760
        %v2501 = vsub.f32 %v2499, %v2500
        %v2502 = vand.u32 %v2501, 4294901760
        %2503 = vmatpush1.msra.mxu0 %v2502
        %2504 = vmatprep.subr.mxu0 0.0
        %v2505 = vand.u32 %v2373, 4294901760
        %v2506 = vsub.f32 %v2373, %v2505
        %v2507 = vand.u32 %v2506, 4294901760
        %v2508 = vsub.f32 %v2506, %v2507
        %v2509 = vand.u32 %v2508, 4294901760
        %2510 = vmatpush1.msra.mxu0 %v2509
        %2511 = vmatprep.subr.mxu0 0.0
        %v2512 = vand.u32 %v2372, 4294901760
        %v2513 = vsub.f32 %v2372, %v2512
        %v2514 = vand.u32 %v2513, 4294901760
        %v2515 = vsub.f32 %v2513, %v2514
        %v2516 = vand.u32 %v2515, 4294901760
        %2517 = vmatpush1.msra.mxu0 %v2516
        %2518 = vmatprep.subr.mxu0 0.0
        %v2519 = vand.u32 %v2371, 4294901760
        %v2520 = vsub.f32 %v2371, %v2519
        %v2521 = vand.u32 %v2520, 4294901760
        %v2522 = vsub.f32 %v2520, %v2521
        %v2523 = vand.u32 %v2522, 4294901760
        %2524 = vmatpush1.msra.mxu0 %v2523
        %2525 = vmatprep.subr.mxu0 0.0
        %v2526 = vand.u32 %v2370, 4294901760
        %v2527 = vsub.f32 %v2370, %v2526
        %v2528 = vand.u32 %v2527, 4294901760
        %v2529 = vsub.f32 %v2527, %v2528
        %v2530 = vand.u32 %v2529, 4294901760
        %2531 = vmatpush1.msra.mxu0 %v2530
        %2532 = vmatprep.subr.mxu0 0.0
        %v2533 = vand.u32 %v2369, 4294901760
        %v2534 = vsub.f32 %v2369, %v2533
        %v2535 = vand.u32 %v2534, 4294901760
        %v2536 = vsub.f32 %v2534, %v2535
        %v2537 = vand.u32 %v2536, 4294901760
        %2538 = vmatpush1.msra.mxu0 %v2537
        %2539 = vmatprep.subr.mxu0 0.0
        %v2540 = vand.u32 %v2368, 4294901760
        %v2541 = vsub.f32 %v2368, %v2540
        %v2542 = vand.u32 %v2541, 4294901760
        %v2543 = vsub.f32 %v2541, %v2542
        %v2544 = vand.u32 %v2543, 4294901760
        %2545 = vmatpush1.msra.mxu0 %v2544
        %2546 = vmatprep.subr.mxu0 0.0
        %v2547 = vand.u32 %v2367, 4294901760
        %v2548 = vsub.f32 %v2367, %v2547
        %v2549 = vand.u32 %v2548, 4294901760
        %v2550 = vsub.f32 %v2548, %v2549
        %v2551 = vand.u32 %v2550, 4294901760
        %2552 = vmatpush1.msra.mxu0 %v2551
        %2553 = vmatprep.subr.mxu0 0.0
        %v2554 = vand.u32 %v2366, 4294901760
        %v2555 = vsub.f32 %v2366, %v2554
        %v2556 = vand.u32 %v2555, 4294901760
        %v2557 = vsub.f32 %v2555, %v2556
        %v2558 = vand.u32 %v2557, 4294901760
        %2559 = vmatpush1.msra.mxu0 %v2558
        %2560 = vmatprep.subr.mxu0 0.0
        %v2561 = vand.u32 %v2365, 4294901760
        %v2562 = vsub.f32 %v2365, %v2561
        %v2563 = vand.u32 %v2562, 4294901760
        %v2564 = vsub.f32 %v2562, %v2563
        %v2565 = vand.u32 %v2564, 4294901760
        %2566 = vmatpush1.msra.mxu0 %v2565
        %2567 = vmatprep.subr.mxu0 0.0
        %v2568 = vand.u32 %v2364, 4294901760
        %v2569 = vsub.f32 %v2364, %v2568
        %v2570 = vand.u32 %v2569, 4294901760
        %v2571 = vsub.f32 %v2569, %v2570
        %v2572 = vand.u32 %v2571, 4294901760
        %2573 = vmatpush1.msra.mxu0 %v2572
        %2574 = vmatprep.subr.mxu0 0.0
        %v2575 = vand.u32 %v2363, 4294901760
        %v2576 = vsub.f32 %v2363, %v2575
        %v2577 = vand.u32 %v2576, 4294901760
        %v2578 = vsub.f32 %v2576, %v2577
        %v2579 = vand.u32 %v2578, 4294901760
        %2580 = vmatpush1.msra.mxu0 %v2579
        %2581 = vmatprep.subr.mxu0 0.0
        %v2582 = vand.u32 %v2362, 4294901760
        %v2583 = vsub.f32 %v2362, %v2582
        %v2584 = vand.u32 %v2583, 4294901760
        %v2585 = vsub.f32 %v2583, %v2584
        %v2586 = vand.u32 %v2585, 4294901760
        %2587 = vmatpush1.msra.mxu0 %v2586
        %2588 = vmatprep.subr.mxu0 0.0
        %v2589 = vand.u32 %v2361, 4294901760
        %v2590 = vsub.f32 %v2361, %v2589
        %v2591 = vand.u32 %v2590, 4294901760
        %v2592 = vsub.f32 %v2590, %v2591
        %v2593 = vand.u32 %v2592, 4294901760
        %2594 = vmatpush1.msra.mxu0 %v2593
        %2595 = vmatprep.subr.mxu0 0.0
        %2596 = vmatpush2.msra.mxu0 0.0
        %2597 = vmatprep.subr.mxu0 0.0
        %2598 = vmatpush2.msra.mxu0 0.0
        %2599 = vmatprep.subr.mxu0 0.0
        %2600 = vmatpush2.msra.mxu0 0.0
        %2601 = vmatprep.subr.mxu0 0.0
        %2602 = vmatpush2.msra.mxu0 0.0
        %2603 = vmatprep.subr.mxu0 0.0
        %2604 = vmatpush2.msra.mxu0 0.0
        %2605 = vmatprep.subr.mxu0 0.0
        %2606 = vmatpush2.msra.mxu0 0.0
        %2607 = vmatprep.subr.mxu0 0.0
        %2608 = vmatpush2.msra.mxu0 0.0
        %2609 = vmatprep.subr.mxu0 0.0
        %2610 = vmatpush2.msra.mxu0 0.0
        %2611 = vmatprep.subr.mxu0 0.0
        %2612 = vmatpush2.msra.mxu0 0.0
        %2613 = vmatprep.subr.mxu0 0.0
        %2614 = vmatpush2.msra.mxu0 0.0
        %2615 = vmatprep.subr.mxu0 0.0
        %2616 = vmatpush2.msra.mxu0 0.0
        %2617 = vmatprep.subr.mxu0 0.0
        %2618 = vmatpush2.msra.mxu0 0.0
        %2619 = vmatprep.subr.mxu0 0.0
        %2620 = vmatpush2.msra.mxu0 0.0
        %2621 = vmatprep.subr.mxu0 0.0
        %2622 = vmatpush2.msra.mxu0 0.0
        %2623 = vmatprep.subr.mxu0 0.0
        %2624 = vmatpush2.msra.mxu0 0.0
        %2625 = vmatprep.subr.mxu0 0.0
        %2626 = vmatpush2.msra.mxu0 0.0
        %2627 = vmatprep.mubr.f32.mxu0 0.0
        %v2628 = vand.u32 %v2358, 4294901760
        %2629 = vmatmul.mubr.f32.gmra.mxu0 %v2628
        %v2630 = vpop.f32.mrf.mxu0
        %v2631 = vadd.f32 %v2470, %v2630
        %v2632 = vpop.f32.mrf.mxu0
        %2633 = vmatprep.mubr.f32.mxu0 0.0
        %v2634 = vand.u32 %v2359, 4294901760
        %2635 = vmatmul.mubr.f32.gmra.mxu0 %v2634
        %v2636 = vpop.f32.mrf.mxu0
        %v2637 = vadd.f32 %v2480, %v2636
        %v2638 = vpop.f32.mrf.mxu0
        %2639 = vdwg.mxu0
        %2640 = vmatprep.subr.mxu0 0.0
        %v2641 = vand.u32 %v2376, 4294901760
        %v2642 = vsub.f32 %v2376, %v2641
        %2643 = vmatpush1.msra.mxu0 %v2642
        %2644 = vmatprep.subr.mxu0 0.0
        %v2645 = vand.u32 %v2375, 4294901760
        %v2646 = vsub.f32 %v2375, %v2645
        %2647 = vmatpush1.msra.mxu0 %v2646
        %2648 = vmatprep.subr.mxu0 0.0
        %v2649 = vand.u32 %v2374, 4294901760
        %v2650 = vsub.f32 %v2374, %v2649
        %2651 = vmatpush1.msra.mxu0 %v2650
        %2652 = vmatprep.subr.mxu0 0.0
        %v2653 = vand.u32 %v2373, 4294901760
        %v2654 = vsub.f32 %v2373, %v2653
        %2655 = vmatpush1.msra.mxu0 %v2654
        %2656 = vmatprep.subr.mxu0 0.0
        %v2657 = vand.u32 %v2372, 4294901760
        %v2658 = vsub.f32 %v2372, %v2657
        %2659 = vmatpush1.msra.mxu0 %v2658
        %2660 = vmatprep.subr.mxu0 0.0
        %v2661 = vand.u32 %v2371, 4294901760
        %v2662 = vsub.f32 %v2371, %v2661
        %2663 = vmatpush1.msra.mxu0 %v2662
        %2664 = vmatprep.subr.mxu0 0.0
        %v2665 = vand.u32 %v2370, 4294901760
        %v2666 = vsub.f32 %v2370, %v2665
        %2667 = vmatpush1.msra.mxu0 %v2666
        %2668 = vmatprep.subr.mxu0 0.0
        %v2669 = vand.u32 %v2369, 4294901760
        %v2670 = vsub.f32 %v2369, %v2669
        %2671 = vmatpush1.msra.mxu0 %v2670
        %2672 = vmatprep.subr.mxu0 0.0
        %v2673 = vand.u32 %v2368, 4294901760
        %v2674 = vsub.f32 %v2368, %v2673
        %2675 = vmatpush1.msra.mxu0 %v2674
        %2676 = vmatprep.subr.mxu0 0.0
        %v2677 = vand.u32 %v2367, 4294901760
        %v2678 = vsub.f32 %v2367, %v2677
        %2679 = vmatpush1.msra.mxu0 %v2678
        %2680 = vmatprep.subr.mxu0 0.0
        %v2681 = vand.u32 %v2366, 4294901760
        %v2682 = vsub.f32 %v2366, %v2681
        %2683 = vmatpush1.msra.mxu0 %v2682
        %2684 = vmatprep.subr.mxu0 0.0
        %v2685 = vand.u32 %v2365, 4294901760
        %v2686 = vsub.f32 %v2365, %v2685
        %2687 = vmatpush1.msra.mxu0 %v2686
        %2688 = vmatprep.subr.mxu0 0.0
        %v2689 = vand.u32 %v2364, 4294901760
        %v2690 = vsub.f32 %v2364, %v2689
        %2691 = vmatpush1.msra.mxu0 %v2690
        %2692 = vmatprep.subr.mxu0 0.0
        %v2693 = vand.u32 %v2363, 4294901760
        %v2694 = vsub.f32 %v2363, %v2693
        %2695 = vmatpush1.msra.mxu0 %v2694
        %2696 = vmatprep.subr.mxu0 0.0
        %v2697 = vand.u32 %v2362, 4294901760
        %v2698 = vsub.f32 %v2362, %v2697
        %2699 = vmatpush1.msra.mxu0 %v2698
        %2700 = vmatprep.subr.mxu0 0.0
        %v2701 = vand.u32 %v2361, 4294901760
        %v2702 = vsub.f32 %v2361, %v2701
        %2703 = vmatpush1.msra.mxu0 %v2702
        %2704 = vmatprep.subr.mxu0 0.0
        %2705 = vmatpush2.msra.mxu0 0.0
        %2706 = vmatprep.subr.mxu0 0.0
        %2707 = vmatpush2.msra.mxu0 0.0
        %2708 = vmatprep.subr.mxu0 0.0
        %2709 = vmatpush2.msra.mxu0 0.0
        %2710 = vmatprep.subr.mxu0 0.0
        %2711 = vmatpush2.msra.mxu0 0.0
        %2712 = vmatprep.subr.mxu0 0.0
        %2713 = vmatpush2.msra.mxu0 0.0
        %2714 = vmatprep.subr.mxu0 0.0
        %2715 = vmatpush2.msra.mxu0 0.0
        %2716 = vmatprep.subr.mxu0 0.0
        %2717 = vmatpush2.msra.mxu0 0.0
        %2718 = vmatprep.subr.mxu0 0.0
        %2719 = vmatpush2.msra.mxu0 0.0
        %2720 = vmatprep.subr.mxu0 0.0
        %2721 = vmatpush2.msra.mxu0 0.0
        %2722 = vmatprep.subr.mxu0 0.0
        %2723 = vmatpush2.msra.mxu0 0.0
        %2724 = vmatprep.subr.mxu0 0.0
        %2725 = vmatpush2.msra.mxu0 0.0
        %2726 = vmatprep.subr.mxu0 0.0
        %2727 = vmatpush2.msra.mxu0 0.0
        %2728 = vmatprep.subr.mxu0 0.0
        %2729 = vmatpush2.msra.mxu0 0.0
        %2730 = vmatprep.subr.mxu0 0.0
        %2731 = vmatpush2.msra.mxu0 0.0
        %2732 = vmatprep.subr.mxu0 0.0
        %2733 = vmatpush2.msra.mxu0 0.0
        %2734 = vmatprep.subr.mxu0 0.0
        %2735 = vmatpush2.msra.mxu0 0.0
        %2736 = vmatprep.mubr.f32.mxu0 0.0
        %v2737 = vand.u32 %v2358, 4294901760
        %v2738 = vsub.f32 %v2358, %v2737
        %2739 = vmatmul.mubr.f32.gmra.mxu0 %v2738
        %v2740 = vpop.f32.mrf.mxu0
        %v2741 = vadd.f32 %v2631, %v2740
        %v2742 = vpop.f32.mrf.mxu0
        %2743 = vmatprep.mubr.f32.mxu0 0.0
        %v2744 = vand.u32 %v2359, 4294901760
        %v2745 = vsub.f32 %v2359, %v2744
        %2746 = vmatmul.mubr.f32.gmra.mxu0 %v2745
        %v2747 = vpop.f32.mrf.mxu0
        %v2748 = vadd.f32 %v2637, %v2747
        %v2749 = vpop.f32.mrf.mxu0
        %2750 = vdwg.mxu0
        %2751 = vmatprep.subr.mxu0 0.0
        %v2752 = vand.u32 %v2376, 4294901760
        %2753 = vmatpush1.msra.mxu0 %v2752
        %2754 = vmatprep.subr.mxu0 0.0
        %v2755 = vand.u32 %v2375, 4294901760
        %2756 = vmatpush1.msra.mxu0 %v2755
        %2757 = vmatprep.subr.mxu0 0.0
        %v2758 = vand.u32 %v2374, 4294901760
        %2759 = vmatpush1.msra.mxu0 %v2758
        %2760 = vmatprep.subr.mxu0 0.0
        %v2761 = vand.u32 %v2373, 4294901760
        %2762 = vmatpush1.msra.mxu0 %v2761
        %2763 = vmatprep.subr.mxu0 0.0
        %v2764 = vand.u32 %v2372, 4294901760
        %2765 = vmatpush1.msra.mxu0 %v2764
        %2766 = vmatprep.subr.mxu0 0.0
        %v2767 = vand.u32 %v2371, 4294901760
        %2768 = vmatpush1.msra.mxu0 %v2767
        %2769 = vmatprep.subr.mxu0 0.0
        %v2770 = vand.u32 %v2370, 4294901760
        %2771 = vmatpush1.msra.mxu0 %v2770
        %2772 = vmatprep.subr.mxu0 0.0
        %v2773 = vand.u32 %v2369, 4294901760
        %2774 = vmatpush1.msra.mxu0 %v2773
        %2775 = vmatprep.subr.mxu0 0.0
        %v2776 = vand.u32 %v2368, 4294901760
        %2777 = vmatpush1.msra.mxu0 %v2776
        %2778 = vmatprep.subr.mxu0 0.0
        %v2779 = vand.u32 %v2367, 4294901760
        %2780 = vmatpush1.msra.mxu0 %v2779
        %2781 = vmatprep.subr.mxu0 0.0
        %v2782 = vand.u32 %v2366, 4294901760
        %2783 = vmatpush1.msra.mxu0 %v2782
        %2784 = vmatprep.subr.mxu0 0.0
        %v2785 = vand.u32 %v2365, 4294901760
        %2786 = vmatpush1.msra.mxu0 %v2785
        %2787 = vmatprep.subr.mxu0 0.0
        %v2788 = vand.u32 %v2364, 4294901760
        %2789 = vmatpush1.msra.mxu0 %v2788
        %2790 = vmatprep.subr.mxu0 0.0
        %v2791 = vand.u32 %v2363, 4294901760
        %2792 = vmatpush1.msra.mxu0 %v2791
        %2793 = vmatprep.subr.mxu0 0.0
        %v2794 = vand.u32 %v2362, 4294901760
        %2795 = vmatpush1.msra.mxu0 %v2794
        %2796 = vmatprep.subr.mxu0 0.0
        %v2797 = vand.u32 %v2361, 4294901760
        %2798 = vmatpush1.msra.mxu0 %v2797
        %2799 = vmatprep.subr.mxu0 0.0
        %2800 = vmatpush2.msra.mxu0 0.0
        %2801 = vmatprep.subr.mxu0 0.0
        %2802 = vmatpush2.msra.mxu0 0.0
        %2803 = vmatprep.subr.mxu0 0.0
        %2804 = vmatpush2.msra.mxu0 0.0
        %2805 = vmatprep.subr.mxu0 0.0
        %2806 = vmatpush2.msra.mxu0 0.0
        %2807 = vmatprep.subr.mxu0 0.0
        %2808 = vmatpush2.msra.mxu0 0.0
        %2809 = vmatprep.subr.mxu0 0.0
        %2810 = vmatpush2.msra.mxu0 0.0
        %2811 = vmatprep.subr.mxu0 0.0
        %2812 = vmatpush2.msra.mxu0 0.0
        %2813 = vmatprep.subr.mxu0 0.0
        %2814 = vmatpush2.msra.mxu0 0.0
        %2815 = vmatprep.subr.mxu0 0.0
        %2816 = vmatpush2.msra.mxu0 0.0
        %2817 = vmatprep.subr.mxu0 0.0
        %2818 = vmatpush2.msra.mxu0 0.0
        %2819 = vmatprep.subr.mxu0 0.0
        %2820 = vmatpush2.msra.mxu0 0.0
        %2821 = vmatprep.subr.mxu0 0.0
        %2822 = vmatpush2.msra.mxu0 0.0
        %2823 = vmatprep.subr.mxu0 0.0
        %2824 = vmatpush2.msra.mxu0 0.0
        %2825 = vmatprep.subr.mxu0 0.0
        %2826 = vmatpush2.msra.mxu0 0.0
        %2827 = vmatprep.subr.mxu0 0.0
        %2828 = vmatpush2.msra.mxu0 0.0
        %2829 = vmatprep.subr.mxu0 0.0
        %2830 = vmatpush2.msra.mxu0 0.0
        %2831 = vmatprep.mubr.f32.mxu0 0.0
        %v2832 = vand.u32 %v2358, 4294901760
        %v2833 = vsub.f32 %v2358, %v2832
        %v2834 = vand.u32 %v2833, 4294901760
        %2835 = vmatmul.mubr.f32.gmra.mxu0 %v2834
        %v2836 = vpop.f32.mrf.mxu0
        %v2837 = vadd.f32 %v2741, %v2836
        %v2838 = vpop.f32.mrf.mxu0
        %2839 = vmatprep.mubr.f32.mxu0 0.0
        %v2840 = vand.u32 %v2359, 4294901760
        %v2841 = vsub.f32 %v2359, %v2840
        %v2842 = vand.u32 %v2841, 4294901760
        %2843 = vmatmul.mubr.f32.gmra.mxu0 %v2842
        %v2844 = vpop.f32.mrf.mxu0
        %v2845 = vadd.f32 %v2748, %v2844
        %v2846 = vpop.f32.mrf.mxu0
        %2847 = vdwg.mxu0
        %2848 = vmatprep.subr.mxu0 0.0
        %v2849 = vand.u32 %v2376, 4294901760
        %v2850 = vsub.f32 %v2376, %v2849
        %v2851 = vand.u32 %v2850, 4294901760
        %2852 = vmatpush1.msra.mxu0 %v2851
        %2853 = vmatprep.subr.mxu0 0.0
        %v2854 = vand.u32 %v2375, 4294901760
        %v2855 = vsub.f32 %v2375, %v2854
        %v2856 = vand.u32 %v2855, 4294901760
        %2857 = vmatpush1.msra.mxu0 %v2856
        %2858 = vmatprep.subr.mxu0 0.0
        %v2859 = vand.u32 %v2374, 4294901760
        %v2860 = vsub.f32 %v2374, %v2859
        %v2861 = vand.u32 %v2860, 4294901760
        %2862 = vmatpush1.msra.mxu0 %v2861
        %2863 = vmatprep.subr.mxu0 0.0
        %v2864 = vand.u32 %v2373, 4294901760
        %v2865 = vsub.f32 %v2373, %v2864
        %v2866 = vand.u32 %v2865, 4294901760
        %2867 = vmatpush1.msra.mxu0 %v2866
        %2868 = vmatprep.subr.mxu0 0.0
        %v2869 = vand.u32 %v2372, 4294901760
        %v2870 = vsub.f32 %v2372, %v2869
        %v2871 = vand.u32 %v2870, 4294901760
        %2872 = vmatpush1.msra.mxu0 %v2871
        %2873 = vmatprep.subr.mxu0 0.0
        %v2874 = vand.u32 %v2371, 4294901760
        %v2875 = vsub.f32 %v2371, %v2874
        %v2876 = vand.u32 %v2875, 4294901760
        %2877 = vmatpush1.msra.mxu0 %v2876
        %2878 = vmatprep.subr.mxu0 0.0
        %v2879 = vand.u32 %v2370, 4294901760
        %v2880 = vsub.f32 %v2370, %v2879
        %v2881 = vand.u32 %v2880, 4294901760
        %2882 = vmatpush1.msra.mxu0 %v2881
        %2883 = vmatprep.subr.mxu0 0.0
        %v2884 = vand.u32 %v2369, 4294901760
        %v2885 = vsub.f32 %v2369, %v2884
        %v2886 = vand.u32 %v2885, 4294901760
        %2887 = vmatpush1.msra.mxu0 %v2886
        %2888 = vmatprep.subr.mxu0 0.0
        %v2889 = vand.u32 %v2368, 4294901760
        %v2890 = vsub.f32 %v2368, %v2889
        %v2891 = vand.u32 %v2890, 4294901760
        %2892 = vmatpush1.msra.mxu0 %v2891
        %2893 = vmatprep.subr.mxu0 0.0
        %v2894 = vand.u32 %v2367, 4294901760
        %v2895 = vsub.f32 %v2367, %v2894
        %v2896 = vand.u32 %v2895, 4294901760
        %2897 = vmatpush1.msra.mxu0 %v2896
        %2898 = vmatprep.subr.mxu0 0.0
        %v2899 = vand.u32 %v2366, 4294901760
        %v2900 = vsub.f32 %v2366, %v2899
        %v2901 = vand.u32 %v2900, 4294901760
        %2902 = vmatpush1.msra.mxu0 %v2901
        %2903 = vmatprep.subr.mxu0 0.0
        %v2904 = vand.u32 %v2365, 4294901760
        %v2905 = vsub.f32 %v2365, %v2904
        %v2906 = vand.u32 %v2905, 4294901760
        %2907 = vmatpush1.msra.mxu0 %v2906
        %2908 = vmatprep.subr.mxu0 0.0
        %v2909 = vand.u32 %v2364, 4294901760
        %v2910 = vsub.f32 %v2364, %v2909
        %v2911 = vand.u32 %v2910, 4294901760
        %2912 = vmatpush1.msra.mxu0 %v2911
        %2913 = vmatprep.subr.mxu0 0.0
        %v2914 = vand.u32 %v2363, 4294901760
        %v2915 = vsub.f32 %v2363, %v2914
        %v2916 = vand.u32 %v2915, 4294901760
        %2917 = vmatpush1.msra.mxu0 %v2916
        %2918 = vmatprep.subr.mxu0 0.0
        %v2919 = vand.u32 %v2362, 4294901760
        %v2920 = vsub.f32 %v2362, %v2919
        %v2921 = vand.u32 %v2920, 4294901760
        %2922 = vmatpush1.msra.mxu0 %v2921
        %2923 = vmatprep.subr.mxu0 0.0
        %v2924 = vand.u32 %v2361, 4294901760
        %v2925 = vsub.f32 %v2361, %v2924
        %v2926 = vand.u32 %v2925, 4294901760
        %2927 = vmatpush1.msra.mxu0 %v2926
        %2928 = vmatprep.subr.mxu0 0.0
        %2929 = vmatpush2.msra.mxu0 0.0
        %2930 = vmatprep.subr.mxu0 0.0
        %2931 = vmatpush2.msra.mxu0 0.0
        %2932 = vmatprep.subr.mxu0 0.0
        %2933 = vmatpush2.msra.mxu0 0.0
        %2934 = vmatprep.subr.mxu0 0.0
        %2935 = vmatpush2.msra.mxu0 0.0
        %2936 = vmatprep.subr.mxu0 0.0
        %2937 = vmatpush2.msra.mxu0 0.0
        %2938 = vmatprep.subr.mxu0 0.0
        %2939 = vmatpush2.msra.mxu0 0.0
        %2940 = vmatprep.subr.mxu0 0.0
        %2941 = vmatpush2.msra.mxu0 0.0
        %2942 = vmatprep.subr.mxu0 0.0
        %2943 = vmatpush2.msra.mxu0 0.0
        %2944 = vmatprep.subr.mxu0 0.0
        %2945 = vmatpush2.msra.mxu0 0.0
        %2946 = vmatprep.subr.mxu0 0.0
        %2947 = vmatpush2.msra.mxu0 0.0
        %2948 = vmatprep.subr.mxu0 0.0
        %2949 = vmatpush2.msra.mxu0 0.0
        %2950 = vmatprep.subr.mxu0 0.0
        %2951 = vmatpush2.msra.mxu0 0.0
        %2952 = vmatprep.subr.mxu0 0.0
        %2953 = vmatpush2.msra.mxu0 0.0
        %2954 = vmatprep.subr.mxu0 0.0
        %2955 = vmatpush2.msra.mxu0 0.0
        %2956 = vmatprep.subr.mxu0 0.0
        %2957 = vmatpush2.msra.mxu0 0.0
        %2958 = vmatprep.subr.mxu0 0.0
        %2959 = vmatpush2.msra.mxu0 0.0
        %2960 = vmatprep.mubr.f32.mxu0 0.0
        %v2961 = vand.u32 %v2358, 4294901760
        %2962 = vmatmul.mubr.f32.gmra.mxu0 %v2961
        %v2963 = vpop.f32.mrf.mxu0
        %v2964 = vadd.f32 %v2837, %v2963
        %v2965 = vpop.f32.mrf.mxu0
        %2966 = vmatprep.mubr.f32.mxu0 0.0
        %v2967 = vand.u32 %v2359, 4294901760
        %2968 = vmatmul.mubr.f32.gmra.mxu0 %v2967
        %v2969 = vpop.f32.mrf.mxu0
        %v2970 = vadd.f32 %v2845, %v2969
        %v2971 = vpop.f32.mrf.mxu0
        %2972 = vdwg.mxu0
        %2973 = vmatprep.subr.mxu0 0.0
        %v2974 = vand.u32 %v2376, 4294901760
        %2975 = vmatpush1.msra.mxu0 %v2974
        %2976 = vmatprep.subr.mxu0 0.0
        %v2977 = vand.u32 %v2375, 4294901760
        %2978 = vmatpush1.msra.mxu0 %v2977
        %2979 = vmatprep.subr.mxu0 0.0
        %v2980 = vand.u32 %v2374, 4294901760
        %2981 = vmatpush1.msra.mxu0 %v2980
        %2982 = vmatprep.subr.mxu0 0.0
        %v2983 = vand.u32 %v2373, 4294901760
        %2984 = vmatpush1.msra.mxu0 %v2983
        %2985 = vmatprep.subr.mxu0 0.0
        %v2986 = vand.u32 %v2372, 4294901760
        %2987 = vmatpush1.msra.mxu0 %v2986
        %2988 = vmatprep.subr.mxu0 0.0
        %v2989 = vand.u32 %v2371, 4294901760
        %2990 = vmatpush1.msra.mxu0 %v2989
        %2991 = vmatprep.subr.mxu0 0.0
        %v2992 = vand.u32 %v2370, 4294901760
        %2993 = vmatpush1.msra.mxu0 %v2992
        %2994 = vmatprep.subr.mxu0 0.0
        %v2995 = vand.u32 %v2369, 4294901760
        %2996 = vmatpush1.msra.mxu0 %v2995
        %2997 = vmatprep.subr.mxu0 0.0
        %v2998 = vand.u32 %v2368, 4294901760
        %2999 = vmatpush1.msra.mxu0 %v2998
        %3000 = vmatprep.subr.mxu0 0.0
        %v3001 = vand.u32 %v2367, 4294901760
        %3002 = vmatpush1.msra.mxu0 %v3001
        %3003 = vmatprep.subr.mxu0 0.0
        %v3004 = vand.u32 %v2366, 4294901760
        %3005 = vmatpush1.msra.mxu0 %v3004
        %3006 = vmatprep.subr.mxu0 0.0
        %v3007 = vand.u32 %v2365, 4294901760
        %3008 = vmatpush1.msra.mxu0 %v3007
        %3009 = vmatprep.subr.mxu0 0.0
        %v3010 = vand.u32 %v2364, 4294901760
        %3011 = vmatpush1.msra.mxu0 %v3010
        %3012 = vmatprep.subr.mxu0 0.0
        %v3013 = vand.u32 %v2363, 4294901760
        %3014 = vmatpush1.msra.mxu0 %v3013
        %3015 = vmatprep.subr.mxu0 0.0
        %v3016 = vand.u32 %v2362, 4294901760
        %3017 = vmatpush1.msra.mxu0 %v3016
        %3018 = vmatprep.subr.mxu0 0.0
        %v3019 = vand.u32 %v2361, 4294901760
        %3020 = vmatpush1.msra.mxu0 %v3019
        %3021 = vmatprep.subr.mxu0 0.0
        %3022 = vmatpush2.msra.mxu0 0.0
        %3023 = vmatprep.subr.mxu0 0.0
        %3024 = vmatpush2.msra.mxu0 0.0
        %3025 = vmatprep.subr.mxu0 0.0
        %3026 = vmatpush2.msra.mxu0 0.0
        %3027 = vmatprep.subr.mxu0 0.0
        %3028 = vmatpush2.msra.mxu0 0.0
        %3029 = vmatprep.subr.mxu0 0.0
        %3030 = vmatpush2.msra.mxu0 0.0
        %3031 = vmatprep.subr.mxu0 0.0
        %3032 = vmatpush2.msra.mxu0 0.0
        %3033 = vmatprep.subr.mxu0 0.0
        %3034 = vmatpush2.msra.mxu0 0.0
        %3035 = vmatprep.subr.mxu0 0.0
        %3036 = vmatpush2.msra.mxu0 0.0
        %3037 = vmatprep.subr.mxu0 0.0
        %3038 = vmatpush2.msra.mxu0 0.0
        %3039 = vmatprep.subr.mxu0 0.0
        %3040 = vmatpush2.msra.mxu0 0.0
        %3041 = vmatprep.subr.mxu0 0.0
        %3042 = vmatpush2.msra.mxu0 0.0
        %3043 = vmatprep.subr.mxu0 0.0
        %3044 = vmatpush2.msra.mxu0 0.0
        %3045 = vmatprep.subr.mxu0 0.0
        %3046 = vmatpush2.msra.mxu0 0.0
        %3047 = vmatprep.subr.mxu0 0.0
        %3048 = vmatpush2.msra.mxu0 0.0
        %3049 = vmatprep.subr.mxu0 0.0
        %3050 = vmatpush2.msra.mxu0 0.0
        %3051 = vmatprep.subr.mxu0 0.0
        %3052 = vmatpush2.msra.mxu0 0.0
        %3053 = vmatprep.mubr.f32.mxu0 0.0
        %v3054 = vand.u32 %v2358, 4294901760
        %3055 = vmatmul.mubr.f32.gmra.mxu0 %v3054
        %v3056 = vpop.f32.mrf.mxu0
        %v3057 = vadd.f32 %v2964, %v3056
        %v3058 = vpop.f32.mrf.mxu0
        %3059 = vmatprep.mubr.f32.mxu0 0.0
        %v3060 = vand.u32 %v2359, 4294901760
        %3061 = vmatmul.mubr.f32.gmra.mxu0 %v3060
        %v3062 = vpop.f32.mrf.mxu0
        %v3063 = vadd.f32 %v2970, %v3062
        %v3064 = vpop.f32.mrf.mxu0
        %3065 = vdwg.mxu0
        %v3066 = vmax.f32 %v3057, 0.0
        %v3067 = vmax.f32 %v3063, 0.0
        %s3068 = scalar_lea.vmem [#allocation2], 512
        %v3069 = vld [vmem:[%s3068] sm:$0xff]
        %v3070 = vld [vmem:[%s3068 + $0x8] sm:$0xff]
        %v3071 = vld [vmem:[%s3068 + $0x10] sm:$0xff]
        %v3072 = vld [vmem:[%s3068 + $0x18] sm:$0xff]
        %v3073 = vld [vmem:[%s3068 + $0x20] sm:$0xff]
        %v3074 = vld [vmem:[%s3068 + $0x28] sm:$0xff]
        %v3075 = vld [vmem:[%s3068 + $0x30] sm:$0xff]
        %v3076 = vld [vmem:[%s3068 + $0x38] sm:$0xff]
        %v3077 = vld [vmem:[%s3068 + $0x40] sm:$0xff]
        %v3078 = vld [vmem:[%s3068 + $0x48] sm:$0xff]
        %v3079 = vld [vmem:[%s3068 + $0x50] sm:$0xff]
        %v3080 = vld [vmem:[%s3068 + $0x58] sm:$0xff]
        %v3081 = vld [vmem:[%s3068 + $0x60] sm:$0xff]
        %v3082 = vld [vmem:[%s3068 + $0x68] sm:$0xff]
        %v3083 = vld [vmem:[%s3068 + $0x70] sm:$0xff]
        %v3084 = vld [vmem:[%s3068 + $0x78] sm:$0xff]
        %v3085 = vld [vmem:[%s2 + $0x4] sm:$0x1]
        %v3086 = vlaneseq
        %v3087 = vshrl.u32 %v3086, 7
        %v3088 = vsub.s32 0, %v3087
        %v3089 = vrot.slane %v3085, %v3088
        %3090 = vmatprep.subr.mxu0 0.0
        %v3091 = vand.u32 %v3084, 4294901760
        %3092 = vmatpush1.msra.mxu0 %v3091
        %3093 = vmatprep.subr.mxu0 0.0
        %v3094 = vand.u32 %v3083, 4294901760
        %3095 = vmatpush1.msra.mxu0 %v3094
        %3096 = vmatprep.subr.mxu0 0.0
        %v3097 = vand.u32 %v3082, 4294901760
        %3098 = vmatpush1.msra.mxu0 %v3097
        %3099 = vmatprep.subr.mxu0 0.0
        %v3100 = vand.u32 %v3081, 4294901760
        %3101 = vmatpush1.msra.mxu0 %v3100
        %3102 = vmatprep.subr.mxu0 0.0
        %v3103 = vand.u32 %v3080, 4294901760
        %3104 = vmatpush1.msra.mxu0 %v3103
        %3105 = vmatprep.subr.mxu0 0.0
        %v3106 = vand.u32 %v3079, 4294901760
        %3107 = vmatpush1.msra.mxu0 %v3106
        %3108 = vmatprep.subr.mxu0 0.0
        %v3109 = vand.u32 %v3078, 4294901760
        %3110 = vmatpush1.msra.mxu0 %v3109
        %3111 = vmatprep.subr.mxu0 0.0
        %v3112 = vand.u32 %v3077, 4294901760
        %3113 = vmatpush1.msra.mxu0 %v3112
        %3114 = vmatprep.subr.mxu0 0.0
        %v3115 = vand.u32 %v3076, 4294901760
        %3116 = vmatpush1.msra.mxu0 %v3115
        %3117 = vmatprep.subr.mxu0 0.0
        %v3118 = vand.u32 %v3075, 4294901760
        %3119 = vmatpush1.msra.mxu0 %v3118
        %3120 = vmatprep.subr.mxu0 0.0
        %v3121 = vand.u32 %v3074, 4294901760
        %3122 = vmatpush1.msra.mxu0 %v3121
        %3123 = vmatprep.subr.mxu0 0.0
        %v3124 = vand.u32 %v3073, 4294901760
        %3125 = vmatpush1.msra.mxu0 %v3124
        %3126 = vmatprep.subr.mxu0 0.0
        %v3127 = vand.u32 %v3072, 4294901760
        %3128 = vmatpush1.msra.mxu0 %v3127
        %3129 = vmatprep.subr.mxu0 0.0
        %v3130 = vand.u32 %v3071, 4294901760
        %3131 = vmatpush1.msra.mxu0 %v3130
        %3132 = vmatprep.subr.mxu0 0.0
        %v3133 = vand.u32 %v3070, 4294901760
        %3134 = vmatpush1.msra.mxu0 %v3133
        %3135 = vmatprep.subr.mxu0 0.0
        %v3136 = vand.u32 %v3069, 4294901760
        %3137 = vmatpush1.msra.mxu0 %v3136
        %3138 = vmatprep.subr.mxu0 0.0
        %3139 = vmatpush2.msra.mxu0 0.0
        %3140 = vmatprep.subr.mxu0 0.0
        %3141 = vmatpush2.msra.mxu0 0.0
        %3142 = vmatprep.subr.mxu0 0.0
        %3143 = vmatpush2.msra.mxu0 0.0
        %3144 = vmatprep.subr.mxu0 0.0
        %3145 = vmatpush2.msra.mxu0 0.0
        %3146 = vmatprep.subr.mxu0 0.0
        %3147 = vmatpush2.msra.mxu0 0.0
        %3148 = vmatprep.subr.mxu0 0.0
        %3149 = vmatpush2.msra.mxu0 0.0
        %3150 = vmatprep.subr.mxu0 0.0
        %3151 = vmatpush2.msra.mxu0 0.0
        %3152 = vmatprep.subr.mxu0 0.0
        %3153 = vmatpush2.msra.mxu0 0.0
        %3154 = vmatprep.subr.mxu0 0.0
        %3155 = vmatpush2.msra.mxu0 0.0
        %3156 = vmatprep.subr.mxu0 0.0
        %3157 = vmatpush2.msra.mxu0 0.0
        %3158 = vmatprep.subr.mxu0 0.0
        %3159 = vmatpush2.msra.mxu0 0.0
        %3160 = vmatprep.subr.mxu0 0.0
        %3161 = vmatpush2.msra.mxu0 0.0
        %3162 = vmatprep.subr.mxu0 0.0
        %3163 = vmatpush2.msra.mxu0 0.0
        %3164 = vmatprep.subr.mxu0 0.0
        %3165 = vmatpush2.msra.mxu0 0.0
        %3166 = vmatprep.subr.mxu0 0.0
        %3167 = vmatpush2.msra.mxu0 0.0
        %3168 = vmatprep.subr.mxu0 0.0
        %3169 = vmatpush2.msra.mxu0 0.0
        %3170 = vmatprep.mubr.f32.mxu0 0.0
        %v3171 = vand.u32 %v3066, 4294901760
        %v3172 = vsub.f32 %v3066, %v3171
        %v3173 = vand.u32 %v3172, 4294901760
        %v3174 = vsub.f32 %v3172, %v3173
        %v3175 = vand.u32 %v3174, 4294901760
        %3176 = vmatmul.mubr.f32.gmra.mxu0 %v3175
        %v3177 = vpop.f32.mrf.mxu0
        %v3178 = vadd.f32 %v3089, %v3177
        %v3179 = vpop.f32.mrf.mxu0
        %3180 = vmatprep.mubr.f32.mxu0 0.0
        %v3181 = vand.u32 %v3067, 4294901760
        %v3182 = vsub.f32 %v3067, %v3181
        %v3183 = vand.u32 %v3182, 4294901760
        %v3184 = vsub.f32 %v3182, %v3183
        %v3185 = vand.u32 %v3184, 4294901760
        %3186 = vmatmul.mubr.f32.gmra.mxu0 %v3185
        %v3187 = vpop.f32.mrf.mxu0
        %v3188 = vadd.f32 %v3089, %v3187
        %v3189 = vpop.f32.mrf.mxu0
        %3190 = vdwg.mxu0
        %3191 = vmatprep.subr.mxu0 0.0
        %v3192 = vand.u32 %v3084, 4294901760
        %v3193 = vsub.f32 %v3084, %v3192
        %v3194 = vand.u32 %v3193, 4294901760
        %v3195 = vsub.f32 %v3193, %v3194
        %v3196 = vand.u32 %v3195, 4294901760
        %3197 = vmatpush1.msra.mxu0 %v3196
        %3198 = vmatprep.subr.mxu0 0.0
        %v3199 = vand.u32 %v3083, 4294901760
        %v3200 = vsub.f32 %v3083, %v3199
        %v3201 = vand.u32 %v3200, 4294901760
        %v3202 = vsub.f32 %v3200, %v3201
        %v3203 = vand.u32 %v3202, 4294901760
        %3204 = vmatpush1.msra.mxu0 %v3203
        %3205 = vmatprep.subr.mxu0 0.0
        %v3206 = vand.u32 %v3082, 4294901760
        %v3207 = vsub.f32 %v3082, %v3206
        %v3208 = vand.u32 %v3207, 4294901760
        %v3209 = vsub.f32 %v3207, %v3208
        %v3210 = vand.u32 %v3209, 4294901760
        %3211 = vmatpush1.msra.mxu0 %v3210
        %3212 = vmatprep.subr.mxu0 0.0
        %v3213 = vand.u32 %v3081, 4294901760
        %v3214 = vsub.f32 %v3081, %v3213
        %v3215 = vand.u32 %v3214, 4294901760
        %v3216 = vsub.f32 %v3214, %v3215
        %v3217 = vand.u32 %v3216, 4294901760
        %3218 = vmatpush1.msra.mxu0 %v3217
        %3219 = vmatprep.subr.mxu0 0.0
        %v3220 = vand.u32 %v3080, 4294901760
        %v3221 = vsub.f32 %v3080, %v3220
        %v3222 = vand.u32 %v3221, 4294901760
        %v3223 = vsub.f32 %v3221, %v3222
        %v3224 = vand.u32 %v3223, 4294901760
        %3225 = vmatpush1.msra.mxu0 %v3224
        %3226 = vmatprep.subr.mxu0 0.0
        %v3227 = vand.u32 %v3079, 4294901760
        %v3228 = vsub.f32 %v3079, %v3227
        %v3229 = vand.u32 %v3228, 4294901760
        %v3230 = vsub.f32 %v3228, %v3229
        %v3231 = vand.u32 %v3230, 4294901760
        %3232 = vmatpush1.msra.mxu0 %v3231
        %3233 = vmatprep.subr.mxu0 0.0
        %v3234 = vand.u32 %v3078, 4294901760
        %v3235 = vsub.f32 %v3078, %v3234
        %v3236 = vand.u32 %v3235, 4294901760
        %v3237 = vsub.f32 %v3235, %v3236
        %v3238 = vand.u32 %v3237, 4294901760
        %3239 = vmatpush1.msra.mxu0 %v3238
        %3240 = vmatprep.subr.mxu0 0.0
        %v3241 = vand.u32 %v3077, 4294901760
        %v3242 = vsub.f32 %v3077, %v3241
        %v3243 = vand.u32 %v3242, 4294901760
        %v3244 = vsub.f32 %v3242, %v3243
        %v3245 = vand.u32 %v3244, 4294901760
        %3246 = vmatpush1.msra.mxu0 %v3245
        %3247 = vmatprep.subr.mxu0 0.0
        %v3248 = vand.u32 %v3076, 4294901760
        %v3249 = vsub.f32 %v3076, %v3248
        %v3250 = vand.u32 %v3249, 4294901760
        %v3251 = vsub.f32 %v3249, %v3250
        %v3252 = vand.u32 %v3251, 4294901760
        %3253 = vmatpush1.msra.mxu0 %v3252
        %3254 = vmatprep.subr.mxu0 0.0
        %v3255 = vand.u32 %v3075, 4294901760
        %v3256 = vsub.f32 %v3075, %v3255
        %v3257 = vand.u32 %v3256, 4294901760
        %v3258 = vsub.f32 %v3256, %v3257
        %v3259 = vand.u32 %v3258, 4294901760
        %3260 = vmatpush1.msra.mxu0 %v3259
        %3261 = vmatprep.subr.mxu0 0.0
        %v3262 = vand.u32 %v3074, 4294901760
        %v3263 = vsub.f32 %v3074, %v3262
        %v3264 = vand.u32 %v3263, 4294901760
        %v3265 = vsub.f32 %v3263, %v3264
        %v3266 = vand.u32 %v3265, 4294901760
        %3267 = vmatpush1.msra.mxu0 %v3266
        %3268 = vmatprep.subr.mxu0 0.0
        %v3269 = vand.u32 %v3073, 4294901760
        %v3270 = vsub.f32 %v3073, %v3269
        %v3271 = vand.u32 %v3270, 4294901760
        %v3272 = vsub.f32 %v3270, %v3271
        %v3273 = vand.u32 %v3272, 4294901760
        %3274 = vmatpush1.msra.mxu0 %v3273
        %3275 = vmatprep.subr.mxu0 0.0
        %v3276 = vand.u32 %v3072, 4294901760
        %v3277 = vsub.f32 %v3072, %v3276
        %v3278 = vand.u32 %v3277, 4294901760
        %v3279 = vsub.f32 %v3277, %v3278
        %v3280 = vand.u32 %v3279, 4294901760
        %3281 = vmatpush1.msra.mxu0 %v3280
        %3282 = vmatprep.subr.mxu0 0.0
        %v3283 = vand.u32 %v3071, 4294901760
        %v3284 = vsub.f32 %v3071, %v3283
        %v3285 = vand.u32 %v3284, 4294901760
        %v3286 = vsub.f32 %v3284, %v3285
        %v3287 = vand.u32 %v3286, 4294901760
        %3288 = vmatpush1.msra.mxu0 %v3287
        %3289 = vmatprep.subr.mxu0 0.0
        %v3290 = vand.u32 %v3070, 4294901760
        %v3291 = vsub.f32 %v3070, %v3290
        %v3292 = vand.u32 %v3291, 4294901760
        %v3293 = vsub.f32 %v3291, %v3292
        %v3294 = vand.u32 %v3293, 4294901760
        %3295 = vmatpush1.msra.mxu0 %v3294
        %3296 = vmatprep.subr.mxu0 0.0
        %v3297 = vand.u32 %v3069, 4294901760
        %v3298 = vsub.f32 %v3069, %v3297
        %v3299 = vand.u32 %v3298, 4294901760
        %v3300 = vsub.f32 %v3298, %v3299
        %v3301 = vand.u32 %v3300, 4294901760
        %3302 = vmatpush1.msra.mxu0 %v3301
        %3303 = vmatprep.subr.mxu0 0.0
        %3304 = vmatpush2.msra.mxu0 0.0
        %3305 = vmatprep.subr.mxu0 0.0
        %3306 = vmatpush2.msra.mxu0 0.0
        %3307 = vmatprep.subr.mxu0 0.0
        %3308 = vmatpush2.msra.mxu0 0.0
        %3309 = vmatprep.subr.mxu0 0.0
        %3310 = vmatpush2.msra.mxu0 0.0
        %3311 = vmatprep.subr.mxu0 0.0
        %3312 = vmatpush2.msra.mxu0 0.0
        %3313 = vmatprep.subr.mxu0 0.0
        %3314 = vmatpush2.msra.mxu0 0.0
        %3315 = vmatprep.subr.mxu0 0.0
        %3316 = vmatpush2.msra.mxu0 0.0
        %3317 = vmatprep.subr.mxu0 0.0
        %3318 = vmatpush2.msra.mxu0 0.0
        %3319 = vmatprep.subr.mxu0 0.0
        %3320 = vmatpush2.msra.mxu0 0.0
        %3321 = vmatprep.subr.mxu0 0.0
        %3322 = vmatpush2.msra.mxu0 0.0
        %3323 = vmatprep.subr.mxu0 0.0
        %3324 = vmatpush2.msra.mxu0 0.0
        %3325 = vmatprep.subr.mxu0 0.0
        %3326 = vmatpush2.msra.mxu0 0.0
        %3327 = vmatprep.subr.mxu0 0.0
        %3328 = vmatpush2.msra.mxu0 0.0
        %3329 = vmatprep.subr.mxu0 0.0
        %3330 = vmatpush2.msra.mxu0 0.0
        %3331 = vmatprep.subr.mxu0 0.0
        %3332 = vmatpush2.msra.mxu0 0.0
        %3333 = vmatprep.subr.mxu0 0.0
        %3334 = vmatpush2.msra.mxu0 0.0
        %3335 = vmatprep.mubr.f32.mxu0 0.0
        %v3336 = vand.u32 %v3066, 4294901760
        %3337 = vmatmul.mubr.f32.gmra.mxu0 %v3336
        %v3338 = vpop.f32.mrf.mxu0
        %v3339 = vadd.f32 %v3178, %v3338
        %v3340 = vpop.f32.mrf.mxu0
        %3341 = vmatprep.mubr.f32.mxu0 0.0
        %v3342 = vand.u32 %v3067, 4294901760
        %3343 = vmatmul.mubr.f32.gmra.mxu0 %v3342
        %v3344 = vpop.f32.mrf.mxu0
        %v3345 = vadd.f32 %v3188, %v3344
        %v3346 = vpop.f32.mrf.mxu0
        %3347 = vdwg.mxu0
        %3348 = vmatprep.subr.mxu0 0.0
        %v3349 = vand.u32 %v3084, 4294901760
        %v3350 = vsub.f32 %v3084, %v3349
        %3351 = vmatpush1.msra.mxu0 %v3350
        %3352 = vmatprep.subr.mxu0 0.0
        %v3353 = vand.u32 %v3083, 4294901760
        %v3354 = vsub.f32 %v3083, %v3353
        %3355 = vmatpush1.msra.mxu0 %v3354
        %3356 = vmatprep.subr.mxu0 0.0
        %v3357 = vand.u32 %v3082, 4294901760
        %v3358 = vsub.f32 %v3082, %v3357
        %3359 = vmatpush1.msra.mxu0 %v3358
        %3360 = vmatprep.subr.mxu0 0.0
        %v3361 = vand.u32 %v3081, 4294901760
        %v3362 = vsub.f32 %v3081, %v3361
        %3363 = vmatpush1.msra.mxu0 %v3362
        %3364 = vmatprep.subr.mxu0 0.0
        %v3365 = vand.u32 %v3080, 4294901760
        %v3366 = vsub.f32 %v3080, %v3365
        %3367 = vmatpush1.msra.mxu0 %v3366
        %3368 = vmatprep.subr.mxu0 0.0
        %v3369 = vand.u32 %v3079, 4294901760
        %v3370 = vsub.f32 %v3079, %v3369
        %3371 = vmatpush1.msra.mxu0 %v3370
        %3372 = vmatprep.subr.mxu0 0.0
        %v3373 = vand.u32 %v3078, 4294901760
        %v3374 = vsub.f32 %v3078, %v3373
        %3375 = vmatpush1.msra.mxu0 %v3374
        %3376 = vmatprep.subr.mxu0 0.0
        %v3377 = vand.u32 %v3077, 4294901760
        %v3378 = vsub.f32 %v3077, %v3377
        %3379 = vmatpush1.msra.mxu0 %v3378
        %3380 = vmatprep.subr.mxu0 0.0
        %v3381 = vand.u32 %v3076, 4294901760
        %v3382 = vsub.f32 %v3076, %v3381
        %3383 = vmatpush1.msra.mxu0 %v3382
        %3384 = vmatprep.subr.mxu0 0.0
        %v3385 = vand.u32 %v3075, 4294901760
        %v3386 = vsub.f32 %v3075, %v3385
        %3387 = vmatpush1.msra.mxu0 %v3386
        %3388 = vmatprep.subr.mxu0 0.0
        %v3389 = vand.u32 %v3074, 4294901760
        %v3390 = vsub.f32 %v3074, %v3389
        %3391 = vmatpush1.msra.mxu0 %v3390
        %3392 = vmatprep.subr.mxu0 0.0
        %v3393 = vand.u32 %v3073, 4294901760
        %v3394 = vsub.f32 %v3073, %v3393
        %3395 = vmatpush1.msra.mxu0 %v3394
        %3396 = vmatprep.subr.mxu0 0.0
        %v3397 = vand.u32 %v3072, 4294901760
        %v3398 = vsub.f32 %v3072, %v3397
        %3399 = vmatpush1.msra.mxu0 %v3398
        %3400 = vmatprep.subr.mxu0 0.0
        %v3401 = vand.u32 %v3071, 4294901760
        %v3402 = vsub.f32 %v3071, %v3401
        %3403 = vmatpush1.msra.mxu0 %v3402
        %3404 = vmatprep.subr.mxu0 0.0
        %v3405 = vand.u32 %v3070, 4294901760
        %v3406 = vsub.f32 %v3070, %v3405
        %3407 = vmatpush1.msra.mxu0 %v3406
        %3408 = vmatprep.subr.mxu0 0.0
        %v3409 = vand.u32 %v3069, 4294901760
        %v3410 = vsub.f32 %v3069, %v3409
        %3411 = vmatpush1.msra.mxu0 %v3410
        %3412 = vmatprep.subr.mxu0 0.0
        %3413 = vmatpush2.msra.mxu0 0.0
        %3414 = vmatprep.subr.mxu0 0.0
        %3415 = vmatpush2.msra.mxu0 0.0
        %3416 = vmatprep.subr.mxu0 0.0
        %3417 = vmatpush2.msra.mxu0 0.0
        %3418 = vmatprep.subr.mxu0 0.0
        %3419 = vmatpush2.msra.mxu0 0.0
        %3420 = vmatprep.subr.mxu0 0.0
        %3421 = vmatpush2.msra.mxu0 0.0
        %3422 = vmatprep.subr.mxu0 0.0
        %3423 = vmatpush2.msra.mxu0 0.0
        %3424 = vmatprep.subr.mxu0 0.0
        %3425 = vmatpush2.msra.mxu0 0.0
        %3426 = vmatprep.subr.mxu0 0.0
        %3427 = vmatpush2.msra.mxu0 0.0
        %3428 = vmatprep.subr.mxu0 0.0
        %3429 = vmatpush2.msra.mxu0 0.0
        %3430 = vmatprep.subr.mxu0 0.0
        %3431 = vmatpush2.msra.mxu0 0.0
        %3432 = vmatprep.subr.mxu0 0.0
        %3433 = vmatpush2.msra.mxu0 0.0
        %3434 = vmatprep.subr.mxu0 0.0
        %3435 = vmatpush2.msra.mxu0 0.0
        %3436 = vmatprep.subr.mxu0 0.0
        %3437 = vmatpush2.msra.mxu0 0.0
        %3438 = vmatprep.subr.mxu0 0.0
        %3439 = vmatpush2.msra.mxu0 0.0
        %3440 = vmatprep.subr.mxu0 0.0
        %3441 = vmatpush2.msra.mxu0 0.0
        %3442 = vmatprep.subr.mxu0 0.0
        %3443 = vmatpush2.msra.mxu0 0.0
        %3444 = vmatprep.mubr.f32.mxu0 0.0
        %v3445 = vand.u32 %v3066, 4294901760
        %v3446 = vsub.f32 %v3066, %v3445
        %3447 = vmatmul.mubr.f32.gmra.mxu0 %v3446
        %v3448 = vpop.f32.mrf.mxu0
        %v3449 = vadd.f32 %v3339, %v3448
        %v3450 = vpop.f32.mrf.mxu0
        %3451 = vmatprep.mubr.f32.mxu0 0.0
        %v3452 = vand.u32 %v3067, 4294901760
        %v3453 = vsub.f32 %v3067, %v3452
        %3454 = vmatmul.mubr.f32.gmra.mxu0 %v3453
        %v3455 = vpop.f32.mrf.mxu0
        %v3456 = vadd.f32 %v3345, %v3455
        %v3457 = vpop.f32.mrf.mxu0
        %3458 = vdwg.mxu0
        %3459 = vmatprep.subr.mxu0 0.0
        %v3460 = vand.u32 %v3084, 4294901760
        %3461 = vmatpush1.msra.mxu0 %v3460
        %3462 = vmatprep.subr.mxu0 0.0
        %v3463 = vand.u32 %v3083, 4294901760
        %3464 = vmatpush1.msra.mxu0 %v3463
        %3465 = vmatprep.subr.mxu0 0.0
        %v3466 = vand.u32 %v3082, 4294901760
        %3467 = vmatpush1.msra.mxu0 %v3466
        %3468 = vmatprep.subr.mxu0 0.0
        %v3469 = vand.u32 %v3081, 4294901760
        %3470 = vmatpush1.msra.mxu0 %v3469
        %3471 = vmatprep.subr.mxu0 0.0
        %v3472 = vand.u32 %v3080, 4294901760
        %3473 = vmatpush1.msra.mxu0 %v3472
        %3474 = vmatprep.subr.mxu0 0.0
        %v3475 = vand.u32 %v3079, 4294901760
        %3476 = vmatpush1.msra.mxu0 %v3475
        %3477 = vmatprep.subr.mxu0 0.0
        %v3478 = vand.u32 %v3078, 4294901760
        %3479 = vmatpush1.msra.mxu0 %v3478
        %3480 = vmatprep.subr.mxu0 0.0
        %v3481 = vand.u32 %v3077, 4294901760
        %3482 = vmatpush1.msra.mxu0 %v3481
        %3483 = vmatprep.subr.mxu0 0.0
        %v3484 = vand.u32 %v3076, 4294901760
        %3485 = vmatpush1.msra.mxu0 %v3484
        %3486 = vmatprep.subr.mxu0 0.0
        %v3487 = vand.u32 %v3075, 4294901760
        %3488 = vmatpush1.msra.mxu0 %v3487
        %3489 = vmatprep.subr.mxu0 0.0
        %v3490 = vand.u32 %v3074, 4294901760
        %3491 = vmatpush1.msra.mxu0 %v3490
        %3492 = vmatprep.subr.mxu0 0.0
        %v3493 = vand.u32 %v3073, 4294901760
        %3494 = vmatpush1.msra.mxu0 %v3493
        %3495 = vmatprep.subr.mxu0 0.0
        %v3496 = vand.u32 %v3072, 4294901760
        %3497 = vmatpush1.msra.mxu0 %v3496
        %3498 = vmatprep.subr.mxu0 0.0
        %v3499 = vand.u32 %v3071, 4294901760
        %3500 = vmatpush1.msra.mxu0 %v3499
        %3501 = vmatprep.subr.mxu0 0.0
        %v3502 = vand.u32 %v3070, 4294901760
        %3503 = vmatpush1.msra.mxu0 %v3502
        %3504 = vmatprep.subr.mxu0 0.0
        %v3505 = vand.u32 %v3069, 4294901760
        %3506 = vmatpush1.msra.mxu0 %v3505
        %3507 = vmatprep.subr.mxu0 0.0
        %3508 = vmatpush2.msra.mxu0 0.0
        %3509 = vmatprep.subr.mxu0 0.0
        %3510 = vmatpush2.msra.mxu0 0.0
        %3511 = vmatprep.subr.mxu0 0.0
        %3512 = vmatpush2.msra.mxu0 0.0
        %3513 = vmatprep.subr.mxu0 0.0
        %3514 = vmatpush2.msra.mxu0 0.0
        %3515 = vmatprep.subr.mxu0 0.0
        %3516 = vmatpush2.msra.mxu0 0.0
        %3517 = vmatprep.subr.mxu0 0.0
        %3518 = vmatpush2.msra.mxu0 0.0
        %3519 = vmatprep.subr.mxu0 0.0
        %3520 = vmatpush2.msra.mxu0 0.0
        %3521 = vmatprep.subr.mxu0 0.0
        %3522 = vmatpush2.msra.mxu0 0.0
        %3523 = vmatprep.subr.mxu0 0.0
        %3524 = vmatpush2.msra.mxu0 0.0
        %3525 = vmatprep.subr.mxu0 0.0
        %3526 = vmatpush2.msra.mxu0 0.0
        %3527 = vmatprep.subr.mxu0 0.0
        %3528 = vmatpush2.msra.mxu0 0.0
        %3529 = vmatprep.subr.mxu0 0.0
        %3530 = vmatpush2.msra.mxu0 0.0
        %3531 = vmatprep.subr.mxu0 0.0
        %3532 = vmatpush2.msra.mxu0 0.0
        %3533 = vmatprep.subr.mxu0 0.0
        %3534 = vmatpush2.msra.mxu0 0.0
        %3535 = vmatprep.subr.mxu0 0.0
        %3536 = vmatpush2.msra.mxu0 0.0
        %3537 = vmatprep.subr.mxu0 0.0
        %3538 = vmatpush2.msra.mxu0 0.0
        %3539 = vmatprep.mubr.f32.mxu0 0.0
        %v3540 = vand.u32 %v3066, 4294901760
        %v3541 = vsub.f32 %v3066, %v3540
        %v3542 = vand.u32 %v3541, 4294901760
        %3543 = vmatmul.mubr.f32.gmra.mxu0 %v3542
        %v3544 = vpop.f32.mrf.mxu0
        %v3545 = vadd.f32 %v3449, %v3544
        %v3546 = vpop.f32.mrf.mxu0
        %3547 = vmatprep.mubr.f32.mxu0 0.0
        %v3548 = vand.u32 %v3067, 4294901760
        %v3549 = vsub.f32 %v3067, %v3548
        %v3550 = vand.u32 %v3549, 4294901760
        %3551 = vmatmul.mubr.f32.gmra.mxu0 %v3550
        %v3552 = vpop.f32.mrf.mxu0
        %v3553 = vadd.f32 %v3456, %v3552
        %v3554 = vpop.f32.mrf.mxu0
        %3555 = vdwg.mxu0
        %3556 = vmatprep.subr.mxu0 0.0
        %v3557 = vand.u32 %v3084, 4294901760
        %v3558 = vsub.f32 %v3084, %v3557
        %v3559 = vand.u32 %v3558, 4294901760
        %3560 = vmatpush1.msra.mxu0 %v3559
        %3561 = vmatprep.subr.mxu0 0.0
        %v3562 = vand.u32 %v3083, 4294901760
        %v3563 = vsub.f32 %v3083, %v3562
        %v3564 = vand.u32 %v3563, 4294901760
        %3565 = vmatpush1.msra.mxu0 %v3564
        %3566 = vmatprep.subr.mxu0 0.0
        %v3567 = vand.u32 %v3082, 4294901760
        %v3568 = vsub.f32 %v3082, %v3567
        %v3569 = vand.u32 %v3568, 4294901760
        %3570 = vmatpush1.msra.mxu0 %v3569
        %3571 = vmatprep.subr.mxu0 0.0
        %v3572 = vand.u32 %v3081, 4294901760
        %v3573 = vsub.f32 %v3081, %v3572
        %v3574 = vand.u32 %v3573, 4294901760
        %3575 = vmatpush1.msra.mxu0 %v3574
        %3576 = vmatprep.subr.mxu0 0.0
        %v3577 = vand.u32 %v3080, 4294901760
        %v3578 = vsub.f32 %v3080, %v3577
        %v3579 = vand.u32 %v3578, 4294901760
        %3580 = vmatpush1.msra.mxu0 %v3579
        %3581 = vmatprep.subr.mxu0 0.0
        %v3582 = vand.u32 %v3079, 4294901760
        %v3583 = vsub.f32 %v3079, %v3582
        %v3584 = vand.u32 %v3583, 4294901760
        %3585 = vmatpush1.msra.mxu0 %v3584
        %3586 = vmatprep.subr.mxu0 0.0
        %v3587 = vand.u32 %v3078, 4294901760
        %v3588 = vsub.f32 %v3078, %v3587
        %v3589 = vand.u32 %v3588, 4294901760
        %3590 = vmatpush1.msra.mxu0 %v3589
        %3591 = vmatprep.subr.mxu0 0.0
        %v3592 = vand.u32 %v3077, 4294901760
        %v3593 = vsub.f32 %v3077, %v3592
        %v3594 = vand.u32 %v3593, 4294901760
        %3595 = vmatpush1.msra.mxu0 %v3594
        %3596 = vmatprep.subr.mxu0 0.0
        %v3597 = vand.u32 %v3076, 4294901760
        %v3598 = vsub.f32 %v3076, %v3597
        %v3599 = vand.u32 %v3598, 4294901760
        %3600 = vmatpush1.msra.mxu0 %v3599
        %3601 = vmatprep.subr.mxu0 0.0
        %v3602 = vand.u32 %v3075, 4294901760
        %v3603 = vsub.f32 %v3075, %v3602
        %v3604 = vand.u32 %v3603, 4294901760
        %3605 = vmatpush1.msra.mxu0 %v3604
        %3606 = vmatprep.subr.mxu0 0.0
        %v3607 = vand.u32 %v3074, 4294901760
        %v3608 = vsub.f32 %v3074, %v3607
        %v3609 = vand.u32 %v3608, 4294901760
        %3610 = vmatpush1.msra.mxu0 %v3609
        %3611 = vmatprep.subr.mxu0 0.0
        %v3612 = vand.u32 %v3073, 4294901760
        %v3613 = vsub.f32 %v3073, %v3612
        %v3614 = vand.u32 %v3613, 4294901760
        %3615 = vmatpush1.msra.mxu0 %v3614
        %3616 = vmatprep.subr.mxu0 0.0
        %v3617 = vand.u32 %v3072, 4294901760
        %v3618 = vsub.f32 %v3072, %v3617
        %v3619 = vand.u32 %v3618, 4294901760
        %3620 = vmatpush1.msra.mxu0 %v3619
        %3621 = vmatprep.subr.mxu0 0.0
        %v3622 = vand.u32 %v3071, 4294901760
        %v3623 = vsub.f32 %v3071, %v3622
        %v3624 = vand.u32 %v3623, 4294901760
        %3625 = vmatpush1.msra.mxu0 %v3624
        %3626 = vmatprep.subr.mxu0 0.0
        %v3627 = vand.u32 %v3070, 4294901760
        %v3628 = vsub.f32 %v3070, %v3627
        %v3629 = vand.u32 %v3628, 4294901760
        %3630 = vmatpush1.msra.mxu0 %v3629
        %3631 = vmatprep.subr.mxu0 0.0
        %v3632 = vand.u32 %v3069, 4294901760
        %v3633 = vsub.f32 %v3069, %v3632
        %v3634 = vand.u32 %v3633, 4294901760
        %3635 = vmatpush1.msra.mxu0 %v3634
        %3636 = vmatprep.subr.mxu0 0.0
        %3637 = vmatpush2.msra.mxu0 0.0
        %3638 = vmatprep.subr.mxu0 0.0
        %3639 = vmatpush2.msra.mxu0 0.0
        %3640 = vmatprep.subr.mxu0 0.0
        %3641 = vmatpush2.msra.mxu0 0.0
        %3642 = vmatprep.subr.mxu0 0.0
        %3643 = vmatpush2.msra.mxu0 0.0
        %3644 = vmatprep.subr.mxu0 0.0
        %3645 = vmatpush2.msra.mxu0 0.0
        %3646 = vmatprep.subr.mxu0 0.0
        %3647 = vmatpush2.msra.mxu0 0.0
        %3648 = vmatprep.subr.mxu0 0.0
        %3649 = vmatpush2.msra.mxu0 0.0
        %3650 = vmatprep.subr.mxu0 0.0
        %3651 = vmatpush2.msra.mxu0 0.0
        %3652 = vmatprep.subr.mxu0 0.0
        %3653 = vmatpush2.msra.mxu0 0.0
        %3654 = vmatprep.subr.mxu0 0.0
        %3655 = vmatpush2.msra.mxu0 0.0
        %3656 = vmatprep.subr.mxu0 0.0
        %3657 = vmatpush2.msra.mxu0 0.0
        %3658 = vmatprep.subr.mxu0 0.0
        %3659 = vmatpush2.msra.mxu0 0.0
        %3660 = vmatprep.subr.mxu0 0.0
        %3661 = vmatpush2.msra.mxu0 0.0
        %3662 = vmatprep.subr.mxu0 0.0
        %3663 = vmatpush2.msra.mxu0 0.0
        %3664 = vmatprep.subr.mxu0 0.0
        %3665 = vmatpush2.msra.mxu0 0.0
        %3666 = vmatprep.subr.mxu0 0.0
        %3667 = vmatpush2.msra.mxu0 0.0
        %3668 = vmatprep.mubr.f32.mxu0 0.0
        %v3669 = vand.u32 %v3066, 4294901760
        %3670 = vmatmul.mubr.f32.gmra.mxu0 %v3669
        %v3671 = vpop.f32.mrf.mxu0
        %v3672 = vadd.f32 %v3545, %v3671
        %v3673 = vpop.f32.mrf.mxu0
        %3674 = vmatprep.mubr.f32.mxu0 0.0
        %v3675 = vand.u32 %v3067, 4294901760
        %3676 = vmatmul.mubr.f32.gmra.mxu0 %v3675
        %v3677 = vpop.f32.mrf.mxu0
        %v3678 = vadd.f32 %v3553, %v3677
        %v3679 = vpop.f32.mrf.mxu0
        %3680 = vdwg.mxu0
        %3681 = vmatprep.subr.mxu0 0.0
        %v3682 = vand.u32 %v3084, 4294901760
        %3683 = vmatpush1.msra.mxu0 %v3682
        %3684 = vmatprep.subr.mxu0 0.0
        %v3685 = vand.u32 %v3083, 4294901760
        %3686 = vmatpush1.msra.mxu0 %v3685
        %3687 = vmatprep.subr.mxu0 0.0
        %v3688 = vand.u32 %v3082, 4294901760
        %3689 = vmatpush1.msra.mxu0 %v3688
        %3690 = vmatprep.subr.mxu0 0.0
        %v3691 = vand.u32 %v3081, 4294901760
        %3692 = vmatpush1.msra.mxu0 %v3691
        %3693 = vmatprep.subr.mxu0 0.0
        %v3694 = vand.u32 %v3080, 4294901760
        %3695 = vmatpush1.msra.mxu0 %v3694
        %3696 = vmatprep.subr.mxu0 0.0
        %v3697 = vand.u32 %v3079, 4294901760
        %3698 = vmatpush1.msra.mxu0 %v3697
        %3699 = vmatprep.subr.mxu0 0.0
        %v3700 = vand.u32 %v3078, 4294901760
        %3701 = vmatpush1.msra.mxu0 %v3700
        %3702 = vmatprep.subr.mxu0 0.0
        %v3703 = vand.u32 %v3077, 4294901760
        %3704 = vmatpush1.msra.mxu0 %v3703
        %3705 = vmatprep.subr.mxu0 0.0
        %v3706 = vand.u32 %v3076, 4294901760
        %3707 = vmatpush1.msra.mxu0 %v3706
        %3708 = vmatprep.subr.mxu0 0.0
        %v3709 = vand.u32 %v3075, 4294901760
        %3710 = vmatpush1.msra.mxu0 %v3709
        %3711 = vmatprep.subr.mxu0 0.0
        %v3712 = vand.u32 %v3074, 4294901760
        %3713 = vmatpush1.msra.mxu0 %v3712
        %3714 = vmatprep.subr.mxu0 0.0
        %v3715 = vand.u32 %v3073, 4294901760
        %3716 = vmatpush1.msra.mxu0 %v3715
        %3717 = vmatprep.subr.mxu0 0.0
        %v3718 = vand.u32 %v3072, 4294901760
        %3719 = vmatpush1.msra.mxu0 %v3718
        %3720 = vmatprep.subr.mxu0 0.0
        %v3721 = vand.u32 %v3071, 4294901760
        %3722 = vmatpush1.msra.mxu0 %v3721
        %3723 = vmatprep.subr.mxu0 0.0
        %v3724 = vand.u32 %v3070, 4294901760
        %3725 = vmatpush1.msra.mxu0 %v3724
        %3726 = vmatprep.subr.mxu0 0.0
        %v3727 = vand.u32 %v3069, 4294901760
        %3728 = vmatpush1.msra.mxu0 %v3727
        %3729 = vmatprep.subr.mxu0 0.0
        %3730 = vmatpush2.msra.mxu0 0.0
        %3731 = vmatprep.subr.mxu0 0.0
        %3732 = vmatpush2.msra.mxu0 0.0
        %3733 = vmatprep.subr.mxu0 0.0
        %3734 = vmatpush2.msra.mxu0 0.0
        %3735 = vmatprep.subr.mxu0 0.0
        %3736 = vmatpush2.msra.mxu0 0.0
        %3737 = vmatprep.subr.mxu0 0.0
        %3738 = vmatpush2.msra.mxu0 0.0
        %3739 = vmatprep.subr.mxu0 0.0
        %3740 = vmatpush2.msra.mxu0 0.0
        %3741 = vmatprep.subr.mxu0 0.0
        %3742 = vmatpush2.msra.mxu0 0.0
        %3743 = vmatprep.subr.mxu0 0.0
        %3744 = vmatpush2.msra.mxu0 0.0
        %3745 = vmatprep.subr.mxu0 0.0
        %3746 = vmatpush2.msra.mxu0 0.0
        %3747 = vmatprep.subr.mxu0 0.0
        %3748 = vmatpush2.msra.mxu0 0.0
        %3749 = vmatprep.subr.mxu0 0.0
        %3750 = vmatpush2.msra.mxu0 0.0
        %3751 = vmatprep.subr.mxu0 0.0
        %3752 = vmatpush2.msra.mxu0 0.0
        %3753 = vmatprep.subr.mxu0 0.0
        %3754 = vmatpush2.msra.mxu0 0.0
        %3755 = vmatprep.subr.mxu0 0.0
        %3756 = vmatpush2.msra.mxu0 0.0
        %3757 = vmatprep.subr.mxu0 0.0
        %3758 = vmatpush2.msra.mxu0 0.0
        %3759 = vmatprep.subr.mxu0 0.0
        %3760 = vmatpush2.msra.mxu0 0.0
        %3761 = vmatprep.mubr.f32.mxu0 0.0
        %v3762 = vand.u32 %v3066, 4294901760
        %3763 = vmatmul.mubr.f32.gmra.mxu0 %v3762
        %v3764 = vpop.f32.mrf.mxu0
        %v3765 = vadd.f32 %v3672, %v3764
        %v3766 = vpop.f32.mrf.mxu0
        %3767 = vmatprep.mubr.f32.mxu0 0.0
        %v3768 = vand.u32 %v3067, 4294901760
        %3769 = vmatmul.mubr.f32.gmra.mxu0 %v3768
        %v3770 = vpop.f32.mrf.mxu0
        %v3771 = vadd.f32 %v3678, %v3770
        %v3772 = vpop.f32.mrf.mxu0
        %3773 = vdwg.mxu0
        %v3774 = vmax.f32 %v3765, 0.0
        %v3775 = vmax.f32 %v3771, 0.0
        %s3776 = scalar_lea.vmem [#allocation2], 640
        %v3777 = vld [vmem:[%s3776] sm:$0xff]
        %v3778 = vld [vmem:[%s3776 + $0x8] sm:$0xff]
        %v3779 = vld [vmem:[%s3776 + $0x10] sm:$0xff]
        %v3780 = vld [vmem:[%s3776 + $0x18] sm:$0xff]
        %v3781 = vld [vmem:[%s3776 + $0x20] sm:$0xff]
        %v3782 = vld [vmem:[%s3776 + $0x28] sm:$0xff]
        %v3783 = vld [vmem:[%s3776 + $0x30] sm:$0xff]
        %v3784 = vld [vmem:[%s3776 + $0x38] sm:$0xff]
        %v3785 = vld [vmem:[%s3776 + $0x40] sm:$0xff]
        %v3786 = vld [vmem:[%s3776 + $0x48] sm:$0xff]
        %v3787 = vld [vmem:[%s3776 + $0x50] sm:$0xff]
        %v3788 = vld [vmem:[%s3776 + $0x58] sm:$0xff]
        %v3789 = vld [vmem:[%s3776 + $0x60] sm:$0xff]
        %v3790 = vld [vmem:[%s3776 + $0x68] sm:$0xff]
        %v3791 = vld [vmem:[%s3776 + $0x70] sm:$0xff]
        %v3792 = vld [vmem:[%s3776 + $0x78] sm:$0xff]
        %v3793 = vld [vmem:[%s2 + $0x5] sm:$0x1]
        %v3794 = vlaneseq
        %v3795 = vshrl.u32 %v3794, 7
        %v3796 = vsub.s32 0, %v3795
        %v3797 = vrot.slane %v3793, %v3796
        %3798 = vmatprep.subr.mxu0 0.0
        %v3799 = vand.u32 %v3792, 4294901760
        %3800 = vmatpush1.msra.mxu0 %v3799
        %3801 = vmatprep.subr.mxu0 0.0
        %v3802 = vand.u32 %v3791, 4294901760
        %3803 = vmatpush1.msra.mxu0 %v3802
        %3804 = vmatprep.subr.mxu0 0.0
        %v3805 = vand.u32 %v3790, 4294901760
        %3806 = vmatpush1.msra.mxu0 %v3805
        %3807 = vmatprep.subr.mxu0 0.0
        %v3808 = vand.u32 %v3789, 4294901760
        %3809 = vmatpush1.msra.mxu0 %v3808
        %3810 = vmatprep.subr.mxu0 0.0
        %v3811 = vand.u32 %v3788, 4294901760
        %3812 = vmatpush1.msra.mxu0 %v3811
        %3813 = vmatprep.subr.mxu0 0.0
        %v3814 = vand.u32 %v3787, 4294901760
        %3815 = vmatpush1.msra.mxu0 %v3814
        %3816 = vmatprep.subr.mxu0 0.0
        %v3817 = vand.u32 %v3786, 4294901760
        %3818 = vmatpush1.msra.mxu0 %v3817
        %3819 = vmatprep.subr.mxu0 0.0
        %v3820 = vand.u32 %v3785, 4294901760
        %3821 = vmatpush1.msra.mxu0 %v3820
        %3822 = vmatprep.subr.mxu0 0.0
        %v3823 = vand.u32 %v3784, 4294901760
        %3824 = vmatpush1.msra.mxu0 %v3823
        %3825 = vmatprep.subr.mxu0 0.0
        %v3826 = vand.u32 %v3783, 4294901760
        %3827 = vmatpush1.msra.mxu0 %v3826
        %3828 = vmatprep.subr.mxu0 0.0
        %v3829 = vand.u32 %v3782, 4294901760
        %3830 = vmatpush1.msra.mxu0 %v3829
        %3831 = vmatprep.subr.mxu0 0.0
        %v3832 = vand.u32 %v3781, 4294901760
        %3833 = vmatpush1.msra.mxu0 %v3832
        %3834 = vmatprep.subr.mxu0 0.0
        %v3835 = vand.u32 %v3780, 4294901760
        %3836 = vmatpush1.msra.mxu0 %v3835
        %3837 = vmatprep.subr.mxu0 0.0
        %v3838 = vand.u32 %v3779, 4294901760
        %3839 = vmatpush1.msra.mxu0 %v3838
        %3840 = vmatprep.subr.mxu0 0.0
        %v3841 = vand.u32 %v3778, 4294901760
        %3842 = vmatpush1.msra.mxu0 %v3841
        %3843 = vmatprep.subr.mxu0 0.0
        %v3844 = vand.u32 %v3777, 4294901760
        %3845 = vmatpush1.msra.mxu0 %v3844
        %3846 = vmatprep.subr.mxu0 0.0
        %3847 = vmatpush2.msra.mxu0 0.0
        %3848 = vmatprep.subr.mxu0 0.0
        %3849 = vmatpush2.msra.mxu0 0.0
        %3850 = vmatprep.subr.mxu0 0.0
        %3851 = vmatpush2.msra.mxu0 0.0
        %3852 = vmatprep.subr.mxu0 0.0
        %3853 = vmatpush2.msra.mxu0 0.0
        %3854 = vmatprep.subr.mxu0 0.0
        %3855 = vmatpush2.msra.mxu0 0.0
        %3856 = vmatprep.subr.mxu0 0.0
        %3857 = vmatpush2.msra.mxu0 0.0
        %3858 = vmatprep.subr.mxu0 0.0
        %3859 = vmatpush2.msra.mxu0 0.0
        %3860 = vmatprep.subr.mxu0 0.0
        %3861 = vmatpush2.msra.mxu0 0.0
        %3862 = vmatprep.subr.mxu0 0.0
        %3863 = vmatpush2.msra.mxu0 0.0
        %3864 = vmatprep.subr.mxu0 0.0
        %3865 = vmatpush2.msra.mxu0 0.0
        %3866 = vmatprep.subr.mxu0 0.0
        %3867 = vmatpush2.msra.mxu0 0.0
        %3868 = vmatprep.subr.mxu0 0.0
        %3869 = vmatpush2.msra.mxu0 0.0
        %3870 = vmatprep.subr.mxu0 0.0
        %3871 = vmatpush2.msra.mxu0 0.0
        %3872 = vmatprep.subr.mxu0 0.0
        %3873 = vmatpush2.msra.mxu0 0.0
        %3874 = vmatprep.subr.mxu0 0.0
        %3875 = vmatpush2.msra.mxu0 0.0
        %3876 = vmatprep.subr.mxu0 0.0
        %3877 = vmatpush2.msra.mxu0 0.0
        %3878 = vmatprep.mubr.f32.mxu0 0.0
        %v3879 = vand.u32 %v3774, 4294901760
        %v3880 = vsub.f32 %v3774, %v3879
        %v3881 = vand.u32 %v3880, 4294901760
        %v3882 = vsub.f32 %v3880, %v3881
        %v3883 = vand.u32 %v3882, 4294901760
        %3884 = vmatmul.mubr.f32.gmra.mxu0 %v3883
        %v3885 = vpop.f32.mrf.mxu0
        %v3886 = vadd.f32 %v3797, %v3885
        %v3887 = vpop.f32.mrf.mxu0
        %3888 = vmatprep.mubr.f32.mxu0 0.0
        %v3889 = vand.u32 %v3775, 4294901760
        %v3890 = vsub.f32 %v3775, %v3889
        %v3891 = vand.u32 %v3890, 4294901760
        %v3892 = vsub.f32 %v3890, %v3891
        %v3893 = vand.u32 %v3892, 4294901760
        %3894 = vmatmul.mubr.f32.gmra.mxu0 %v3893
        %v3895 = vpop.f32.mrf.mxu0
        %v3896 = vadd.f32 %v3797, %v3895
        %v3897 = vpop.f32.mrf.mxu0
        %3898 = vdwg.mxu0
        %3899 = vmatprep.subr.mxu0 0.0
        %v3900 = vand.u32 %v3792, 4294901760
        %v3901 = vsub.f32 %v3792, %v3900
        %v3902 = vand.u32 %v3901, 4294901760
        %v3903 = vsub.f32 %v3901, %v3902
        %v3904 = vand.u32 %v3903, 4294901760
        %3905 = vmatpush1.msra.mxu0 %v3904
        %3906 = vmatprep.subr.mxu0 0.0
        %v3907 = vand.u32 %v3791, 4294901760
        %v3908 = vsub.f32 %v3791, %v3907
        %v3909 = vand.u32 %v3908, 4294901760
        %v3910 = vsub.f32 %v3908, %v3909
        %v3911 = vand.u32 %v3910, 4294901760
        %3912 = vmatpush1.msra.mxu0 %v3911
        %3913 = vmatprep.subr.mxu0 0.0
        %v3914 = vand.u32 %v3790, 4294901760
        %v3915 = vsub.f32 %v3790, %v3914
        %v3916 = vand.u32 %v3915, 4294901760
        %v3917 = vsub.f32 %v3915, %v3916
        %v3918 = vand.u32 %v3917, 4294901760
        %3919 = vmatpush1.msra.mxu0 %v3918
        %3920 = vmatprep.subr.mxu0 0.0
        %v3921 = vand.u32 %v3789, 4294901760
        %v3922 = vsub.f32 %v3789, %v3921
        %v3923 = vand.u32 %v3922, 4294901760
        %v3924 = vsub.f32 %v3922, %v3923
        %v3925 = vand.u32 %v3924, 4294901760
        %3926 = vmatpush1.msra.mxu0 %v3925
        %3927 = vmatprep.subr.mxu0 0.0
        %v3928 = vand.u32 %v3788, 4294901760
        %v3929 = vsub.f32 %v3788, %v3928
        %v3930 = vand.u32 %v3929, 4294901760
        %v3931 = vsub.f32 %v3929, %v3930
        %v3932 = vand.u32 %v3931, 4294901760
        %3933 = vmatpush1.msra.mxu0 %v3932
        %3934 = vmatprep.subr.mxu0 0.0
        %v3935 = vand.u32 %v3787, 4294901760
        %v3936 = vsub.f32 %v3787, %v3935
        %v3937 = vand.u32 %v3936, 4294901760
        %v3938 = vsub.f32 %v3936, %v3937
        %v3939 = vand.u32 %v3938, 4294901760
        %3940 = vmatpush1.msra.mxu0 %v3939
        %3941 = vmatprep.subr.mxu0 0.0
        %v3942 = vand.u32 %v3786, 4294901760
        %v3943 = vsub.f32 %v3786, %v3942
        %v3944 = vand.u32 %v3943, 4294901760
        %v3945 = vsub.f32 %v3943, %v3944
        %v3946 = vand.u32 %v3945, 4294901760
        %3947 = vmatpush1.msra.mxu0 %v3946
        %3948 = vmatprep.subr.mxu0 0.0
        %v3949 = vand.u32 %v3785, 4294901760
        %v3950 = vsub.f32 %v3785, %v3949
        %v3951 = vand.u32 %v3950, 4294901760
        %v3952 = vsub.f32 %v3950, %v3951
        %v3953 = vand.u32 %v3952, 4294901760
        %3954 = vmatpush1.msra.mxu0 %v3953
        %3955 = vmatprep.subr.mxu0 0.0
        %v3956 = vand.u32 %v3784, 4294901760
        %v3957 = vsub.f32 %v3784, %v3956
        %v3958 = vand.u32 %v3957, 4294901760
        %v3959 = vsub.f32 %v3957, %v3958
        %v3960 = vand.u32 %v3959, 4294901760
        %3961 = vmatpush1.msra.mxu0 %v3960
        %3962 = vmatprep.subr.mxu0 0.0
        %v3963 = vand.u32 %v3783, 4294901760
        %v3964 = vsub.f32 %v3783, %v3963
        %v3965 = vand.u32 %v3964, 4294901760
        %v3966 = vsub.f32 %v3964, %v3965
        %v3967 = vand.u32 %v3966, 4294901760
        %3968 = vmatpush1.msra.mxu0 %v3967
        %3969 = vmatprep.subr.mxu0 0.0
        %v3970 = vand.u32 %v3782, 4294901760
        %v3971 = vsub.f32 %v3782, %v3970
        %v3972 = vand.u32 %v3971, 4294901760
        %v3973 = vsub.f32 %v3971, %v3972
        %v3974 = vand.u32 %v3973, 4294901760
        %3975 = vmatpush1.msra.mxu0 %v3974
        %3976 = vmatprep.subr.mxu0 0.0
        %v3977 = vand.u32 %v3781, 4294901760
        %v3978 = vsub.f32 %v3781, %v3977
        %v3979 = vand.u32 %v3978, 4294901760
        %v3980 = vsub.f32 %v3978, %v3979
        %v3981 = vand.u32 %v3980, 4294901760
        %3982 = vmatpush1.msra.mxu0 %v3981
        %3983 = vmatprep.subr.mxu0 0.0
        %v3984 = vand.u32 %v3780, 4294901760
        %v3985 = vsub.f32 %v3780, %v3984
        %v3986 = vand.u32 %v3985, 4294901760
        %v3987 = vsub.f32 %v3985, %v3986
        %v3988 = vand.u32 %v3987, 4294901760
        %3989 = vmatpush1.msra.mxu0 %v3988
        %3990 = vmatprep.subr.mxu0 0.0
        %v3991 = vand.u32 %v3779, 4294901760
        %v3992 = vsub.f32 %v3779, %v3991
        %v3993 = vand.u32 %v3992, 4294901760
        %v3994 = vsub.f32 %v3992, %v3993
        %v3995 = vand.u32 %v3994, 4294901760
        %3996 = vmatpush1.msra.mxu0 %v3995
        %3997 = vmatprep.subr.mxu0 0.0
        %v3998 = vand.u32 %v3778, 4294901760
        %v3999 = vsub.f32 %v3778, %v3998
        %v4000 = vand.u32 %v3999, 4294901760
        %v4001 = vsub.f32 %v3999, %v4000
        %v4002 = vand.u32 %v4001, 4294901760
        %4003 = vmatpush1.msra.mxu0 %v4002
        %4004 = vmatprep.subr.mxu0 0.0
        %v4005 = vand.u32 %v3777, 4294901760
        %v4006 = vsub.f32 %v3777, %v4005
        %v4007 = vand.u32 %v4006, 4294901760
        %v4008 = vsub.f32 %v4006, %v4007
        %v4009 = vand.u32 %v4008, 4294901760
        %4010 = vmatpush1.msra.mxu0 %v4009
        %4011 = vmatprep.subr.mxu0 0.0
        %4012 = vmatpush2.msra.mxu0 0.0
        %4013 = vmatprep.subr.mxu0 0.0
        %4014 = vmatpush2.msra.mxu0 0.0
        %4015 = vmatprep.subr.mxu0 0.0
        %4016 = vmatpush2.msra.mxu0 0.0
        %4017 = vmatprep.subr.mxu0 0.0
        %4018 = vmatpush2.msra.mxu0 0.0
        %4019 = vmatprep.subr.mxu0 0.0
        %4020 = vmatpush2.msra.mxu0 0.0
        %4021 = vmatprep.subr.mxu0 0.0
        %4022 = vmatpush2.msra.mxu0 0.0
        %4023 = vmatprep.subr.mxu0 0.0
        %4024 = vmatpush2.msra.mxu0 0.0
        %4025 = vmatprep.subr.mxu0 0.0
        %4026 = vmatpush2.msra.mxu0 0.0
        %4027 = vmatprep.subr.mxu0 0.0
        %4028 = vmatpush2.msra.mxu0 0.0
        %4029 = vmatprep.subr.mxu0 0.0
        %4030 = vmatpush2.msra.mxu0 0.0
        %4031 = vmatprep.subr.mxu0 0.0
        %4032 = vmatpush2.msra.mxu0 0.0
        %4033 = vmatprep.subr.mxu0 0.0
        %4034 = vmatpush2.msra.mxu0 0.0
        %4035 = vmatprep.subr.mxu0 0.0
        %4036 = vmatpush2.msra.mxu0 0.0
        %4037 = vmatprep.subr.mxu0 0.0
        %4038 = vmatpush2.msra.mxu0 0.0
        %4039 = vmatprep.subr.mxu0 0.0
        %4040 = vmatpush2.msra.mxu0 0.0
        %4041 = vmatprep.subr.mxu0 0.0
        %4042 = vmatpush2.msra.mxu0 0.0
        %4043 = vmatprep.mubr.f32.mxu0 0.0
        %v4044 = vand.u32 %v3774, 4294901760
        %4045 = vmatmul.mubr.f32.gmra.mxu0 %v4044
        %v4046 = vpop.f32.mrf.mxu0
        %v4047 = vadd.f32 %v3886, %v4046
        %v4048 = vpop.f32.mrf.mxu0
        %4049 = vmatprep.mubr.f32.mxu0 0.0
        %v4050 = vand.u32 %v3775, 4294901760
        %4051 = vmatmul.mubr.f32.gmra.mxu0 %v4050
        %v4052 = vpop.f32.mrf.mxu0
        %v4053 = vadd.f32 %v3896, %v4052
        %v4054 = vpop.f32.mrf.mxu0
        %4055 = vdwg.mxu0
        %4056 = vmatprep.subr.mxu0 0.0
        %v4057 = vand.u32 %v3792, 4294901760
        %v4058 = vsub.f32 %v3792, %v4057
        %4059 = vmatpush1.msra.mxu0 %v4058
        %4060 = vmatprep.subr.mxu0 0.0
        %v4061 = vand.u32 %v3791, 4294901760
        %v4062 = vsub.f32 %v3791, %v4061
        %4063 = vmatpush1.msra.mxu0 %v4062
        %4064 = vmatprep.subr.mxu0 0.0
        %v4065 = vand.u32 %v3790, 4294901760
        %v4066 = vsub.f32 %v3790, %v4065
        %4067 = vmatpush1.msra.mxu0 %v4066
        %4068 = vmatprep.subr.mxu0 0.0
        %v4069 = vand.u32 %v3789, 4294901760
        %v4070 = vsub.f32 %v3789, %v4069
        %4071 = vmatpush1.msra.mxu0 %v4070
        %4072 = vmatprep.subr.mxu0 0.0
        %v4073 = vand.u32 %v3788, 4294901760
        %v4074 = vsub.f32 %v3788, %v4073
        %4075 = vmatpush1.msra.mxu0 %v4074
        %4076 = vmatprep.subr.mxu0 0.0
        %v4077 = vand.u32 %v3787, 4294901760
        %v4078 = vsub.f32 %v3787, %v4077
        %4079 = vmatpush1.msra.mxu0 %v4078
        %4080 = vmatprep.subr.mxu0 0.0
        %v4081 = vand.u32 %v3786, 4294901760
        %v4082 = vsub.f32 %v3786, %v4081
        %4083 = vmatpush1.msra.mxu0 %v4082
        %4084 = vmatprep.subr.mxu0 0.0
        %v4085 = vand.u32 %v3785, 4294901760
        %v4086 = vsub.f32 %v3785, %v4085
        %4087 = vmatpush1.msra.mxu0 %v4086
        %4088 = vmatprep.subr.mxu0 0.0
        %v4089 = vand.u32 %v3784, 4294901760
        %v4090 = vsub.f32 %v3784, %v4089
        %4091 = vmatpush1.msra.mxu0 %v4090
        %4092 = vmatprep.subr.mxu0 0.0
        %v4093 = vand.u32 %v3783, 4294901760
        %v4094 = vsub.f32 %v3783, %v4093
        %4095 = vmatpush1.msra.mxu0 %v4094
        %4096 = vmatprep.subr.mxu0 0.0
        %v4097 = vand.u32 %v3782, 4294901760
        %v4098 = vsub.f32 %v3782, %v4097
        %4099 = vmatpush1.msra.mxu0 %v4098
        %4100 = vmatprep.subr.mxu0 0.0
        %v4101 = vand.u32 %v3781, 4294901760
        %v4102 = vsub.f32 %v3781, %v4101
        %4103 = vmatpush1.msra.mxu0 %v4102
        %4104 = vmatprep.subr.mxu0 0.0
        %v4105 = vand.u32 %v3780, 4294901760
        %v4106 = vsub.f32 %v3780, %v4105
        %4107 = vmatpush1.msra.mxu0 %v4106
        %4108 = vmatprep.subr.mxu0 0.0
        %v4109 = vand.u32 %v3779, 4294901760
        %v4110 = vsub.f32 %v3779, %v4109
        %4111 = vmatpush1.msra.mxu0 %v4110
        %4112 = vmatprep.subr.mxu0 0.0
        %v4113 = vand.u32 %v3778, 4294901760
        %v4114 = vsub.f32 %v3778, %v4113
        %4115 = vmatpush1.msra.mxu0 %v4114
        %4116 = vmatprep.subr.mxu0 0.0
        %v4117 = vand.u32 %v3777, 4294901760
        %v4118 = vsub.f32 %v3777, %v4117
        %4119 = vmatpush1.msra.mxu0 %v4118
        %4120 = vmatprep.subr.mxu0 0.0
        %4121 = vmatpush2.msra.mxu0 0.0
        %4122 = vmatprep.subr.mxu0 0.0
        %4123 = vmatpush2.msra.mxu0 0.0
        %4124 = vmatprep.subr.mxu0 0.0
        %4125 = vmatpush2.msra.mxu0 0.0
        %4126 = vmatprep.subr.mxu0 0.0
        %4127 = vmatpush2.msra.mxu0 0.0
        %4128 = vmatprep.subr.mxu0 0.0
        %4129 = vmatpush2.msra.mxu0 0.0
        %4130 = vmatprep.subr.mxu0 0.0
        %4131 = vmatpush2.msra.mxu0 0.0
        %4132 = vmatprep.subr.mxu0 0.0
        %4133 = vmatpush2.msra.mxu0 0.0
        %4134 = vmatprep.subr.mxu0 0.0
        %4135 = vmatpush2.msra.mxu0 0.0
        %4136 = vmatprep.subr.mxu0 0.0
        %4137 = vmatpush2.msra.mxu0 0.0
        %4138 = vmatprep.subr.mxu0 0.0
        %4139 = vmatpush2.msra.mxu0 0.0
        %4140 = vmatprep.subr.mxu0 0.0
        %4141 = vmatpush2.msra.mxu0 0.0
        %4142 = vmatprep.subr.mxu0 0.0
        %4143 = vmatpush2.msra.mxu0 0.0
        %4144 = vmatprep.subr.mxu0 0.0
        %4145 = vmatpush2.msra.mxu0 0.0
        %4146 = vmatprep.subr.mxu0 0.0
        %4147 = vmatpush2.msra.mxu0 0.0
        %4148 = vmatprep.subr.mxu0 0.0
        %4149 = vmatpush2.msra.mxu0 0.0
        %4150 = vmatprep.subr.mxu0 0.0
        %4151 = vmatpush2.msra.mxu0 0.0
        %4152 = vmatprep.mubr.f32.mxu0 0.0
        %v4153 = vand.u32 %v3774, 4294901760
        %v4154 = vsub.f32 %v3774, %v4153
        %4155 = vmatmul.mubr.f32.gmra.mxu0 %v4154
        %v4156 = vpop.f32.mrf.mxu0
        %v4157 = vadd.f32 %v4047, %v4156
        %v4158 = vpop.f32.mrf.mxu0
        %4159 = vmatprep.mubr.f32.mxu0 0.0
        %v4160 = vand.u32 %v3775, 4294901760
        %v4161 = vsub.f32 %v3775, %v4160
        %4162 = vmatmul.mubr.f32.gmra.mxu0 %v4161
        %v4163 = vpop.f32.mrf.mxu0
        %v4164 = vadd.f32 %v4053, %v4163
        %v4165 = vpop.f32.mrf.mxu0
        %4166 = vdwg.mxu0
        %4167 = vmatprep.subr.mxu0 0.0
        %v4168 = vand.u32 %v3792, 4294901760
        %4169 = vmatpush1.msra.mxu0 %v4168
        %4170 = vmatprep.subr.mxu0 0.0
        %v4171 = vand.u32 %v3791, 4294901760
        %4172 = vmatpush1.msra.mxu0 %v4171
        %4173 = vmatprep.subr.mxu0 0.0
        %v4174 = vand.u32 %v3790, 4294901760
        %4175 = vmatpush1.msra.mxu0 %v4174
        %4176 = vmatprep.subr.mxu0 0.0
        %v4177 = vand.u32 %v3789, 4294901760
        %4178 = vmatpush1.msra.mxu0 %v4177
        %4179 = vmatprep.subr.mxu0 0.0
        %v4180 = vand.u32 %v3788, 4294901760
        %4181 = vmatpush1.msra.mxu0 %v4180
        %4182 = vmatprep.subr.mxu0 0.0
        %v4183 = vand.u32 %v3787, 4294901760
        %4184 = vmatpush1.msra.mxu0 %v4183
        %4185 = vmatprep.subr.mxu0 0.0
        %v4186 = vand.u32 %v3786, 4294901760
        %4187 = vmatpush1.msra.mxu0 %v4186
        %4188 = vmatprep.subr.mxu0 0.0
        %v4189 = vand.u32 %v3785, 4294901760
        %4190 = vmatpush1.msra.mxu0 %v4189
        %4191 = vmatprep.subr.mxu0 0.0
        %v4192 = vand.u32 %v3784, 4294901760
        %4193 = vmatpush1.msra.mxu0 %v4192
        %4194 = vmatprep.subr.mxu0 0.0
        %v4195 = vand.u32 %v3783, 4294901760
        %4196 = vmatpush1.msra.mxu0 %v4195
        %4197 = vmatprep.subr.mxu0 0.0
        %v4198 = vand.u32 %v3782, 4294901760
        %4199 = vmatpush1.msra.mxu0 %v4198
        %4200 = vmatprep.subr.mxu0 0.0
        %v4201 = vand.u32 %v3781, 4294901760
        %4202 = vmatpush1.msra.mxu0 %v4201
        %4203 = vmatprep.subr.mxu0 0.0
        %v4204 = vand.u32 %v3780, 4294901760
        %4205 = vmatpush1.msra.mxu0 %v4204
        %4206 = vmatprep.subr.mxu0 0.0
        %v4207 = vand.u32 %v3779, 4294901760
        %4208 = vmatpush1.msra.mxu0 %v4207
        %4209 = vmatprep.subr.mxu0 0.0
        %v4210 = vand.u32 %v3778, 4294901760
        %4211 = vmatpush1.msra.mxu0 %v4210
        %4212 = vmatprep.subr.mxu0 0.0
        %v4213 = vand.u32 %v3777, 4294901760
        %4214 = vmatpush1.msra.mxu0 %v4213
        %4215 = vmatprep.subr.mxu0 0.0
        %4216 = vmatpush2.msra.mxu0 0.0
        %4217 = vmatprep.subr.mxu0 0.0
        %4218 = vmatpush2.msra.mxu0 0.0
        %4219 = vmatprep.subr.mxu0 0.0
        %4220 = vmatpush2.msra.mxu0 0.0
        %4221 = vmatprep.subr.mxu0 0.0
        %4222 = vmatpush2.msra.mxu0 0.0
        %4223 = vmatprep.subr.mxu0 0.0
        %4224 = vmatpush2.msra.mxu0 0.0
        %4225 = vmatprep.subr.mxu0 0.0
        %4226 = vmatpush2.msra.mxu0 0.0
        %4227 = vmatprep.subr.mxu0 0.0
        %4228 = vmatpush2.msra.mxu0 0.0
        %4229 = vmatprep.subr.mxu0 0.0
        %4230 = vmatpush2.msra.mxu0 0.0
        %4231 = vmatprep.subr.mxu0 0.0
        %4232 = vmatpush2.msra.mxu0 0.0
        %4233 = vmatprep.subr.mxu0 0.0
        %4234 = vmatpush2.msra.mxu0 0.0
        %4235 = vmatprep.subr.mxu0 0.0
        %4236 = vmatpush2.msra.mxu0 0.0
        %4237 = vmatprep.subr.mxu0 0.0
        %4238 = vmatpush2.msra.mxu0 0.0
        %4239 = vmatprep.subr.mxu0 0.0
        %4240 = vmatpush2.msra.mxu0 0.0
        %4241 = vmatprep.subr.mxu0 0.0
        %4242 = vmatpush2.msra.mxu0 0.0
        %4243 = vmatprep.subr.mxu0 0.0
        %4244 = vmatpush2.msra.mxu0 0.0
        %4245 = vmatprep.subr.mxu0 0.0
        %4246 = vmatpush2.msra.mxu0 0.0
        %4247 = vmatprep.mubr.f32.mxu0 0.0
        %v4248 = vand.u32 %v3774, 4294901760
        %v4249 = vsub.f32 %v3774, %v4248
        %v4250 = vand.u32 %v4249, 4294901760
        %4251 = vmatmul.mubr.f32.gmra.mxu0 %v4250
        %v4252 = vpop.f32.mrf.mxu0
        %v4253 = vadd.f32 %v4157, %v4252
        %v4254 = vpop.f32.mrf.mxu0
        %4255 = vmatprep.mubr.f32.mxu0 0.0
        %v4256 = vand.u32 %v3775, 4294901760
        %v4257 = vsub.f32 %v3775, %v4256
        %v4258 = vand.u32 %v4257, 4294901760
        %4259 = vmatmul.mubr.f32.gmra.mxu0 %v4258
        %v4260 = vpop.f32.mrf.mxu0
        %v4261 = vadd.f32 %v4164, %v4260
        %v4262 = vpop.f32.mrf.mxu0
        %4263 = vdwg.mxu0
        %4264 = vmatprep.subr.mxu0 0.0
        %v4265 = vand.u32 %v3792, 4294901760
        %v4266 = vsub.f32 %v3792, %v4265
        %v4267 = vand.u32 %v4266, 4294901760
        %4268 = vmatpush1.msra.mxu0 %v4267
        %4269 = vmatprep.subr.mxu0 0.0
        %v4270 = vand.u32 %v3791, 4294901760
        %v4271 = vsub.f32 %v3791, %v4270
        %v4272 = vand.u32 %v4271, 4294901760
        %4273 = vmatpush1.msra.mxu0 %v4272
        %4274 = vmatprep.subr.mxu0 0.0
        %v4275 = vand.u32 %v3790, 4294901760
        %v4276 = vsub.f32 %v3790, %v4275
        %v4277 = vand.u32 %v4276, 4294901760
        %4278 = vmatpush1.msra.mxu0 %v4277
        %4279 = vmatprep.subr.mxu0 0.0
        %v4280 = vand.u32 %v3789, 4294901760
        %v4281 = vsub.f32 %v3789, %v4280
        %v4282 = vand.u32 %v4281, 4294901760
        %4283 = vmatpush1.msra.mxu0 %v4282
        %4284 = vmatprep.subr.mxu0 0.0
        %v4285 = vand.u32 %v3788, 4294901760
        %v4286 = vsub.f32 %v3788, %v4285
        %v4287 = vand.u32 %v4286, 4294901760
        %4288 = vmatpush1.msra.mxu0 %v4287
        %4289 = vmatprep.subr.mxu0 0.0
        %v4290 = vand.u32 %v3787, 4294901760
        %v4291 = vsub.f32 %v3787, %v4290
        %v4292 = vand.u32 %v4291, 4294901760
        %4293 = vmatpush1.msra.mxu0 %v4292
        %4294 = vmatprep.subr.mxu0 0.0
        %v4295 = vand.u32 %v3786, 4294901760
        %v4296 = vsub.f32 %v3786, %v4295
        %v4297 = vand.u32 %v4296, 4294901760
        %4298 = vmatpush1.msra.mxu0 %v4297
        %4299 = vmatprep.subr.mxu0 0.0
        %v4300 = vand.u32 %v3785, 4294901760
        %v4301 = vsub.f32 %v3785, %v4300
        %v4302 = vand.u32 %v4301, 4294901760
        %4303 = vmatpush1.msra.mxu0 %v4302
        %4304 = vmatprep.subr.mxu0 0.0
        %v4305 = vand.u32 %v3784, 4294901760
        %v4306 = vsub.f32 %v3784, %v4305
        %v4307 = vand.u32 %v4306, 4294901760
        %4308 = vmatpush1.msra.mxu0 %v4307
        %4309 = vmatprep.subr.mxu0 0.0
        %v4310 = vand.u32 %v3783, 4294901760
        %v4311 = vsub.f32 %v3783, %v4310
        %v4312 = vand.u32 %v4311, 4294901760
        %4313 = vmatpush1.msra.mxu0 %v4312
        %4314 = vmatprep.subr.mxu0 0.0
        %v4315 = vand.u32 %v3782, 4294901760
        %v4316 = vsub.f32 %v3782, %v4315
        %v4317 = vand.u32 %v4316, 4294901760
        %4318 = vmatpush1.msra.mxu0 %v4317
        %4319 = vmatprep.subr.mxu0 0.0
        %v4320 = vand.u32 %v3781, 4294901760
        %v4321 = vsub.f32 %v3781, %v4320
        %v4322 = vand.u32 %v4321, 4294901760
        %4323 = vmatpush1.msra.mxu0 %v4322
        %4324 = vmatprep.subr.mxu0 0.0
        %v4325 = vand.u32 %v3780, 4294901760
        %v4326 = vsub.f32 %v3780, %v4325
        %v4327 = vand.u32 %v4326, 4294901760
        %4328 = vmatpush1.msra.mxu0 %v4327
        %4329 = vmatprep.subr.mxu0 0.0
        %v4330 = vand.u32 %v3779, 4294901760
        %v4331 = vsub.f32 %v3779, %v4330
        %v4332 = vand.u32 %v4331, 4294901760
        %4333 = vmatpush1.msra.mxu0 %v4332
        %4334 = vmatprep.subr.mxu0 0.0
        %v4335 = vand.u32 %v3778, 4294901760
        %v4336 = vsub.f32 %v3778, %v4335
        %v4337 = vand.u32 %v4336, 4294901760
        %4338 = vmatpush1.msra.mxu0 %v4337
        %4339 = vmatprep.subr.mxu0 0.0
        %v4340 = vand.u32 %v3777, 4294901760
        %v4341 = vsub.f32 %v3777, %v4340
        %v4342 = vand.u32 %v4341, 4294901760
        %4343 = vmatpush1.msra.mxu0 %v4342
        %4344 = vmatprep.subr.mxu0 0.0
        %4345 = vmatpush2.msra.mxu0 0.0
        %4346 = vmatprep.subr.mxu0 0.0
        %4347 = vmatpush2.msra.mxu0 0.0
        %4348 = vmatprep.subr.mxu0 0.0
        %4349 = vmatpush2.msra.mxu0 0.0
        %4350 = vmatprep.subr.mxu0 0.0
        %4351 = vmatpush2.msra.mxu0 0.0
        %4352 = vmatprep.subr.mxu0 0.0
        %4353 = vmatpush2.msra.mxu0 0.0
        %4354 = vmatprep.subr.mxu0 0.0
        %4355 = vmatpush2.msra.mxu0 0.0
        %4356 = vmatprep.subr.mxu0 0.0
        %4357 = vmatpush2.msra.mxu0 0.0
        %4358 = vmatprep.subr.mxu0 0.0
        %4359 = vmatpush2.msra.mxu0 0.0
        %4360 = vmatprep.subr.mxu0 0.0
        %4361 = vmatpush2.msra.mxu0 0.0
        %4362 = vmatprep.subr.mxu0 0.0
        %4363 = vmatpush2.msra.mxu0 0.0
        %4364 = vmatprep.subr.mxu0 0.0
        %4365 = vmatpush2.msra.mxu0 0.0
        %4366 = vmatprep.subr.mxu0 0.0
        %4367 = vmatpush2.msra.mxu0 0.0
        %4368 = vmatprep.subr.mxu0 0.0
        %4369 = vmatpush2.msra.mxu0 0.0
        %4370 = vmatprep.subr.mxu0 0.0
        %4371 = vmatpush2.msra.mxu0 0.0
        %4372 = vmatprep.subr.mxu0 0.0
        %4373 = vmatpush2.msra.mxu0 0.0
        %4374 = vmatprep.subr.mxu0 0.0
        %4375 = vmatpush2.msra.mxu0 0.0
        %4376 = vmatprep.mubr.f32.mxu0 0.0
        %v4377 = vand.u32 %v3774, 4294901760
        %4378 = vmatmul.mubr.f32.gmra.mxu0 %v4377
        %v4379 = vpop.f32.mrf.mxu0
        %v4380 = vadd.f32 %v4253, %v4379
        %v4381 = vpop.f32.mrf.mxu0
        %4382 = vmatprep.mubr.f32.mxu0 0.0
        %v4383 = vand.u32 %v3775, 4294901760
        %4384 = vmatmul.mubr.f32.gmra.mxu0 %v4383
        %v4385 = vpop.f32.mrf.mxu0
        %v4386 = vadd.f32 %v4261, %v4385
        %v4387 = vpop.f32.mrf.mxu0
        %4388 = vdwg.mxu0
        %4389 = vmatprep.subr.mxu0 0.0
        %v4390 = vand.u32 %v3792, 4294901760
        %4391 = vmatpush1.msra.mxu0 %v4390
        %4392 = vmatprep.subr.mxu0 0.0
        %v4393 = vand.u32 %v3791, 4294901760
        %4394 = vmatpush1.msra.mxu0 %v4393
        %4395 = vmatprep.subr.mxu0 0.0
        %v4396 = vand.u32 %v3790, 4294901760
        %4397 = vmatpush1.msra.mxu0 %v4396
        %4398 = vmatprep.subr.mxu0 0.0
        %v4399 = vand.u32 %v3789, 4294901760
        %4400 = vmatpush1.msra.mxu0 %v4399
        %4401 = vmatprep.subr.mxu0 0.0
        %v4402 = vand.u32 %v3788, 4294901760
        %4403 = vmatpush1.msra.mxu0 %v4402
        %4404 = vmatprep.subr.mxu0 0.0
        %v4405 = vand.u32 %v3787, 4294901760
        %4406 = vmatpush1.msra.mxu0 %v4405
        %4407 = vmatprep.subr.mxu0 0.0
        %v4408 = vand.u32 %v3786, 4294901760
        %4409 = vmatpush1.msra.mxu0 %v4408
        %4410 = vmatprep.subr.mxu0 0.0
        %v4411 = vand.u32 %v3785, 4294901760
        %4412 = vmatpush1.msra.mxu0 %v4411
        %4413 = vmatprep.subr.mxu0 0.0
        %v4414 = vand.u32 %v3784, 4294901760
        %4415 = vmatpush1.msra.mxu0 %v4414
        %4416 = vmatprep.subr.mxu0 0.0
        %v4417 = vand.u32 %v3783, 4294901760
        %4418 = vmatpush1.msra.mxu0 %v4417
        %4419 = vmatprep.subr.mxu0 0.0
        %v4420 = vand.u32 %v3782, 4294901760
        %4421 = vmatpush1.msra.mxu0 %v4420
        %4422 = vmatprep.subr.mxu0 0.0
        %v4423 = vand.u32 %v3781, 4294901760
        %4424 = vmatpush1.msra.mxu0 %v4423
        %4425 = vmatprep.subr.mxu0 0.0
        %v4426 = vand.u32 %v3780, 4294901760
        %4427 = vmatpush1.msra.mxu0 %v4426
        %4428 = vmatprep.subr.mxu0 0.0
        %v4429 = vand.u32 %v3779, 4294901760
        %4430 = vmatpush1.msra.mxu0 %v4429
        %4431 = vmatprep.subr.mxu0 0.0
        %v4432 = vand.u32 %v3778, 4294901760
        %4433 = vmatpush1.msra.mxu0 %v4432
        %4434 = vmatprep.subr.mxu0 0.0
        %v4435 = vand.u32 %v3777, 4294901760
        %4436 = vmatpush1.msra.mxu0 %v4435
        %4437 = vmatprep.subr.mxu0 0.0
        %4438 = vmatpush2.msra.mxu0 0.0
        %4439 = vmatprep.subr.mxu0 0.0
        %4440 = vmatpush2.msra.mxu0 0.0
        %4441 = vmatprep.subr.mxu0 0.0
        %4442 = vmatpush2.msra.mxu0 0.0
        %4443 = vmatprep.subr.mxu0 0.0
        %4444 = vmatpush2.msra.mxu0 0.0
        %4445 = vmatprep.subr.mxu0 0.0
        %4446 = vmatpush2.msra.mxu0 0.0
        %4447 = vmatprep.subr.mxu0 0.0
        %4448 = vmatpush2.msra.mxu0 0.0
        %4449 = vmatprep.subr.mxu0 0.0
        %4450 = vmatpush2.msra.mxu0 0.0
        %4451 = vmatprep.subr.mxu0 0.0
        %4452 = vmatpush2.msra.mxu0 0.0
        %4453 = vmatprep.subr.mxu0 0.0
        %4454 = vmatpush2.msra.mxu0 0.0
        %4455 = vmatprep.subr.mxu0 0.0
        %4456 = vmatpush2.msra.mxu0 0.0
        %4457 = vmatprep.subr.mxu0 0.0
        %4458 = vmatpush2.msra.mxu0 0.0
        %4459 = vmatprep.subr.mxu0 0.0
        %4460 = vmatpush2.msra.mxu0 0.0
        %4461 = vmatprep.subr.mxu0 0.0
        %4462 = vmatpush2.msra.mxu0 0.0
        %4463 = vmatprep.subr.mxu0 0.0
        %4464 = vmatpush2.msra.mxu0 0.0
        %4465 = vmatprep.subr.mxu0 0.0
        %4466 = vmatpush2.msra.mxu0 0.0
        %4467 = vmatprep.subr.mxu0 0.0
        %4468 = vmatpush2.msra.mxu0 0.0
        %4469 = vmatprep.mubr.f32.mxu0 0.0
        %v4470 = vand.u32 %v3774, 4294901760
        %4471 = vmatmul.mubr.f32.gmra.mxu0 %v4470
        %v4472 = vpop.f32.mrf.mxu0
        %v4473 = vadd.f32 %v4380, %v4472
        %v4474 = vpop.f32.mrf.mxu0
        %4475 = vmatprep.mubr.f32.mxu0 0.0
        %v4476 = vand.u32 %v3775, 4294901760
        %4477 = vmatmul.mubr.f32.gmra.mxu0 %v4476
        %v4478 = vpop.f32.mrf.mxu0
        %v4479 = vadd.f32 %v4386, %v4478
        %v4480 = vpop.f32.mrf.mxu0
        %4481 = vdwg.mxu0
        %v4482 = vadd.f32 %v2358, %v2314
        %v4483 = vadd.f32 %v2359, %v2320
        %v4484 = vadd.f32 %v4482, %v4473
        %v4485 = vadd.f32 %v4483, %v4479
        %vm4486 = vcmask 146432
        %4487 = vst.msk [vmem:[%s187] sm:$0xff] %vm4486, %v4484
        %4488 = vst.msk [vmem:[%s187 + $0x8] sm:$0xff] %vm4486, %v4485
        %s4489 = smul.u32 2, %s15
        %p4490 = scmp.lt.s32.totalorder %s4489, 3
        %s4491 = scalar_select %p4490, %s4489, 3
        %s4492 = smul.addr %s4491, 8
        %s4493 = scalar_lea.vmem %s3, %s4492
        // Predicated region
        $region37: #{tpu_custom_call.1} parent=31 // pred_check
          %p4494 = pneg %p101
        $region38: #{tpu_custom_call.1} parent=31 // pred_check_branch
          %4496 = sbr.rel (%p4494) target = $region40
        $region39: #{tpu_custom_call.1} parent=31 // pred_region
          %s4497 = smul.u32 2, %s15
        $region40: #{tpu_custom_call.1} parent=31 // pred_fallthru
          _
      $region32: #{tpu_custom_call.1} parent=5 // pred_fallthru
        _
      %p4498 = scmp.le.s32.totalorder 2, %s10
      // Predicated region
      $region41: #{tpu_custom_call.1} parent=5 // pred_check
        %p4499 = pneg %p4498
      $region42: #{tpu_custom_call.1} parent=5 // pred_check_branch
        %4501 = sbr.rel (%p4499) target = $region44
      $region43: #{tpu_custom_call.1} parent=5 // pred_region
        %s4502 = ssub.s32 %s10, 2
        // Predicated region
        $region45: #{tpu_custom_call.1} parent=43 // pred_check
          %p4503 = pneg %p107
        $region46: #{tpu_custom_call.1} parent=43 // pred_check_branch
          %4505 = sbr.rel (%p4503) target = $region48
        $region47: #{tpu_custom_call.1} parent=43 // pred_region
          %s4506 = smul.u32 2, %s16
          %p4507 = scmp.lt.s32.totalorder %s4506, 3
          %s4508 = scalar_select %p4507, %s4506, 3
          %s4509 = smul.addr %s4508, 8
          %s4510 = scalar_lea.vmem %s3, %s4509
        $region48: #{tpu_custom_call.1} parent=43 // pred_fallthru
          _
      $region44: #{tpu_custom_call.1} parent=5 // pred_fallthru
        _
    $region6: #{tpu_custom_call.1} parent=1 // loop_footer
      %s14 = sadd.s32 1, %s10
    $region7: #{tpu_custom_call.1} parent=1 // loop_footer_branch
      %9 = sbr.rel target = $region3
    $region8: #{tpu_custom_call.1} parent=1 // loop_exit
      _
    %4511 = vsyncpa [#allocation3], 1
    %s4512 = scalar_lea.sflag [#allocation3], 1
    %4513 = vsyncpa %s4512, 1

</llo_original>
